<compile_context>
chip_gen: v5e
topology: v5e:2x2
jax: 0.10.0
libtpu: 0.0.40
codegen_flags: <defaults>
</compile_context>

<pallas_src>
import math

import jax
import jax.numpy as jnp
from jax.experimental import pallas as pl
from jax.experimental.pallas import tpu as pltpu

# ---- model hyperparameters (from ViT.__init__) -----------------------------
PATCH = 7
IN_CH = 3
EMBED = 16
HIDDEN = 64            # FFN ratio 4.0
NUM_LAYERS = 5
NUM_CLASSES = 10
EPS = 1e-5             # nn.LayerNorm default
INV_SQRT2 = 0.7071067811865476

K_RAW = IN_CH * PATCH * PATCH     # 147 im2col rows (no HBM padding)
LANES = 128
NEG_BIG = -1e30

# ---- packed column-vector buffer: (HIDDEN rows x NCOLS_PAD cols) f32 --------
COL_PB = 0                               # patch-embed bias        (E rows)
COL_GAMMA = 1                            # LayerNorm gamma, 5 cols (E rows)
COL_BETA = COL_GAMMA + NUM_LAYERS        # LayerNorm beta,  5 cols (E rows)
COL_B2 = COL_BETA + NUM_LAYERS           # fc2 bias,        5 cols (E rows)
COL_B1 = COL_B2 + NUM_LAYERS             # fc1 bias,        5 cols (H rows)
NCOLS_PAD = 24                           # 21 used, padded to 24

# ---- packed head buffer: rows 0..15 head weight (E,128), row 16 masked bias
ROW_HB = EMBED
HEAD_ROWS = EMBED + 8                    # 24 rows (multiple of 8)


def _layernorm_cols(x, gamma, beta):
    """LayerNorm over the feature (sublane) axis of an (E, rows) tile."""
    mu = jnp.mean(x, axis=0, keepdims=True)
    var = jnp.mean((x - mu) ** 2, axis=0, keepdims=True)
    return (x - mu) * jax.lax.rsqrt(var + EPS) * gamma + beta


def _layernorm_rows(x, gamma, beta):
    """Reference-side LayerNorm over the last axis."""
    mu = jnp.mean(x, axis=-1, keepdims=True)
    var = jnp.mean((x - mu) ** 2, axis=-1, keepdims=True)
    return (x - mu) * jax.lax.rsqrt(var + EPS) * gamma + beta


def _gelu_exact(x):
    # nn.GELU() default = exact erf-based gelu
    return 0.5 * x * (1.0 + jax.lax.erf(x * INV_SQRT2))


def vit_kernel(patches_ref, pw_ref, w1_ref, w2_ref, colv_ref, headv_ref,
               pool_ref, out_ref):
    # Transposed activation layout (features on sublanes, tokens on lanes):
    #   patches_ref: (K_RAW, rows)   rows = bb*N tokens of this grid step
    #   pw_ref:      (E, K_RAW)      patch-embed weight (flattened conv kernel)
    #   w1_ref:      (L, H, E)       fc1 weights, pre-transposed
    #   w2_ref:      (L, E, H)       fc2 weights, pre-transposed
    #   colv_ref:    (H, NCOLS_PAD)  small per-layer vectors, column oriented
    #   headv_ref:   (HEAD_ROWS,128) head weight rows + masked-bias row
    #   pool_ref:    (rows, bb)      token -> image mean-pool matrix
    #   out_ref:     (bb, 128)       lane-dense softmax output (cols 0..9 real)

    # ---- patch embedding: (E,K) @ (K,rows) + bias ----
    pb = colv_ref[:EMBED, COL_PB:COL_PB + 1]                       # (E,1)
    x = jnp.dot(pw_ref[...], patches_ref[...],
                preferred_element_type=jnp.float32) + pb           # (E, rows)

    # ---- 5 encoder blocks (attn == Identity; ONE shared LayerNorm / block,
    #      exactly as in the PyTorch Encoder which reuses self.norm twice) ----
    for l in range(NUM_LAYERS):
        gamma = colv_ref[:EMBED, COL_GAMMA + l:COL_GAMMA + l + 1]  # (E,1)
        beta = colv_ref[:EMBED, COL_BETA + l:COL_BETA + l + 1]     # (E,1)
        b1 = colv_ref[:HIDDEN, COL_B1 + l:COL_B1 + l + 1]          # (H,1)
        b2 = colv_ref[:EMBED, COL_B2 + l:COL_B2 + l + 1]           # (E,1)
        w1t = w1_ref[l]                                            # (H, E)
        w2t = w2_ref[l]                                            # (E, H)
        # sub-block 1: x = norm(x) + x
        x = _layernorm_cols(x, gamma, beta) + x
        # sub-block 2: x = FFN(norm(x)) + x
        h = x
        xn = _layernorm_cols(x, gamma, beta)
        f = _gelu_exact(jnp.dot(w1t, xn, preferred_element_type=jnp.float32) + b1)
        x = jnp.dot(w2t, f, preferred_element_type=jnp.float32) + b2 + h

    # ---- AdaptiveAvgPool1d(1): per-image mean over N tokens, as a matmul ----
    pooled = jnp.dot(x, pool_ref[...], preferred_element_type=jnp.float32)  # (E, bb)

    # ---- head: Linear(E, classes) + Softmax over a 128-lane block ----
    hw = headv_ref[:EMBED, :]                                      # (E, 128)
    hb = headv_ref[ROW_HB:ROW_HB + 1, :]                           # (1, 128), pad lanes -1e30
    logits = jax.lax.dot_general(
        pooled, hw, (((0,), (0,)), ((), ())),
        preferred_element_type=jnp.float32) + hb                   # (bb, 128)
    m = jnp.max(logits, axis=-1, keepdims=True)
    e = jnp.exp(logits - m)                                        # masked lanes -> 0
    out_ref[...] = e / jnp.sum(e, axis=-1, keepdims=True)


def init_params(key):
    ks = jax.random.split(key, 8)
    conv_w = jax.random.normal(ks[0], (EMBED, IN_CH, PATCH, PATCH), jnp.float32) * 0.02
    pw = conv_w.reshape(EMBED, K_RAW).T                            # (147, 16)
    pb = jax.random.normal(ks[1], (EMBED,), jnp.float32) * 0.02
    ng = jnp.ones((NUM_LAYERS, EMBED), jnp.float32)                # LayerNorm gamma
    nb = jnp.zeros((NUM_LAYERS, EMBED), jnp.float32)               # LayerNorm beta
    w1 = jax.random.normal(ks[2], (NUM_LAYERS, EMBED, HIDDEN), jnp.float32) * 0.02
    b1 = jax.random.normal(ks[3], (NUM_LAYERS, HIDDEN), jnp.float32) * 0.02
    w2 = jax.random.normal(ks[4], (NUM_LAYERS, HIDDEN, EMBED), jnp.float32) * 0.02
    b2 = jax.random.normal(ks[5], (NUM_LAYERS, EMBED), jnp.float32) * 0.02
    hw = jax.random.normal(ks[6], (EMBED, NUM_CLASSES), jnp.float32) * 0.02
    hb = jax.random.normal(ks[7], (NUM_CLASSES,), jnp.float32) * 0.02
    return (pw, pb, ng, nb, w1, b1, w2, b2, hw, hb)


def pack_params(params):
    """Pre-transpose the matmul weights and pack the 12 small tensors."""
    pw, pb, ng, nb, w1, b1, w2, b2, hw, hb = params
    pw_t = pw.T                                     # (E, K_RAW)
    w1_t = jnp.transpose(w1, (0, 2, 1))             # (L, H, E)
    w2_t = jnp.transpose(w2, (0, 2, 1))             # (L, E, H)

    colvecs = jnp.zeros((HIDDEN, NCOLS_PAD), jnp.float32)
    colvecs = colvecs.at[:EMBED, COL_PB].set(pb)
    colvecs = colvecs.at[:EMBED, COL_GAMMA:COL_GAMMA + NUM_LAYERS].set(ng.T)
    colvecs = colvecs.at[:EMBED, COL_BETA:COL_BETA + NUM_LAYERS].set(nb.T)
    colvecs = colvecs.at[:EMBED, COL_B2:COL_B2 + NUM_LAYERS].set(b2.T)
    colvecs = colvecs.at[:HIDDEN, COL_B1:COL_B1 + NUM_LAYERS].set(b1.T)

    headvecs = jnp.zeros((HEAD_ROWS, LANES), jnp.float32)
    headvecs = headvecs.at[:EMBED, :NUM_CLASSES].set(hw)
    headvecs = headvecs.at[ROW_HB, :].set(NEG_BIG)   # pad-class mask for softmax
    headvecs = headvecs.at[ROW_HB, :NUM_CLASSES].set(hb)
    return pw_t, w1_t, w2_t, colvecs, headvecs


def _choose_tiling(B, N, target_rows):
    """Pick images-per-step (bb) and grid size.

    Small batches run as ONE step (best on 1-TC v5e/v6e).  Large batches tile
    at ~target_rows tokens per step with bb chosen so rows = bb*N is a
    multiple of 128 (lane-aligned blocks), grid = cdiv(B, bb)."""
    total = B * N
    if total <= target_rows:
        return B, 1
    step = 128 // math.gcd(N, 128)            # smallest bb with (bb*N) % 128 == 0
    bb = max(step, (target_rows // N) // step * step)
    grid = -(-B // bb)
    # TODO(synk): on v7x round `grid` up to an even count so both TensorCores
    # get equal work; on 1-TC v5e/v6e an uneven grid is fine.
    return bb, grid


def vit_forward(img, params, *, target_rows=2048):
    """img: (B, C, H, W) float32 (NCHW, same as the PyTorch module)."""
    B, C, H, W = img.shape
    p = PATCH
    Hp, Wp = H // p, W // p
    N = Hp * Wp

    # im2col^T of Conv2d(C,E,p,p)+flatten(2)+permute(0,2,1): (K_RAW, B*N) so
    # tokens land on the lane axis inside the kernel; no K padding in HBM.
    # TODO(synk): fold this patch-extraction transpose into the kernel input
    # path (memory_space=pl.ANY + manual strided DMAs) to skip this HBM pass.
    patches = (img.reshape(B, C, Hp, p, Wp, p)
                  .transpose(1, 3, 5, 0, 2, 4)
                  .reshape(K_RAW, B * N)).astype(jnp.float32)

    pw_t, w1_t, w2_t, colvecs, headvecs = pack_params(params)

    bb, grid = _choose_tiling(B, N, target_rows)
    B_pad = bb * grid
    rows = bb * N
    if B_pad > B:                                   # zero-padded tail images
        patches = jnp.pad(patches, ((0, 0), (0, (B_pad - B) * N)))

    # token -> image mean-pool matrix; identical for every grid step so it
    # stays VMEM-resident via a constant index_map.
    row_img = jnp.arange(rows, dtype=jnp.int32) // N
    pool = (row_img[:, None] == jnp.arange(bb, dtype=jnp.int32)[None, :]
            ).astype(jnp.float32) * (1.0 / N)

    flops = (2 * B_pad * N * K_RAW * EMBED
             + NUM_LAYERS * 2 * (2 * B_pad * N * EMBED * HIDDEN)
             + 2 * B_pad * N * EMBED                 # pooling matmul
             + 2 * B_pad * EMBED * LANES)            # head matmul
    transcendentals = NUM_LAYERS * B_pad * N * HIDDEN + B_pad * LANES
    bytes_accessed = 4 * (patches.size + pw_t.size + w1_t.size + w2_t.size
                          + colvecs.size + headvecs.size + pool.size
                          + B_pad * LANES)

    out = pl.pallas_call(
        vit_kernel,
        out_shape=jax.ShapeDtypeStruct((B_pad, LANES), jnp.float32),
        grid=(grid,),
        in_specs=[
            pl.BlockSpec((K_RAW, rows), lambda i: (0, i)),              # patches: tiled over tokens
            pl.BlockSpec((EMBED, K_RAW), lambda i: (0, 0)),             # resident weights below
            pl.BlockSpec((NUM_LAYERS, HIDDEN, EMBED), lambda i: (0, 0, 0)),
            pl.BlockSpec((NUM_LAYERS, EMBED, HIDDEN), lambda i: (0, 0, 0)),
            pl.BlockSpec((HIDDEN, NCOLS_PAD), lambda i: (0, 0)),
            pl.BlockSpec((HEAD_ROWS, LANES), lambda i: (0, 0)),
            pl.BlockSpec((rows, bb), lambda i: (0, 0)),
        ],
        out_specs=pl.BlockSpec((bb, LANES), lambda i: (i, 0)),
        compiler_params=pltpu.CompilerParams(
            dimension_semantics=("parallel",),
            vmem_limit_bytes=32 * 1024 * 1024),
        cost_estimate=pl.CostEstimate(
            flops=flops,
            transcendentals=transcendentals,
            bytes_accessed=bytes_accessed),
    )(patches, pw_t, w1_t, w2_t, colvecs, headvecs, pool)

    return out[:B, :NUM_CLASSES]


def vit_reference(img, params):
    """Pure-JAX reference mirroring the PyTorch forward."""
    pw, pb, ng, nb, w1, b1, w2, b2, hw, hb = params
    B, C, H, W = img.shape
    p = PATCH
    Hp, Wp = H // p, W // p
    N = Hp * Wp
    patches = (img.reshape(B, C, Hp, p, Wp, p)
                  .transpose(0, 2, 4, 1, 3, 5)
                  .reshape(B, N, K_RAW))
    x = patches @ pw + pb                                  # (B, N, E)
    for l in range(NUM_LAYERS):
        g, bt = ng[l], nb[l]
        x = _layernorm_rows(x, g, bt) + x                  # shared norm, as in the module
        h = x
        xn = _layernorm_rows(x, g, bt)
        f = _gelu_exact(xn @ w1[l] + b1[l]) @ w2[l] + b2[l]
        x = f + h
    pooled = jnp.mean(x, axis=1)                           # (B, E)
    logits = pooled @ hw + hb
    return jax.nn.softmax(logits, axis=1)


if __name__ == "__main__":
    key = jax.random.PRNGKey(0)
    k_img, k_par = jax.random.split(key)
    # small input consistent with the module: batch=2, 3 channels, 28x28 image
    # -> (28/7)^2 = 16 patches, embed_dim = 16
    x = jax.random.normal(k_img, (2, IN_CH, 28, 28), jnp.float32)
    params = init_params(k_par)

    out = jax.block_until_ready(vit_forward(x, params))
    ref = vit_reference(x, params)

    assert out.shape == (2, NUM_CLASSES)
    assert jnp.allclose(out, ref, atol=1e-5, rtol=1e-5), "mismatch vs JAX reference"
    assert jnp.allclose(jnp.sum(out, axis=1), 1.0, atol=1e-5), "softmax rows must sum to 1"
    print("KERNEL_OK")
</pallas_src>

<mosaic_0001>
module attributes {stable_mosaic.version = 11 : i64} {
  func.func @vit_kernel(%arg0: i32, %arg1: memref<147x32xf32, #tpu.memory_space<vmem>>, %arg2: memref<16x147xf32, #tpu.memory_space<vmem>>, %arg3: memref<5x64x16xf32, #tpu.memory_space<vmem>>, %arg4: memref<5x16x64xf32, #tpu.memory_space<vmem>>, %arg5: memref<64x24xf32, #tpu.memory_space<vmem>>, %arg6: memref<24x128xf32, #tpu.memory_space<vmem>>, %arg7: memref<32x2xf32, #tpu.memory_space<vmem>>, %arg8: memref<2x128xf32, #tpu.memory_space<vmem>>) attributes {dimension_semantics = [#tpu.dimension_semantics<parallel>], iteration_bounds = array<i64: 1>, scalar_prefetch = 0 : i64, scratch_operands = 0 : i64, tpu.core_type = #tpu.core_type<tc>, window_params = [{transform_indices = @transform_0, window_bounds = array<i64: 147, 32>}, {pipeline_mode = #tpu.pipeline_mode<synchronous>, transform_indices = @transform_1, window_bounds = array<i64: 16, 147>}, {pipeline_mode = #tpu.pipeline_mode<synchronous>, transform_indices = @transform_2, window_bounds = array<i64: 5, 64, 16>}, {pipeline_mode = #tpu.pipeline_mode<synchronous>, transform_indices = @transform_3, window_bounds = array<i64: 5, 16, 64>}, {pipeline_mode = #tpu.pipeline_mode<synchronous>, transform_indices = @transform_4, window_bounds = array<i64: 64, 24>}, {pipeline_mode = #tpu.pipeline_mode<synchronous>, transform_indices = @transform_5, window_bounds = array<i64: 24, 128>}, {pipeline_mode = #tpu.pipeline_mode<synchronous>, transform_indices = @transform_6, window_bounds = array<i64: 32, 2>}, {transform_indices = @transform_7, window_bounds = array<i64: 2, 128>}]} {
    %c0 = arith.constant 0 : index
    %c0_0 = arith.constant 0 : index
    %0 = vector.load %arg5[%c0, %c0_0] : memref<64x24xf32, #tpu.memory_space<vmem>>, vector<16x1xf32>
    %c0_1 = arith.constant 0 : index
    %c0_2 = arith.constant 0 : index
    %1 = vector.load %arg2[%c0_1, %c0_2] : memref<16x147xf32, #tpu.memory_space<vmem>>, vector<16x147xf32>
    %c0_3 = arith.constant 0 : index
    %c0_4 = arith.constant 0 : index
    %2 = vector.load %arg1[%c0_3, %c0_4] : memref<147x32xf32, #tpu.memory_space<vmem>>, vector<147x32xf32>
    %cst = arith.constant dense<0.000000e+00> : vector<16x32xf32>
    %3 = tpu.matmul %1, %2, %cst {dimension_numbers = #tpu.dot_dimension_numbers<[1], [0], [0], [1], [0, 0, 1, 1], [], []>} : vector<16x147xf32>, vector<147x32xf32>, vector<16x32xf32> -> vector<16x32xf32>
    %4 = vector.broadcast %0 : vector<16x1xf32> to vector<16x32xf32>
    %5 = arith.addf %3, %4 : vector<16x32xf32>
    %c0_5 = arith.constant 0 : index
    %c1 = arith.constant 1 : index
    %6 = vector.load %arg5[%c0_5, %c1] : memref<64x24xf32, #tpu.memory_space<vmem>>, vector<16x1xf32>
    %c0_6 = arith.constant 0 : index
    %c6 = arith.constant 6 : index
    %7 = vector.load %arg5[%c0_6, %c6] : memref<64x24xf32, #tpu.memory_space<vmem>>, vector<16x1xf32>
    %c0_7 = arith.constant 0 : index
    %c16 = arith.constant 16 : index
    %8 = vector.load %arg5[%c0_7, %c16] : memref<64x24xf32, #tpu.memory_space<vmem>>, vector<64x1xf32>
    %c0_8 = arith.constant 0 : index
    %c11 = arith.constant 11 : index
    %9 = vector.load %arg5[%c0_8, %c11] : memref<64x24xf32, #tpu.memory_space<vmem>>, vector<16x1xf32>
    %c0_9 = arith.constant 0 : index
    %c0_10 = arith.constant 0 : index
    %c0_11 = arith.constant 0 : index
    %10 = vector.load %arg3[%c0_9, %c0_10, %c0_11] : memref<5x64x16xf32, #tpu.memory_space<vmem>>, vector<1x64x16xf32>
    %11 = vector.shape_cast %10 : vector<1x64x16xf32> to vector<64x16xf32>
    %c0_12 = arith.constant 0 : index
    %c0_13 = arith.constant 0 : index
    %c0_14 = arith.constant 0 : index
    %12 = vector.load %arg4[%c0_12, %c0_13, %c0_14] : memref<5x16x64xf32, #tpu.memory_space<vmem>>, vector<1x16x64xf32>
    %13 = vector.shape_cast %12 : vector<1x16x64xf32> to vector<16x64xf32>
    %cst_15 = arith.constant dense<0.000000e+00> : vector<32xf32>
    %14 = vector.multi_reduction <add>, %5, %cst_15 [0] : vector<16x32xf32> to vector<32xf32>
    %15 = vector.shape_cast %14 : vector<32xf32> to vector<1x32xf32>
    %cst_16 = arith.constant 1.600000e+01 : f32
    %16 = vector.broadcast %cst_16 : f32 to vector<1x32xf32>
    %17 = arith.divf %15, %16 : vector<1x32xf32>
    %18 = vector.broadcast %17 : vector<1x32xf32> to vector<16x32xf32>
    %19 = arith.subf %5, %18 : vector<16x32xf32>
    %20 = arith.mulf %19, %19 : vector<16x32xf32>
    %cst_17 = arith.constant dense<0.000000e+00> : vector<32xf32>
    %21 = vector.multi_reduction <add>, %20, %cst_17 [0] : vector<16x32xf32> to vector<32xf32>
    %22 = vector.shape_cast %21 : vector<32xf32> to vector<1x32xf32>
    %cst_18 = arith.constant 1.600000e+01 : f32
    %23 = vector.broadcast %cst_18 : f32 to vector<1x32xf32>
    %24 = arith.divf %22, %23 : vector<1x32xf32>
    %25 = vector.broadcast %17 : vector<1x32xf32> to vector<16x32xf32>
    %26 = arith.subf %5, %25 : vector<16x32xf32>
    %cst_19 = arith.constant 9.99999974E-6 : f32
    %27 = vector.broadcast %cst_19 : f32 to vector<1x32xf32>
    %28 = arith.addf %24, %27 : vector<1x32xf32>
    %29 = math.rsqrt %28 : vector<1x32xf32>
    %30 = vector.broadcast %29 : vector<1x32xf32> to vector<16x32xf32>
    %31 = arith.mulf %26, %30 : vector<16x32xf32>
    %32 = vector.broadcast %6 : vector<16x1xf32> to vector<16x32xf32>
    %33 = arith.mulf %31, %32 : vector<16x32xf32>
    %34 = vector.broadcast %7 : vector<16x1xf32> to vector<16x32xf32>
    %35 = arith.addf %33, %34 : vector<16x32xf32>
    %36 = arith.addf %35, %5 : vector<16x32xf32>
    %cst_20 = arith.constant dense<0.000000e+00> : vector<32xf32>
    %37 = vector.multi_reduction <add>, %36, %cst_20 [0] : vector<16x32xf32> to vector<32xf32>
    %38 = vector.shape_cast %37 : vector<32xf32> to vector<1x32xf32>
    %cst_21 = arith.constant 1.600000e+01 : f32
    %39 = vector.broadcast %cst_21 : f32 to vector<1x32xf32>
    %40 = arith.divf %38, %39 : vector<1x32xf32>
    %41 = vector.broadcast %40 : vector<1x32xf32> to vector<16x32xf32>
    %42 = arith.subf %36, %41 : vector<16x32xf32>
    %43 = arith.mulf %42, %42 : vector<16x32xf32>
    %cst_22 = arith.constant dense<0.000000e+00> : vector<32xf32>
    %44 = vector.multi_reduction <add>, %43, %cst_22 [0] : vector<16x32xf32> to vector<32xf32>
    %45 = vector.shape_cast %44 : vector<32xf32> to vector<1x32xf32>
    %cst_23 = arith.constant 1.600000e+01 : f32
    %46 = vector.broadcast %cst_23 : f32 to vector<1x32xf32>
    %47 = arith.divf %45, %46 : vector<1x32xf32>
    %48 = vector.broadcast %40 : vector<1x32xf32> to vector<16x32xf32>
    %49 = arith.subf %36, %48 : vector<16x32xf32>
    %cst_24 = arith.constant 9.99999974E-6 : f32
    %50 = vector.broadcast %cst_24 : f32 to vector<1x32xf32>
    %51 = arith.addf %47, %50 : vector<1x32xf32>
    %52 = math.rsqrt %51 : vector<1x32xf32>
    %53 = vector.broadcast %52 : vector<1x32xf32> to vector<16x32xf32>
    %54 = arith.mulf %49, %53 : vector<16x32xf32>
    %55 = vector.broadcast %6 : vector<16x1xf32> to vector<16x32xf32>
    %56 = arith.mulf %54, %55 : vector<16x32xf32>
    %57 = vector.broadcast %7 : vector<16x1xf32> to vector<16x32xf32>
    %58 = arith.addf %56, %57 : vector<16x32xf32>
    %cst_25 = arith.constant dense<0.000000e+00> : vector<64x32xf32>
    %59 = tpu.matmul %11, %58, %cst_25 {dimension_numbers = #tpu.dot_dimension_numbers<[1], [0], [0], [1], [0, 0, 1, 1], [], []>} : vector<64x16xf32>, vector<16x32xf32>, vector<64x32xf32> -> vector<64x32xf32>
    %60 = vector.broadcast %8 : vector<64x1xf32> to vector<64x32xf32>
    %61 = arith.addf %59, %60 : vector<64x32xf32>
    %cst_26 = arith.constant 5.000000e-01 : f32
    %62 = vector.broadcast %cst_26 : f32 to vector<64x32xf32>
    %63 = arith.mulf %62, %61 : vector<64x32xf32>
    %cst_27 = arith.constant 0.707106769 : f32
    %64 = vector.broadcast %cst_27 : f32 to vector<64x32xf32>
    %65 = arith.mulf %61, %64 : vector<64x32xf32>
    %66 = math.erf %65 : vector<64x32xf32>
    %cst_28 = arith.constant 1.000000e+00 : f32
    %67 = vector.broadcast %cst_28 : f32 to vector<64x32xf32>
    %68 = arith.addf %67, %66 : vector<64x32xf32>
    %69 = arith.mulf %63, %68 : vector<64x32xf32>
    %cst_29 = arith.constant dense<0.000000e+00> : vector<16x32xf32>
    %70 = tpu.matmul %13, %69, %cst_29 {dimension_numbers = #tpu.dot_dimension_numbers<[1], [0], [0], [1], [0, 0, 1, 1], [], []>} : vector<16x64xf32>, vector<64x32xf32>, vector<16x32xf32> -> vector<16x32xf32>
    %71 = vector.broadcast %9 : vector<16x1xf32> to vector<16x32xf32>
    %72 = arith.addf %70, %71 : vector<16x32xf32>
    %73 = arith.addf %72, %36 : vector<16x32xf32>
    %c0_30 = arith.constant 0 : index
    %c2 = arith.constant 2 : index
    %74 = vector.load %arg5[%c0_30, %c2] : memref<64x24xf32, #tpu.memory_space<vmem>>, vector<16x1xf32>
    %c0_31 = arith.constant 0 : index
    %c7 = arith.constant 7 : index
    %75 = vector.load %arg5[%c0_31, %c7] : memref<64x24xf32, #tpu.memory_space<vmem>>, vector<16x1xf32>
    %c0_32 = arith.constant 0 : index
    %c17 = arith.constant 17 : index
    %76 = vector.load %arg5[%c0_32, %c17] : memref<64x24xf32, #tpu.memory_space<vmem>>, vector<64x1xf32>
    %c0_33 = arith.constant 0 : index
    %c12 = arith.constant 12 : index
    %77 = vector.load %arg5[%c0_33, %c12] : memref<64x24xf32, #tpu.memory_space<vmem>>, vector<16x1xf32>
    %c1_34 = arith.constant 1 : index
    %c0_35 = arith.constant 0 : index
    %c0_36 = arith.constant 0 : index
    %78 = vector.load %arg3[%c1_34, %c0_35, %c0_36] : memref<5x64x16xf32, #tpu.memory_space<vmem>>, vector<1x64x16xf32>
    %79 = vector.shape_cast %78 : vector<1x64x16xf32> to vector<64x16xf32>
    %c1_37 = arith.constant 1 : index
    %c0_38 = arith.constant 0 : index
    %c0_39 = arith.constant 0 : index
    %80 = vector.load %arg4[%c1_37, %c0_38, %c0_39] : memref<5x16x64xf32, #tpu.memory_space<vmem>>, vector<1x16x64xf32>
    %81 = vector.shape_cast %80 : vector<1x16x64xf32> to vector<16x64xf32>
    %cst_40 = arith.constant dense<0.000000e+00> : vector<32xf32>
    %82 = vector.multi_reduction <add>, %73, %cst_40 [0] : vector<16x32xf32> to vector<32xf32>
    %83 = vector.shape_cast %82 : vector<32xf32> to vector<1x32xf32>
    %cst_41 = arith.constant 1.600000e+01 : f32
    %84 = vector.broadcast %cst_41 : f32 to vector<1x32xf32>
    %85 = arith.divf %83, %84 : vector<1x32xf32>
    %86 = vector.broadcast %85 : vector<1x32xf32> to vector<16x32xf32>
    %87 = arith.subf %73, %86 : vector<16x32xf32>
    %88 = arith.mulf %87, %87 : vector<16x32xf32>
    %cst_42 = arith.constant dense<0.000000e+00> : vector<32xf32>
    %89 = vector.multi_reduction <add>, %88, %cst_42 [0] : vector<16x32xf32> to vector<32xf32>
    %90 = vector.shape_cast %89 : vector<32xf32> to vector<1x32xf32>
    %cst_43 = arith.constant 1.600000e+01 : f32
    %91 = vector.broadcast %cst_43 : f32 to vector<1x32xf32>
    %92 = arith.divf %90, %91 : vector<1x32xf32>
    %93 = vector.broadcast %85 : vector<1x32xf32> to vector<16x32xf32>
    %94 = arith.subf %73, %93 : vector<16x32xf32>
    %cst_44 = arith.constant 9.99999974E-6 : f32
    %95 = vector.broadcast %cst_44 : f32 to vector<1x32xf32>
    %96 = arith.addf %92, %95 : vector<1x32xf32>
    %97 = math.rsqrt %96 : vector<1x32xf32>
    %98 = vector.broadcast %97 : vector<1x32xf32> to vector<16x32xf32>
    %99 = arith.mulf %94, %98 : vector<16x32xf32>
    %100 = vector.broadcast %74 : vector<16x1xf32> to vector<16x32xf32>
    %101 = arith.mulf %99, %100 : vector<16x32xf32>
    %102 = vector.broadcast %75 : vector<16x1xf32> to vector<16x32xf32>
    %103 = arith.addf %101, %102 : vector<16x32xf32>
    %104 = arith.addf %103, %73 : vector<16x32xf32>
    %cst_45 = arith.constant dense<0.000000e+00> : vector<32xf32>
    %105 = vector.multi_reduction <add>, %104, %cst_45 [0] : vector<16x32xf32> to vector<32xf32>
    %106 = vector.shape_cast %105 : vector<32xf32> to vector<1x32xf32>
    %cst_46 = arith.constant 1.600000e+01 : f32
    %107 = vector.broadcast %cst_46 : f32 to vector<1x32xf32>
    %108 = arith.divf %106, %107 : vector<1x32xf32>
    %109 = vector.broadcast %108 : vector<1x32xf32> to vector<16x32xf32>
    %110 = arith.subf %104, %109 : vector<16x32xf32>
    %111 = arith.mulf %110, %110 : vector<16x32xf32>
    %cst_47 = arith.constant dense<0.000000e+00> : vector<32xf32>
    %112 = vector.multi_reduction <add>, %111, %cst_47 [0] : vector<16x32xf32> to vector<32xf32>
    %113 = vector.shape_cast %112 : vector<32xf32> to vector<1x32xf32>
    %cst_48 = arith.constant 1.600000e+01 : f32
    %114 = vector.broadcast %cst_48 : f32 to vector<1x32xf32>
    %115 = arith.divf %113, %114 : vector<1x32xf32>
    %116 = vector.broadcast %108 : vector<1x32xf32> to vector<16x32xf32>
    %117 = arith.subf %104, %116 : vector<16x32xf32>
    %cst_49 = arith.constant 9.99999974E-6 : f32
    %118 = vector.broadcast %cst_49 : f32 to vector<1x32xf32>
    %119 = arith.addf %115, %118 : vector<1x32xf32>
    %120 = math.rsqrt %119 : vector<1x32xf32>
    %121 = vector.broadcast %120 : vector<1x32xf32> to vector<16x32xf32>
    %122 = arith.mulf %117, %121 : vector<16x32xf32>
    %123 = vector.broadcast %74 : vector<16x1xf32> to vector<16x32xf32>
    %124 = arith.mulf %122, %123 : vector<16x32xf32>
    %125 = vector.broadcast %75 : vector<16x1xf32> to vector<16x32xf32>
    %126 = arith.addf %124, %125 : vector<16x32xf32>
    %cst_50 = arith.constant dense<0.000000e+00> : vector<64x32xf32>
    %127 = tpu.matmul %79, %126, %cst_50 {dimension_numbers = #tpu.dot_dimension_numbers<[1], [0], [0], [1], [0, 0, 1, 1], [], []>} : vector<64x16xf32>, vector<16x32xf32>, vector<64x32xf32> -> vector<64x32xf32>
    %128 = vector.broadcast %76 : vector<64x1xf32> to vector<64x32xf32>
    %129 = arith.addf %127, %128 : vector<64x32xf32>
    %cst_51 = arith.constant 5.000000e-01 : f32
    %130 = vector.broadcast %cst_51 : f32 to vector<64x32xf32>
    %131 = arith.mulf %130, %129 : vector<64x32xf32>
    %cst_52 = arith.constant 0.707106769 : f32
    %132 = vector.broadcast %cst_52 : f32 to vector<64x32xf32>
    %133 = arith.mulf %129, %132 : vector<64x32xf32>
    %134 = math.erf %133 : vector<64x32xf32>
    %cst_53 = arith.constant 1.000000e+00 : f32
    %135 = vector.broadcast %cst_53 : f32 to vector<64x32xf32>
    %136 = arith.addf %135, %134 : vector<64x32xf32>
    %137 = arith.mulf %131, %136 : vector<64x32xf32>
    %cst_54 = arith.constant dense<0.000000e+00> : vector<16x32xf32>
    %138 = tpu.matmul %81, %137, %cst_54 {dimension_numbers = #tpu.dot_dimension_numbers<[1], [0], [0], [1], [0, 0, 1, 1], [], []>} : vector<16x64xf32>, vector<64x32xf32>, vector<16x32xf32> -> vector<16x32xf32>
    %139 = vector.broadcast %77 : vector<16x1xf32> to vector<16x32xf32>
    %140 = arith.addf %138, %139 : vector<16x32xf32>
    %141 = arith.addf %140, %104 : vector<16x32xf32>
    %c0_55 = arith.constant 0 : index
    %c3 = arith.constant 3 : index
    %142 = vector.load %arg5[%c0_55, %c3] : memref<64x24xf32, #tpu.memory_space<vmem>>, vector<16x1xf32>
    %c0_56 = arith.constant 0 : index
    %c8 = arith.constant 8 : index
    %143 = vector.load %arg5[%c0_56, %c8] : memref<64x24xf32, #tpu.memory_space<vmem>>, vector<16x1xf32>
    %c0_57 = arith.constant 0 : index
    %c18 = arith.constant 18 : index
    %144 = vector.load %arg5[%c0_57, %c18] : memref<64x24xf32, #tpu.memory_space<vmem>>, vector<64x1xf32>
    %c0_58 = arith.constant 0 : index
    %c13 = arith.constant 13 : index
    %145 = vector.load %arg5[%c0_58, %c13] : memref<64x24xf32, #tpu.memory_space<vmem>>, vector<16x1xf32>
    %c2_59 = arith.constant 2 : index
    %c0_60 = arith.constant 0 : index
    %c0_61 = arith.constant 0 : index
    %146 = vector.load %arg3[%c2_59, %c0_60, %c0_61] : memref<5x64x16xf32, #tpu.memory_space<vmem>>, vector<1x64x16xf32>
    %147 = vector.shape_cast %146 : vector<1x64x16xf32> to vector<64x16xf32>
    %c2_62 = arith.constant 2 : index
    %c0_63 = arith.constant 0 : index
    %c0_64 = arith.constant 0 : index
    %148 = vector.load %arg4[%c2_62, %c0_63, %c0_64] : memref<5x16x64xf32, #tpu.memory_space<vmem>>, vector<1x16x64xf32>
    %149 = vector.shape_cast %148 : vector<1x16x64xf32> to vector<16x64xf32>
    %cst_65 = arith.constant dense<0.000000e+00> : vector<32xf32>
    %150 = vector.multi_reduction <add>, %141, %cst_65 [0] : vector<16x32xf32> to vector<32xf32>
    %151 = vector.shape_cast %150 : vector<32xf32> to vector<1x32xf32>
    %cst_66 = arith.constant 1.600000e+01 : f32
    %152 = vector.broadcast %cst_66 : f32 to vector<1x32xf32>
    %153 = arith.divf %151, %152 : vector<1x32xf32>
    %154 = vector.broadcast %153 : vector<1x32xf32> to vector<16x32xf32>
    %155 = arith.subf %141, %154 : vector<16x32xf32>
    %156 = arith.mulf %155, %155 : vector<16x32xf32>
    %cst_67 = arith.constant dense<0.000000e+00> : vector<32xf32>
    %157 = vector.multi_reduction <add>, %156, %cst_67 [0] : vector<16x32xf32> to vector<32xf32>
    %158 = vector.shape_cast %157 : vector<32xf32> to vector<1x32xf32>
    %cst_68 = arith.constant 1.600000e+01 : f32
    %159 = vector.broadcast %cst_68 : f32 to vector<1x32xf32>
    %160 = arith.divf %158, %159 : vector<1x32xf32>
    %161 = vector.broadcast %153 : vector<1x32xf32> to vector<16x32xf32>
    %162 = arith.subf %141, %161 : vector<16x32xf32>
    %cst_69 = arith.constant 9.99999974E-6 : f32
    %163 = vector.broadcast %cst_69 : f32 to vector<1x32xf32>
    %164 = arith.addf %160, %163 : vector<1x32xf32>
    %165 = math.rsqrt %164 : vector<1x32xf32>
    %166 = vector.broadcast %165 : vector<1x32xf32> to vector<16x32xf32>
    %167 = arith.mulf %162, %166 : vector<16x32xf32>
    %168 = vector.broadcast %142 : vector<16x1xf32> to vector<16x32xf32>
    %169 = arith.mulf %167, %168 : vector<16x32xf32>
    %170 = vector.broadcast %143 : vector<16x1xf32> to vector<16x32xf32>
    %171 = arith.addf %169, %170 : vector<16x32xf32>
    %172 = arith.addf %171, %141 : vector<16x32xf32>
    %cst_70 = arith.constant dense<0.000000e+00> : vector<32xf32>
    %173 = vector.multi_reduction <add>, %172, %cst_70 [0] : vector<16x32xf32> to vector<32xf32>
    %174 = vector.shape_cast %173 : vector<32xf32> to vector<1x32xf32>
    %cst_71 = arith.constant 1.600000e+01 : f32
    %175 = vector.broadcast %cst_71 : f32 to vector<1x32xf32>
    %176 = arith.divf %174, %175 : vector<1x32xf32>
    %177 = vector.broadcast %176 : vector<1x32xf32> to vector<16x32xf32>
    %178 = arith.subf %172, %177 : vector<16x32xf32>
    %179 = arith.mulf %178, %178 : vector<16x32xf32>
    %cst_72 = arith.constant dense<0.000000e+00> : vector<32xf32>
    %180 = vector.multi_reduction <add>, %179, %cst_72 [0] : vector<16x32xf32> to vector<32xf32>
    %181 = vector.shape_cast %180 : vector<32xf32> to vector<1x32xf32>
    %cst_73 = arith.constant 1.600000e+01 : f32
    %182 = vector.broadcast %cst_73 : f32 to vector<1x32xf32>
    %183 = arith.divf %181, %182 : vector<1x32xf32>
    %184 = vector.broadcast %176 : vector<1x32xf32> to vector<16x32xf32>
    %185 = arith.subf %172, %184 : vector<16x32xf32>
    %cst_74 = arith.constant 9.99999974E-6 : f32
    %186 = vector.broadcast %cst_74 : f32 to vector<1x32xf32>
    %187 = arith.addf %183, %186 : vector<1x32xf32>
    %188 = math.rsqrt %187 : vector<1x32xf32>
    %189 = vector.broadcast %188 : vector<1x32xf32> to vector<16x32xf32>
    %190 = arith.mulf %185, %189 : vector<16x32xf32>
    %191 = vector.broadcast %142 : vector<16x1xf32> to vector<16x32xf32>
    %192 = arith.mulf %190, %191 : vector<16x32xf32>
    %193 = vector.broadcast %143 : vector<16x1xf32> to vector<16x32xf32>
    %194 = arith.addf %192, %193 : vector<16x32xf32>
    %cst_75 = arith.constant dense<0.000000e+00> : vector<64x32xf32>
    %195 = tpu.matmul %147, %194, %cst_75 {dimension_numbers = #tpu.dot_dimension_numbers<[1], [0], [0], [1], [0, 0, 1, 1], [], []>} : vector<64x16xf32>, vector<16x32xf32>, vector<64x32xf32> -> vector<64x32xf32>
    %196 = vector.broadcast %144 : vector<64x1xf32> to vector<64x32xf32>
    %197 = arith.addf %195, %196 : vector<64x32xf32>
    %cst_76 = arith.constant 5.000000e-01 : f32
    %198 = vector.broadcast %cst_76 : f32 to vector<64x32xf32>
    %199 = arith.mulf %198, %197 : vector<64x32xf32>
    %cst_77 = arith.constant 0.707106769 : f32
    %200 = vector.broadcast %cst_77 : f32 to vector<64x32xf32>
    %201 = arith.mulf %197, %200 : vector<64x32xf32>
    %202 = math.erf %201 : vector<64x32xf32>
    %cst_78 = arith.constant 1.000000e+00 : f32
    %203 = vector.broadcast %cst_78 : f32 to vector<64x32xf32>
    %204 = arith.addf %203, %202 : vector<64x32xf32>
    %205 = arith.mulf %199, %204 : vector<64x32xf32>
    %cst_79 = arith.constant dense<0.000000e+00> : vector<16x32xf32>
    %206 = tpu.matmul %149, %205, %cst_79 {dimension_numbers = #tpu.dot_dimension_numbers<[1], [0], [0], [1], [0, 0, 1, 1], [], []>} : vector<16x64xf32>, vector<64x32xf32>, vector<16x32xf32> -> vector<16x32xf32>
    %207 = vector.broadcast %145 : vector<16x1xf32> to vector<16x32xf32>
    %208 = arith.addf %206, %207 : vector<16x32xf32>
    %209 = arith.addf %208, %172 : vector<16x32xf32>
    %c0_80 = arith.constant 0 : index
    %c4 = arith.constant 4 : index
    %210 = vector.load %arg5[%c0_80, %c4] : memref<64x24xf32, #tpu.memory_space<vmem>>, vector<16x1xf32>
    %c0_81 = arith.constant 0 : index
    %c9 = arith.constant 9 : index
    %211 = vector.load %arg5[%c0_81, %c9] : memref<64x24xf32, #tpu.memory_space<vmem>>, vector<16x1xf32>
    %c0_82 = arith.constant 0 : index
    %c19 = arith.constant 19 : index
    %212 = vector.load %arg5[%c0_82, %c19] : memref<64x24xf32, #tpu.memory_space<vmem>>, vector<64x1xf32>
    %c0_83 = arith.constant 0 : index
    %c14 = arith.constant 14 : index
    %213 = vector.load %arg5[%c0_83, %c14] : memref<64x24xf32, #tpu.memory_space<vmem>>, vector<16x1xf32>
    %c3_84 = arith.constant 3 : index
    %c0_85 = arith.constant 0 : index
    %c0_86 = arith.constant 0 : index
    %214 = vector.load %arg3[%c3_84, %c0_85, %c0_86] : memref<5x64x16xf32, #tpu.memory_space<vmem>>, vector<1x64x16xf32>
    %215 = vector.shape_cast %214 : vector<1x64x16xf32> to vector<64x16xf32>
    %c3_87 = arith.constant 3 : index
    %c0_88 = arith.constant 0 : index
    %c0_89 = arith.constant 0 : index
    %216 = vector.load %arg4[%c3_87, %c0_88, %c0_89] : memref<5x16x64xf32, #tpu.memory_space<vmem>>, vector<1x16x64xf32>
    %217 = vector.shape_cast %216 : vector<1x16x64xf32> to vector<16x64xf32>
    %cst_90 = arith.constant dense<0.000000e+00> : vector<32xf32>
    %218 = vector.multi_reduction <add>, %209, %cst_90 [0] : vector<16x32xf32> to vector<32xf32>
    %219 = vector.shape_cast %218 : vector<32xf32> to vector<1x32xf32>
    %cst_91 = arith.constant 1.600000e+01 : f32
    %220 = vector.broadcast %cst_91 : f32 to vector<1x32xf32>
    %221 = arith.divf %219, %220 : vector<1x32xf32>
    %222 = vector.broadcast %221 : vector<1x32xf32> to vector<16x32xf32>
    %223 = arith.subf %209, %222 : vector<16x32xf32>
    %224 = arith.mulf %223, %223 : vector<16x32xf32>
    %cst_92 = arith.constant dense<0.000000e+00> : vector<32xf32>
    %225 = vector.multi_reduction <add>, %224, %cst_92 [0] : vector<16x32xf32> to vector<32xf32>
    %226 = vector.shape_cast %225 : vector<32xf32> to vector<1x32xf32>
    %cst_93 = arith.constant 1.600000e+01 : f32
    %227 = vector.broadcast %cst_93 : f32 to vector<1x32xf32>
    %228 = arith.divf %226, %227 : vector<1x32xf32>
    %229 = vector.broadcast %221 : vector<1x32xf32> to vector<16x32xf32>
    %230 = arith.subf %209, %229 : vector<16x32xf32>
    %cst_94 = arith.constant 9.99999974E-6 : f32
    %231 = vector.broadcast %cst_94 : f32 to vector<1x32xf32>
    %232 = arith.addf %228, %231 : vector<1x32xf32>
    %233 = math.rsqrt %232 : vector<1x32xf32>
    %234 = vector.broadcast %233 : vector<1x32xf32> to vector<16x32xf32>
    %235 = arith.mulf %230, %234 : vector<16x32xf32>
    %236 = vector.broadcast %210 : vector<16x1xf32> to vector<16x32xf32>
    %237 = arith.mulf %235, %236 : vector<16x32xf32>
    %238 = vector.broadcast %211 : vector<16x1xf32> to vector<16x32xf32>
    %239 = arith.addf %237, %238 : vector<16x32xf32>
    %240 = arith.addf %239, %209 : vector<16x32xf32>
    %cst_95 = arith.constant dense<0.000000e+00> : vector<32xf32>
    %241 = vector.multi_reduction <add>, %240, %cst_95 [0] : vector<16x32xf32> to vector<32xf32>
    %242 = vector.shape_cast %241 : vector<32xf32> to vector<1x32xf32>
    %cst_96 = arith.constant 1.600000e+01 : f32
    %243 = vector.broadcast %cst_96 : f32 to vector<1x32xf32>
    %244 = arith.divf %242, %243 : vector<1x32xf32>
    %245 = vector.broadcast %244 : vector<1x32xf32> to vector<16x32xf32>
    %246 = arith.subf %240, %245 : vector<16x32xf32>
    %247 = arith.mulf %246, %246 : vector<16x32xf32>
    %cst_97 = arith.constant dense<0.000000e+00> : vector<32xf32>
    %248 = vector.multi_reduction <add>, %247, %cst_97 [0] : vector<16x32xf32> to vector<32xf32>
    %249 = vector.shape_cast %248 : vector<32xf32> to vector<1x32xf32>
    %cst_98 = arith.constant 1.600000e+01 : f32
    %250 = vector.broadcast %cst_98 : f32 to vector<1x32xf32>
    %251 = arith.divf %249, %250 : vector<1x32xf32>
    %252 = vector.broadcast %244 : vector<1x32xf32> to vector<16x32xf32>
    %253 = arith.subf %240, %252 : vector<16x32xf32>
    %cst_99 = arith.constant 9.99999974E-6 : f32
    %254 = vector.broadcast %cst_99 : f32 to vector<1x32xf32>
    %255 = arith.addf %251, %254 : vector<1x32xf32>
    %256 = math.rsqrt %255 : vector<1x32xf32>
    %257 = vector.broadcast %256 : vector<1x32xf32> to vector<16x32xf32>
    %258 = arith.mulf %253, %257 : vector<16x32xf32>
    %259 = vector.broadcast %210 : vector<16x1xf32> to vector<16x32xf32>
    %260 = arith.mulf %258, %259 : vector<16x32xf32>
    %261 = vector.broadcast %211 : vector<16x1xf32> to vector<16x32xf32>
    %262 = arith.addf %260, %261 : vector<16x32xf32>
    %cst_100 = arith.constant dense<0.000000e+00> : vector<64x32xf32>
    %263 = tpu.matmul %215, %262, %cst_100 {dimension_numbers = #tpu.dot_dimension_numbers<[1], [0], [0], [1], [0, 0, 1, 1], [], []>} : vector<64x16xf32>, vector<16x32xf32>, vector<64x32xf32> -> vector<64x32xf32>
    %264 = vector.broadcast %212 : vector<64x1xf32> to vector<64x32xf32>
    %265 = arith.addf %263, %264 : vector<64x32xf32>
    %cst_101 = arith.constant 5.000000e-01 : f32
    %266 = vector.broadcast %cst_101 : f32 to vector<64x32xf32>
    %267 = arith.mulf %266, %265 : vector<64x32xf32>
    %cst_102 = arith.constant 0.707106769 : f32
    %268 = vector.broadcast %cst_102 : f32 to vector<64x32xf32>
    %269 = arith.mulf %265, %268 : vector<64x32xf32>
    %270 = math.erf %269 : vector<64x32xf32>
    %cst_103 = arith.constant 1.000000e+00 : f32
    %271 = vector.broadcast %cst_103 : f32 to vector<64x32xf32>
    %272 = arith.addf %271, %270 : vector<64x32xf32>
    %273 = arith.mulf %267, %272 : vector<64x32xf32>
    %cst_104 = arith.constant dense<0.000000e+00> : vector<16x32xf32>
    %274 = tpu.matmul %217, %273, %cst_104 {dimension_numbers = #tpu.dot_dimension_numbers<[1], [0], [0], [1], [0, 0, 1, 1], [], []>} : vector<16x64xf32>, vector<64x32xf32>, vector<16x32xf32> -> vector<16x32xf32>
    %275 = vector.broadcast %213 : vector<16x1xf32> to vector<16x32xf32>
    %276 = arith.addf %274, %275 : vector<16x32xf32>
    %277 = arith.addf %276, %240 : vector<16x32xf32>
    %c0_105 = arith.constant 0 : index
    %c5 = arith.constant 5 : index
    %278 = vector.load %arg5[%c0_105, %c5] : memref<64x24xf32, #tpu.memory_space<vmem>>, vector<16x1xf32>
    %c0_106 = arith.constant 0 : index
    %c10 = arith.constant 10 : index
    %279 = vector.load %arg5[%c0_106, %c10] : memref<64x24xf32, #tpu.memory_space<vmem>>, vector<16x1xf32>
    %c0_107 = arith.constant 0 : index
    %c20 = arith.constant 20 : index
    %280 = vector.load %arg5[%c0_107, %c20] : memref<64x24xf32, #tpu.memory_space<vmem>>, vector<64x1xf32>
    %c0_108 = arith.constant 0 : index
    %c15 = arith.constant 15 : index
    %281 = vector.load %arg5[%c0_108, %c15] : memref<64x24xf32, #tpu.memory_space<vmem>>, vector<16x1xf32>
    %c4_109 = arith.constant 4 : index
    %c0_110 = arith.constant 0 : index
    %c0_111 = arith.constant 0 : index
    %282 = vector.load %arg3[%c4_109, %c0_110, %c0_111] : memref<5x64x16xf32, #tpu.memory_space<vmem>>, vector<1x64x16xf32>
    %283 = vector.shape_cast %282 : vector<1x64x16xf32> to vector<64x16xf32>
    %c4_112 = arith.constant 4 : index
    %c0_113 = arith.constant 0 : index
    %c0_114 = arith.constant 0 : index
    %284 = vector.load %arg4[%c4_112, %c0_113, %c0_114] : memref<5x16x64xf32, #tpu.memory_space<vmem>>, vector<1x16x64xf32>
    %285 = vector.shape_cast %284 : vector<1x16x64xf32> to vector<16x64xf32>
    %cst_115 = arith.constant dense<0.000000e+00> : vector<32xf32>
    %286 = vector.multi_reduction <add>, %277, %cst_115 [0] : vector<16x32xf32> to vector<32xf32>
    %287 = vector.shape_cast %286 : vector<32xf32> to vector<1x32xf32>
    %cst_116 = arith.constant 1.600000e+01 : f32
    %288 = vector.broadcast %cst_116 : f32 to vector<1x32xf32>
    %289 = arith.divf %287, %288 : vector<1x32xf32>
    %290 = vector.broadcast %289 : vector<1x32xf32> to vector<16x32xf32>
    %291 = arith.subf %277, %290 : vector<16x32xf32>
    %292 = arith.mulf %291, %291 : vector<16x32xf32>
    %cst_117 = arith.constant dense<0.000000e+00> : vector<32xf32>
    %293 = vector.multi_reduction <add>, %292, %cst_117 [0] : vector<16x32xf32> to vector<32xf32>
    %294 = vector.shape_cast %293 : vector<32xf32> to vector<1x32xf32>
    %cst_118 = arith.constant 1.600000e+01 : f32
    %295 = vector.broadcast %cst_118 : f32 to vector<1x32xf32>
    %296 = arith.divf %294, %295 : vector<1x32xf32>
    %297 = vector.broadcast %289 : vector<1x32xf32> to vector<16x32xf32>
    %298 = arith.subf %277, %297 : vector<16x32xf32>
    %cst_119 = arith.constant 9.99999974E-6 : f32
    %299 = vector.broadcast %cst_119 : f32 to vector<1x32xf32>
    %300 = arith.addf %296, %299 : vector<1x32xf32>
    %301 = math.rsqrt %300 : vector<1x32xf32>
    %302 = vector.broadcast %301 : vector<1x32xf32> to vector<16x32xf32>
    %303 = arith.mulf %298, %302 : vector<16x32xf32>
    %304 = vector.broadcast %278 : vector<16x1xf32> to vector<16x32xf32>
    %305 = arith.mulf %303, %304 : vector<16x32xf32>
    %306 = vector.broadcast %279 : vector<16x1xf32> to vector<16x32xf32>
    %307 = arith.addf %305, %306 : vector<16x32xf32>
    %308 = arith.addf %307, %277 : vector<16x32xf32>
    %cst_120 = arith.constant dense<0.000000e+00> : vector<32xf32>
    %309 = vector.multi_reduction <add>, %308, %cst_120 [0] : vector<16x32xf32> to vector<32xf32>
    %310 = vector.shape_cast %309 : vector<32xf32> to vector<1x32xf32>
    %cst_121 = arith.constant 1.600000e+01 : f32
    %311 = vector.broadcast %cst_121 : f32 to vector<1x32xf32>
    %312 = arith.divf %310, %311 : vector<1x32xf32>
    %313 = vector.broadcast %312 : vector<1x32xf32> to vector<16x32xf32>
    %314 = arith.subf %308, %313 : vector<16x32xf32>
    %315 = arith.mulf %314, %314 : vector<16x32xf32>
    %cst_122 = arith.constant dense<0.000000e+00> : vector<32xf32>
    %316 = vector.multi_reduction <add>, %315, %cst_122 [0] : vector<16x32xf32> to vector<32xf32>
    %317 = vector.shape_cast %316 : vector<32xf32> to vector<1x32xf32>
    %cst_123 = arith.constant 1.600000e+01 : f32
    %318 = vector.broadcast %cst_123 : f32 to vector<1x32xf32>
    %319 = arith.divf %317, %318 : vector<1x32xf32>
    %320 = vector.broadcast %312 : vector<1x32xf32> to vector<16x32xf32>
    %321 = arith.subf %308, %320 : vector<16x32xf32>
    %cst_124 = arith.constant 9.99999974E-6 : f32
    %322 = vector.broadcast %cst_124 : f32 to vector<1x32xf32>
    %323 = arith.addf %319, %322 : vector<1x32xf32>
    %324 = math.rsqrt %323 : vector<1x32xf32>
    %325 = vector.broadcast %324 : vector<1x32xf32> to vector<16x32xf32>
    %326 = arith.mulf %321, %325 : vector<16x32xf32>
    %327 = vector.broadcast %278 : vector<16x1xf32> to vector<16x32xf32>
    %328 = arith.mulf %326, %327 : vector<16x32xf32>
    %329 = vector.broadcast %279 : vector<16x1xf32> to vector<16x32xf32>
    %330 = arith.addf %328, %329 : vector<16x32xf32>
    %cst_125 = arith.constant dense<0.000000e+00> : vector<64x32xf32>
    %331 = tpu.matmul %283, %330, %cst_125 {dimension_numbers = #tpu.dot_dimension_numbers<[1], [0], [0], [1], [0, 0, 1, 1], [], []>} : vector<64x16xf32>, vector<16x32xf32>, vector<64x32xf32> -> vector<64x32xf32>
    %332 = vector.broadcast %280 : vector<64x1xf32> to vector<64x32xf32>
    %333 = arith.addf %331, %332 : vector<64x32xf32>
    %cst_126 = arith.constant 5.000000e-01 : f32
    %334 = vector.broadcast %cst_126 : f32 to vector<64x32xf32>
    %335 = arith.mulf %334, %333 : vector<64x32xf32>
    %cst_127 = arith.constant 0.707106769 : f32
    %336 = vector.broadcast %cst_127 : f32 to vector<64x32xf32>
    %337 = arith.mulf %333, %336 : vector<64x32xf32>
    %338 = math.erf %337 : vector<64x32xf32>
    %cst_128 = arith.constant 1.000000e+00 : f32
    %339 = vector.broadcast %cst_128 : f32 to vector<64x32xf32>
    %340 = arith.addf %339, %338 : vector<64x32xf32>
    %341 = arith.mulf %335, %340 : vector<64x32xf32>
    %cst_129 = arith.constant dense<0.000000e+00> : vector<16x32xf32>
    %342 = tpu.matmul %285, %341, %cst_129 {dimension_numbers = #tpu.dot_dimension_numbers<[1], [0], [0], [1], [0, 0, 1, 1], [], []>} : vector<16x64xf32>, vector<64x32xf32>, vector<16x32xf32> -> vector<16x32xf32>
    %343 = vector.broadcast %281 : vector<16x1xf32> to vector<16x32xf32>
    %344 = arith.addf %342, %343 : vector<16x32xf32>
    %345 = arith.addf %344, %308 : vector<16x32xf32>
    %c0_130 = arith.constant 0 : index
    %c0_131 = arith.constant 0 : index
    %346 = vector.load %arg7[%c0_130, %c0_131] : memref<32x2xf32, #tpu.memory_space<vmem>>, vector<32x2xf32>
    %cst_132 = arith.constant dense<0.000000e+00> : vector<16x2xf32>
    %347 = tpu.matmul %345, %346, %cst_132 {dimension_numbers = #tpu.dot_dimension_numbers<[1], [0], [0], [1], [0, 0, 1, 1], [], []>} : vector<16x32xf32>, vector<32x2xf32>, vector<16x2xf32> -> vector<16x2xf32>
    %c0_133 = arith.constant 0 : index
    %c0_134 = arith.constant 0 : index
    %348 = vector.load %arg6[%c0_133, %c0_134] : memref<24x128xf32, #tpu.memory_space<vmem>>, vector<16x128xf32>
    %c16_135 = arith.constant 16 : index
    %c0_136 = arith.constant 0 : index
    %349 = vector.load %arg6[%c16_135, %c0_136] : memref<24x128xf32, #tpu.memory_space<vmem>>, vector<1x128xf32>
    %cst_137 = arith.constant dense<0.000000e+00> : vector<2x128xf32>
    %350 = tpu.matmul %347, %348, %cst_137 {dimension_numbers = #tpu.dot_dimension_numbers<[0], [0], [1], [1], [0, 1, 1, 1], [], []>} : vector<16x2xf32>, vector<16x128xf32>, vector<2x128xf32> -> vector<2x128xf32>
    %351 = vector.broadcast %349 : vector<1x128xf32> to vector<2x128xf32>
    %352 = arith.addf %350, %351 : vector<2x128xf32>
    %cst_138 = arith.constant dense<0xFF800000> : vector<2xf32>
    %353 = vector.multi_reduction <maximumf>, %352, %cst_138 [1] : vector<2x128xf32> to vector<2xf32>
    %354 = vector.shape_cast %353 : vector<2xf32> to vector<2x1xf32>
    %355 = vector.broadcast %354 : vector<2x1xf32> to vector<2x128xf32>
    %356 = arith.subf %352, %355 : vector<2x128xf32>
    %357 = math.exp %356 : vector<2x128xf32>
    %cst_139 = arith.constant dense<0.000000e+00> : vector<2xf32>
    %358 = vector.multi_reduction <add>, %357, %cst_139 [1] : vector<2x128xf32> to vector<2xf32>
    %359 = vector.shape_cast %358 : vector<2xf32> to vector<2x1xf32>
    %360 = vector.broadcast %359 : vector<2x1xf32> to vector<2x128xf32>
    %361 = arith.divf %357, %360 : vector<2x128xf32>
    %c0_140 = arith.constant 0 : index
    %c0_141 = arith.constant 0 : index
    %362 = vector.load %arg8[%c0_140, %c0_141] : memref<2x128xf32, #tpu.memory_space<vmem>>, vector<2x128xf32>
    tpu.vector_store %arg8[%c0_140, %c0_141], %361 {strides = array<i32>} : memref<2x128xf32, #tpu.memory_space<vmem>>, vector<2x128xf32>,
    return
  }
  func.func @transform_0(%arg0: i32) -> (i32, i32) {
    %c0_i32 = arith.constant 0 : i32
    %c0_i32_0 = arith.constant 0 : i32
    return %c0_i32, %arg0 : i32, i32
  }
  func.func @transform_1(%arg0: i32) -> (i32, i32) {
    %c0_i32 = arith.constant 0 : i32
    %c0_i32_0 = arith.constant 0 : i32
    %c0_i32_1 = arith.constant 0 : i32
    return %c0_i32, %c0_i32_0 : i32, i32
  }
  func.func @transform_2(%arg0: i32) -> (i32, i32, i32) {
    %c0_i32 = arith.constant 0 : i32
    %c0_i32_0 = arith.constant 0 : i32
    %c0_i32_1 = arith.constant 0 : i32
    %c0_i32_2 = arith.constant 0 : i32
    return %c0_i32, %c0_i32_0, %c0_i32_1 : i32, i32, i32
  }
  func.func @transform_3(%arg0: i32) -> (i32, i32, i32) {
    %c0_i32 = arith.constant 0 : i32
    %c0_i32_0 = arith.constant 0 : i32
    %c0_i32_1 = arith.constant 0 : i32
    %c0_i32_2 = arith.constant 0 : i32
    return %c0_i32, %c0_i32_0, %c0_i32_1 : i32, i32, i32
  }
  func.func @transform_4(%arg0: i32) -> (i32, i32) {
    %c0_i32 = arith.constant 0 : i32
    %c0_i32_0 = arith.constant 0 : i32
    %c0_i32_1 = arith.constant 0 : i32
    return %c0_i32, %c0_i32_0 : i32, i32
  }
  func.func @transform_5(%arg0: i32) -> (i32, i32) {
    %c0_i32 = arith.constant 0 : i32
    %c0_i32_0 = arith.constant 0 : i32
    %c0_i32_1 = arith.constant 0 : i32
    return %c0_i32, %c0_i32_0 : i32, i32
  }
  func.func @transform_6(%arg0: i32) -> (i32, i32) {
    %c0_i32 = arith.constant 0 : i32
    %c0_i32_0 = arith.constant 0 : i32
    %c0_i32_1 = arith.constant 0 : i32
    return %c0_i32, %c0_i32_0 : i32, i32
  }
  func.func @transform_7(%arg0: i32) -> (i32, i32) {
    %c0_i32 = arith.constant 0 : i32
    %c0_i32_0 = arith.constant 0 : i32
    return %arg0, %c0_i32 : i32, i32
  }
}

</mosaic_0001>

<llo_original>
// kernel: tpu_custom_call.1
$region0: #{tpu_custom_call.1}
  #allocation0 [shape = 'u32[]', space=smem, size = 0x4, offset = 0x4, fixed_abs, tag = 'smem constant byte address 0x4 - core index']
  #allocation1 [shape = 'u32[72,128]{1,0:T(1,128)}', space=vmem, size = 0x9000, scoped, tag = 'internal scratch']
  %s0 = inlined_call_operand.vmem [shape: f32[147,32], index: 0, kind: input, shape index: {}]
  %s1 = inlined_call_operand.vmem [shape: f32[16,147], index: 1, kind: input, shape index: {}]
  %s2 = inlined_call_operand.vmem [shape: f32[5,64,16], index: 2, kind: input, shape index: {}]
  %s3 = inlined_call_operand.vmem [shape: f32[5,16,64], index: 3, kind: input, shape index: {}]
  %s4 = inlined_call_operand.vmem [shape: f32[64,24], index: 4, kind: input, shape index: {}]
  %s5 = inlined_call_operand.vmem [shape: f32[24,128], index: 5, kind: input, shape index: {}]
  %s6 = inlined_call_operand.vmem [shape: f32[32,2], index: 6, kind: input, shape index: {}]
  %s7 = inlined_call_operand.hbm [shape: f32[2,128], index: 7, kind: output, shape index: {}]
  %s8 = sld [smem:[#allocation0]]
  $region38: #{tpu_custom_call.1} parent=0
    _
  %s10 = ssub.s32 1, %s8
  %s11 = scalar_select 0, %s10, %s8
  $region1: #{tpu_custom_call.1} parent=0
    #allocation2 [shape = 'u8[1024]{0}', space=vmem, size = 0x400, scoped, tag = 'output window, operand 0, single buffered']
    #allocation3 [shape = 's32[1]{0}', space=sflag, size = 0x4, scoped, tag = 'scoped memory for tpu_custom_call.1']
    %12 = vsyncpa [#allocation3], 0
    // Predicated region
    $region2: #{tpu_custom_call.1} parent=1 // pred_check
      _
    $region3: #{tpu_custom_call.1} parent=1 // pred_check_branch
      %14 = sbr.rel (0) target = $region5
    $region4: #{tpu_custom_call.1} parent=1 // pred_region
      _
    $region5: #{tpu_custom_call.1} parent=1 // pred_fallthru
      _
    // Predicated region
    $region6: #{tpu_custom_call.1} parent=1 // pred_check
      _
    $region7: #{tpu_custom_call.1} parent=1 // pred_check_branch
      %16 = sbr.rel (0) target = $region9
    $region8: #{tpu_custom_call.1} parent=1 // pred_region
      _
    $region9: #{tpu_custom_call.1} parent=1 // pred_fallthru
      _
    // Predicated region
    $region10: #{tpu_custom_call.1} parent=1 // pred_check
      _
    $region11: #{tpu_custom_call.1} parent=1 // pred_check_branch
      %18 = sbr.rel (0) target = $region13
    $region12: #{tpu_custom_call.1} parent=1 // pred_region
      _
    $region13: #{tpu_custom_call.1} parent=1 // pred_fallthru
      _
    // Predicated region
    $region14: #{tpu_custom_call.1} parent=1 // pred_check
      _
    $region15: #{tpu_custom_call.1} parent=1 // pred_check_branch
      %20 = sbr.rel (0) target = $region17
    $region16: #{tpu_custom_call.1} parent=1 // pred_region
      _
    $region17: #{tpu_custom_call.1} parent=1 // pred_fallthru
      _
    // Predicated region
    $region18: #{tpu_custom_call.1} parent=1 // pred_check
      _
    $region19: #{tpu_custom_call.1} parent=1 // pred_check_branch
      %22 = sbr.rel (0) target = $region21
    $region20: #{tpu_custom_call.1} parent=1 // pred_region
      _
    $region21: #{tpu_custom_call.1} parent=1 // pred_fallthru
      _
    // Predicated region
    $region22: #{tpu_custom_call.1} parent=1 // pred_check
      _
    $region23: #{tpu_custom_call.1} parent=1 // pred_check_branch
      %24 = sbr.rel (0) target = $region25
    $region24: #{tpu_custom_call.1} parent=1 // pred_region
      _
    $region25: #{tpu_custom_call.1} parent=1 // pred_fallthru
      _
    // Predicated region
    $region26: #{tpu_custom_call.1} parent=1 // pred_check
      _
    $region27: #{tpu_custom_call.1} parent=1 // pred_check_branch
      %26 = sbr.rel (0) target = $region29
    $region28: #{tpu_custom_call.1} parent=1 // pred_region
      _
    $region29: #{tpu_custom_call.1} parent=1 // pred_fallthru
      _
    %v27 = vld [vmem:[%s4] sm:$0xff]
    %v28 = vld [vmem:[%s4 + $0x8] sm:$0xff]
    %v29 = vld [vmem:[%s1] sm:$0xff]
    %v30 = vld [vmem:[%s1 + $0x8] sm:$0xff]
    %v31 = vld [vmem:[%s1 + $0x10] sm:$0xff]
    %v32 = vld [vmem:[%s1 + $0x18] sm:$0xff]
    %v33 = vld [vmem:[%s0] sm:$0xff]
    %v34 = vld [vmem:[%s0 + $0x8] sm:$0xff]
    %v35 = vld [vmem:[%s0 + $0x10] sm:$0xff]
    %v36 = vld [vmem:[%s0 + $0x18] sm:$0xff]
    %v37 = vld [vmem:[%s0 + $0x20] sm:$0xff]
    %v38 = vld [vmem:[%s0 + $0x28] sm:$0xff]
    %v39 = vld [vmem:[%s0 + $0x30] sm:$0xff]
    %v40 = vld [vmem:[%s0 + $0x38] sm:$0xff]
    %v41 = vld [vmem:[%s0 + $0x40] sm:$0xff]
    %v42 = vld [vmem:[%s0 + $0x48] sm:$0xff]
    %v43 = vld [vmem:[%s0 + $0x50] sm:$0xff]
    %v44 = vld [vmem:[%s0 + $0x58] sm:$0xff]
    %v45 = vld [vmem:[%s0 + $0x60] sm:$0xff]
    %v46 = vld [vmem:[%s0 + $0x68] sm:$0xff]
    %v47 = vld [vmem:[%s0 + $0x70] sm:$0xff]
    %v48 = vld [vmem:[%s0 + $0x78] sm:$0xff]
    %v49 = vld [vmem:[%s0 + $0x80] sm:$0xff]
    %v50 = vld [vmem:[%s0 + $0x88] sm:$0xff]
    %v51 = vld [vmem:[%s0 + $0x90] sm:$0x7]
    %53 = vset.pattern.permute.xlu0 0
    %54 = vperm.xlu0 %53, %v27
    %v55 = vpop.permute.xlu0 %54
    %58 = vset.pattern.permute.xlu0 0
    %59 = vperm.xlu0 %58, %v28
    %v60 = vpop.permute.xlu0 %59
    %vm62 = vcmask 154624
    %v64 = vsel %vm62, %v30, 0
    %v67 = vsel %vm62, %v32, 0
    %vm69 = vcmask 1042432
    %v71 = vsel %vm69, %v51, 0
    %73 = vmatpush.msra.mxu0 %v48
    %74 = vmatpush.msra.mxu0 %v47
    %75 = vmatpush.msra.mxu0 %v46
    %76 = vmatpush.msra.mxu0 %v45
    %77 = vmatpush.msra.mxu0 %v44
    %78 = vmatpush.msra.mxu0 %v43
    %79 = vmatpush.msra.mxu0 %v42
    %80 = vmatpush.msra.mxu0 %v41
    %81 = vmatpush.msra.mxu0 %v40
    %82 = vmatpush.msra.mxu0 %v39
    %83 = vmatpush.msra.mxu0 %v38
    %84 = vmatpush.msra.mxu0 %v37
    %85 = vmatpush.msra.mxu0 %v36
    %86 = vmatpush.msra.mxu0 %v35
    %87 = vmatpush.msra.mxu0 %v34
    %88 = vmatpush.msra.mxu0 %v33
    %89 = vmatmul.f32.gmra.mxu0 %v29
    %v90 = vpop.f32.mrf.mxu0
    %v91 = vadd.f32 %v55, %v90
    %92 = vmatmul.f32.gmra.mxu0 %v31
    %v93 = vpop.f32.mrf.mxu0
    %v94 = vadd.f32 %v60, %v93
    %95 = vdwg.mxu0
    %96 = vmatpush.msra.mxu0 0.0
    %97 = vmatpush.msra.mxu0 0.0
    %98 = vmatpush.msra.mxu0 0.0
    %99 = vmatpush.msra.mxu0 0.0
    %100 = vmatpush.msra.mxu0 0.0
    %101 = vmatpush.msra.mxu0 0.0
    %102 = vmatpush.msra.mxu0 0.0
    %103 = vmatpush.msra.mxu0 0.0
    %104 = vmatpush.msra.mxu0 0.0
    %105 = vmatpush.msra.mxu0 0.0
    %106 = vmatpush.msra.mxu0 0.0
    %107 = vmatpush.msra.mxu0 0.0
    %108 = vmatpush.msra.mxu0 0.0
    %109 = vmatpush.msra.mxu0 %v71
    %110 = vmatpush.msra.mxu0 %v50
    %111 = vmatpush.msra.mxu0 %v49
    %112 = vmatmul.f32.gmra.mxu0 %v64
    %v113 = vpop.f32.mrf.mxu0
    %v114 = vadd.f32 %v91, %v113
    %115 = vmatmul.f32.gmra.mxu0 %v67
    %v116 = vpop.f32.mrf.mxu0
    %v117 = vadd.f32 %v94, %v116
    %118 = vdwg.mxu0
    %v119 = vld [vmem:[%s4] sm:$0xff]
    %v120 = vld [vmem:[%s4 + $0x8] sm:$0xff]
    %v121 = vld [vmem:[%s4 + $0x10] sm:$0xff]
    %v122 = vld [vmem:[%s4 + $0x18] sm:$0xff]
    %v123 = vld [vmem:[%s4 + $0x20] sm:$0xff]
    %v124 = vld [vmem:[%s4 + $0x28] sm:$0xff]
    %v125 = vld [vmem:[%s4 + $0x30] sm:$0xff]
    %v126 = vld [vmem:[%s4 + $0x38] sm:$0xff]
    %v127 = vld [vmem:[%s2] sm:$0xff]
    %v128 = vld [vmem:[%s2 + $0x8] sm:$0xff]
    %v129 = vld [vmem:[%s2 + $0x10] sm:$0xff]
    %v130 = vld [vmem:[%s2 + $0x18] sm:$0xff]
    %v131 = vld [vmem:[%s2 + $0x20] sm:$0xff]
    %v132 = vld [vmem:[%s2 + $0x28] sm:$0xff]
    %v133 = vld [vmem:[%s2 + $0x30] sm:$0xff]
    %v134 = vld [vmem:[%s2 + $0x38] sm:$0xff]
    %v135 = vld [vmem:[%s3] sm:$0xff]
    %v136 = vld [vmem:[%s3 + $0x8] sm:$0xff]
    %vm137 = vcmask 261120
    %v138 = vsel %vm137, %v114, 0.0
    %v139 = vsel %vm137, %v117, 0.0
    %v140 = vadd.f32 %v138, %v139
    %v141 = vrot.slane %v140, 4
    %v142 = vadd.f32 %v140, %v141
    %v143 = vrot.slane %v142, 2
    %v144 = vadd.f32 %v142, %v143
    %v145 = vrot.slane %v144, 1
    %v146 = vadd.f32 %v144, %v145
    %v147 = vrcp.pop 16.0
    %v148 = vmul.f32 16.0, %v147
    %v149 = vsub.f32 1.0, %v148
    %v150 = vmul.f32 %v147, %v149
    %v151 = vadd.f32 %v147, %v150
    %vm152 = vweird.f32 %v147
    %v153 = vsel %vm152, %v147, %v151
    %v154 = vmul.f32 %v146, %v153
    %v155 = vsub.f32 %v114, %v154
    %v156 = vsub.f32 %v117, %v154
    %v157 = vmul.f32 %v155, %v155
    %v158 = vmul.f32 %v156, %v156
    %v159 = vsel %vm137, %v157, 0.0
    %v160 = vsel %vm137, %v158, 0.0
    %v161 = vadd.f32 %v159, %v160
    %v162 = vrot.slane %v161, 4
    %v163 = vadd.f32 %v161, %v162
    %v164 = vrot.slane %v163, 2
    %v165 = vadd.f32 %v163, %v164
    %v166 = vrot.slane %v165, 1
    %v167 = vadd.f32 %v165, %v166
    %v168 = vmul.f32 %v167, %v153
    %v169 = vadd.f32 %v168, 1e-05
    %v170 = vrsqrt.pop %v169
    %v171 = vmul.f32 %v170, %v169
    %v172 = vmul.f32 %v171, %v170
    %v173 = vmul.f32 0.5, %v172
    %v174 = vsub.f32 1.5, %v173
    %v175 = vmul.f32 %v170, %v174
    %vm176 = vweird.f32 %v169
    %vm177 = vweird.f32 %v170
    %vm178 = vmor %vm176, %vm177
    %v179 = vsel %vm178, %v170, %v175
    %v180 = vmul.f32 %v155, %v179
    %v181 = vmul.f32 %v156, %v179
    %182 = vset.pattern.permute.xlu0 1
    %183 = vperm.xlu0 %182, %v27
    %v184 = vpop.permute.xlu0 %183
    %186 = vset.pattern.permute.xlu0 1
    %187 = vperm.xlu0 %186, %v28
    %v188 = vpop.permute.xlu0 %187
    %v190 = vmul.f32 %v180, %v184
    %v191 = vmul.f32 %v181, %v188
    %192 = vset.pattern.permute.xlu0 6
    %193 = vperm.xlu0 %192, %v27
    %v194 = vpop.permute.xlu0 %193
    %196 = vset.pattern.permute.xlu0 6
    %197 = vperm.xlu0 %196, %v28
    %v198 = vpop.permute.xlu0 %197
    %v200 = vadd.f32 %v190, %v194
    %v201 = vadd.f32 %v191, %v198
    %v202 = vadd.f32 %v200, %v114
    %v203 = vadd.f32 %v201, %v117
    %v204 = vsel %vm137, %v202, 0.0
    %v205 = vsel %vm137, %v203, 0.0
    %v206 = vadd.f32 %v204, %v205
    %v207 = vrot.slane %v206, 4
    %v208 = vadd.f32 %v206, %v207
    %v209 = vrot.slane %v208, 2
    %v210 = vadd.f32 %v208, %v209
    %v211 = vrot.slane %v210, 1
    %v212 = vadd.f32 %v210, %v211
    %v213 = vmul.f32 %v212, %v153
    %v214 = vsub.f32 %v202, %v213
    %v215 = vsub.f32 %v203, %v213
    %v216 = vmul.f32 %v214, %v214
    %v217 = vmul.f32 %v215, %v215
    %v218 = vsel %vm137, %v216, 0.0
    %v219 = vsel %vm137, %v217, 0.0
    %v220 = vadd.f32 %v218, %v219
    %v221 = vrot.slane %v220, 4
    %v222 = vadd.f32 %v220, %v221
    %v223 = vrot.slane %v222, 2
    %v224 = vadd.f32 %v222, %v223
    %v225 = vrot.slane %v224, 1
    %v226 = vadd.f32 %v224, %v225
    %v227 = vmul.f32 %v226, %v153
    %v228 = vadd.f32 %v227, 1e-05
    %v229 = vrsqrt.pop %v228
    %v230 = vmul.f32 %v229, %v228
    %v231 = vmul.f32 %v230, %v229
    %v232 = vmul.f32 0.5, %v231
    %v233 = vsub.f32 1.5, %v232
    %v234 = vmul.f32 %v229, %v233
    %vm235 = vweird.f32 %v228
    %vm236 = vweird.f32 %v229
    %vm237 = vmor %vm235, %vm236
    %v238 = vsel %vm237, %v229, %v234
    %v239 = vmul.f32 %v214, %v238
    %v240 = vmul.f32 %v215, %v238
    %v241 = vmul.f32 %v239, %v184
    %v242 = vmul.f32 %v240, %v188
    %v243 = vadd.f32 %v241, %v194
    %v244 = vadd.f32 %v242, %v198
    %246 = vset.pattern.permute.xlu0 16
    %247 = vperm.xlu0 %246, %v119
    %v248 = vpop.permute.xlu0 %247
    %251 = vset.pattern.permute.xlu0 16
    %252 = vperm.xlu0 %251, %v120
    %v253 = vpop.permute.xlu0 %252
    %256 = vset.pattern.permute.xlu0 16
    %257 = vperm.xlu0 %256, %v121
    %v258 = vpop.permute.xlu0 %257
    %261 = vset.pattern.permute.xlu0 16
    %262 = vperm.xlu0 %261, %v122
    %v263 = vpop.permute.xlu0 %262
    %266 = vset.pattern.permute.xlu0 16
    %267 = vperm.xlu0 %266, %v123
    %v268 = vpop.permute.xlu0 %267
    %271 = vset.pattern.permute.xlu0 16
    %272 = vperm.xlu0 %271, %v124
    %v273 = vpop.permute.xlu0 %272
    %276 = vset.pattern.permute.xlu0 16
    %277 = vperm.xlu0 %276, %v125
    %v278 = vpop.permute.xlu0 %277
    %281 = vset.pattern.permute.xlu0 16
    %282 = vperm.xlu0 %281, %v126
    %v283 = vpop.permute.xlu0 %282
    %vm285 = vcmask 130048
    %v287 = vsel %vm285, %v127, 0
    %v290 = vsel %vm285, %v128, 0
    %v293 = vsel %vm285, %v129, 0
    %v296 = vsel %vm285, %v130, 0
    %v299 = vsel %vm285, %v131, 0
    %v302 = vsel %vm285, %v132, 0
    %v305 = vsel %vm285, %v133, 0
    %v308 = vsel %vm285, %v134, 0
    %310 = vmatpush.msra.mxu0 0.0
    %311 = vmatpush.msra.mxu0 0.0
    %312 = vmatpush.msra.mxu0 0.0
    %313 = vmatpush.msra.mxu0 0.0
    %314 = vmatpush.msra.mxu0 0.0
    %315 = vmatpush.msra.mxu0 0.0
    %316 = vmatpush.msra.mxu0 0.0
    %317 = vmatpush.msra.mxu0 0.0
    %318 = vmatpush.msra.mxu0 0.0
    %319 = vmatpush.msra.mxu0 0.0
    %320 = vmatpush.msra.mxu0 0.0
    %321 = vmatpush.msra.mxu0 0.0
    %322 = vmatpush.msra.mxu0 0.0
    %323 = vmatpush.msra.mxu0 0.0
    %324 = vmatpush.msra.mxu0 %v244
    %325 = vmatpush.msra.mxu0 %v243
    %326 = vmatmul.f32.gmra.mxu0 %v287
    %v327 = vpop.f32.mrf.mxu0
    %v328 = vadd.f32 %v248, %v327
    %329 = vmatmul.f32.gmra.mxu0 %v290
    %v330 = vpop.f32.mrf.mxu0
    %v331 = vadd.f32 %v253, %v330
    %332 = vmatmul.f32.gmra.mxu0 %v293
    %v333 = vpop.f32.mrf.mxu0
    %v334 = vadd.f32 %v258, %v333
    %335 = vmatmul.f32.gmra.mxu0 %v296
    %v336 = vpop.f32.mrf.mxu0
    %v337 = vadd.f32 %v263, %v336
    %338 = vmatmul.f32.gmra.mxu0 %v299
    %v339 = vpop.f32.mrf.mxu0
    %v340 = vadd.f32 %v268, %v339
    %341 = vmatmul.f32.gmra.mxu0 %v302
    %v342 = vpop.f32.mrf.mxu0
    %v343 = vadd.f32 %v273, %v342
    %344 = vmatmul.f32.gmra.mxu0 %v305
    %v345 = vpop.f32.mrf.mxu0
    %v346 = vadd.f32 %v278, %v345
    %347 = vmatmul.f32.gmra.mxu0 %v308
    %v348 = vpop.f32.mrf.mxu0
    %v349 = vadd.f32 %v283, %v348
    %350 = vdwg.mxu0
    %v351 = vmul.f32 %v328, 0.5
    %v352 = vmul.f32 %v331, 0.5
    %v353 = vmul.f32 %v334, 0.5
    %v354 = vmul.f32 %v337, 0.5
    %v355 = vmul.f32 %v340, 0.5
    %v356 = vmul.f32 %v343, 0.5
    %v357 = vmul.f32 %v346, 0.5
    %v358 = vmul.f32 %v349, 0.5
    %v359 = vmul.f32 %v328, 0.70710677
    %v360 = vmul.f32 %v331, 0.70710677
    %v361 = vmul.f32 %v334, 0.70710677
    %v362 = vmul.f32 %v337, 0.70710677
    %v363 = vmul.f32 %v340, 0.70710677
    %v364 = vmul.f32 %v343, 0.70710677
    %v365 = vmul.f32 %v346, 0.70710677
    %v366 = vmul.f32 %v349, 0.70710677
    %v367 = vmul.f32 %v359, %v359
    %v368 = vmin.f32 16.0, %v367
    %v369 = vmul.f32 %v368, 2.1237322e-06
    %v370 = vadd.f32 %v369, 0.00028619796
    %v371 = vmul.f32 %v368, %v370
    %v372 = vadd.f32 %v371, 0.0036580483
    %v373 = vmul.f32 %v368, %v372
    %v374 = vadd.f32 %v373, 0.05243302
    %v375 = vmul.f32 %v368, %v374
    %v376 = vadd.f32 %v375, 0.18741608
    %v377 = vmul.f32 %v368, %v376
    %v378 = vadd.f32 %v377, 1.1283791
    %v379 = vmul.f32 %v359, %v378
    %v380 = vmul.f32 %v368, 3.8918573e-05
    %v381 = vadd.f32 %v380, 0.001143296
    %v382 = vmul.f32 %v368, %v381
    %v383 = vadd.f32 %v382, 0.014752088
    %v384 = vmul.f32 %v368, %v383
    %v385 = vadd.f32 %v384, 0.112945676
    %v386 = vmul.f32 %v368, %v385
    %v387 = vadd.f32 %v386, 0.4994258
    %v388 = vmul.f32 %v368, %v387
    %v389 = vadd.f32 %v388, 1.0
    %v390 = vrcp.pop %v389
    %v391 = vmul.f32 %v389, %v390
    %v392 = vsub.f32 1.0, %v391
    %v393 = vmul.f32 %v390, %v392
    %v394 = vadd.f32 %v390, %v393
    %vm395 = vweird.f32 %v389
    %vm396 = vweird.f32 %v390
    %vm397 = vmor %vm395, %vm396
    %v398 = vsel %vm397, %v390, %v394
    %v399 = vand.u32 2147483647, %v389
    %vm400 = vcmp.eq.f32.partialorder %v399, 8.507059e+37
    %v401 = vand.u32 %v389, 2147483648
    %v402 = vor.u32 1.1754944e-38, %v401
    %v403 = vsel %vm400, %v402, %v398
    %v404 = vmul.f32 %v379, %v403
    %v405 = vmin.f32 %v404, 1.0
    %v406 = vmax.f32 %v405, -1.0
    %v407 = vmul.f32 %v360, %v360
    %v408 = vmin.f32 16.0, %v407
    %v409 = vmul.f32 %v408, 2.1237322e-06
    %v410 = vadd.f32 %v409, 0.00028619796
    %v411 = vmul.f32 %v408, %v410
    %v412 = vadd.f32 %v411, 0.0036580483
    %v413 = vmul.f32 %v408, %v412
    %v414 = vadd.f32 %v413, 0.05243302
    %v415 = vmul.f32 %v408, %v414
    %v416 = vadd.f32 %v415, 0.18741608
    %v417 = vmul.f32 %v408, %v416
    %v418 = vadd.f32 %v417, 1.1283791
    %v419 = vmul.f32 %v360, %v418
    %v420 = vmul.f32 %v408, 3.8918573e-05
    %v421 = vadd.f32 %v420, 0.001143296
    %v422 = vmul.f32 %v408, %v421
    %v423 = vadd.f32 %v422, 0.014752088
    %v424 = vmul.f32 %v408, %v423
    %v425 = vadd.f32 %v424, 0.112945676
    %v426 = vmul.f32 %v408, %v425
    %v427 = vadd.f32 %v426, 0.4994258
    %v428 = vmul.f32 %v408, %v427
    %v429 = vadd.f32 %v428, 1.0
    %v430 = vrcp.pop %v429
    %v431 = vmul.f32 %v429, %v430
    %v432 = vsub.f32 1.0, %v431
    %v433 = vmul.f32 %v430, %v432
    %v434 = vadd.f32 %v430, %v433
    %vm435 = vweird.f32 %v429
    %vm436 = vweird.f32 %v430
    %vm437 = vmor %vm435, %vm436
    %v438 = vsel %vm437, %v430, %v434
    %v439 = vand.u32 2147483647, %v429
    %vm440 = vcmp.eq.f32.partialorder %v439, 8.507059e+37
    %v441 = vand.u32 %v429, 2147483648
    %v442 = vor.u32 1.1754944e-38, %v441
    %v443 = vsel %vm440, %v442, %v438
    %v444 = vmul.f32 %v419, %v443
    %v445 = vmin.f32 %v444, 1.0
    %v446 = vmax.f32 %v445, -1.0
    %v447 = vmul.f32 %v361, %v361
    %v448 = vmin.f32 16.0, %v447
    %v449 = vmul.f32 %v448, 2.1237322e-06
    %v450 = vadd.f32 %v449, 0.00028619796
    %v451 = vmul.f32 %v448, %v450
    %v452 = vadd.f32 %v451, 0.0036580483
    %v453 = vmul.f32 %v448, %v452
    %v454 = vadd.f32 %v453, 0.05243302
    %v455 = vmul.f32 %v448, %v454
    %v456 = vadd.f32 %v455, 0.18741608
    %v457 = vmul.f32 %v448, %v456
    %v458 = vadd.f32 %v457, 1.1283791
    %v459 = vmul.f32 %v361, %v458
    %v460 = vmul.f32 %v448, 3.8918573e-05
    %v461 = vadd.f32 %v460, 0.001143296
    %v462 = vmul.f32 %v448, %v461
    %v463 = vadd.f32 %v462, 0.014752088
    %v464 = vmul.f32 %v448, %v463
    %v465 = vadd.f32 %v464, 0.112945676
    %v466 = vmul.f32 %v448, %v465
    %v467 = vadd.f32 %v466, 0.4994258
    %v468 = vmul.f32 %v448, %v467
    %v469 = vadd.f32 %v468, 1.0
    %v470 = vrcp.pop %v469
    %v471 = vmul.f32 %v469, %v470
    %v472 = vsub.f32 1.0, %v471
    %v473 = vmul.f32 %v470, %v472
    %v474 = vadd.f32 %v470, %v473
    %vm475 = vweird.f32 %v469
    %vm476 = vweird.f32 %v470
    %vm477 = vmor %vm475, %vm476
    %v478 = vsel %vm477, %v470, %v474
    %v479 = vand.u32 2147483647, %v469
    %vm480 = vcmp.eq.f32.partialorder %v479, 8.507059e+37
    %v481 = vand.u32 %v469, 2147483648
    %v482 = vor.u32 1.1754944e-38, %v481
    %v483 = vsel %vm480, %v482, %v478
    %v484 = vmul.f32 %v459, %v483
    %v485 = vmin.f32 %v484, 1.0
    %v486 = vmax.f32 %v485, -1.0
    %v487 = vmul.f32 %v362, %v362
    %v488 = vmin.f32 16.0, %v487
    %v489 = vmul.f32 %v488, 2.1237322e-06
    %v490 = vadd.f32 %v489, 0.00028619796
    %v491 = vmul.f32 %v488, %v490
    %v492 = vadd.f32 %v491, 0.0036580483
    %v493 = vmul.f32 %v488, %v492
    %v494 = vadd.f32 %v493, 0.05243302
    %v495 = vmul.f32 %v488, %v494
    %v496 = vadd.f32 %v495, 0.18741608
    %v497 = vmul.f32 %v488, %v496
    %v498 = vadd.f32 %v497, 1.1283791
    %v499 = vmul.f32 %v362, %v498
    %v500 = vmul.f32 %v488, 3.8918573e-05
    %v501 = vadd.f32 %v500, 0.001143296
    %v502 = vmul.f32 %v488, %v501
    %v503 = vadd.f32 %v502, 0.014752088
    %v504 = vmul.f32 %v488, %v503
    %v505 = vadd.f32 %v504, 0.112945676
    %v506 = vmul.f32 %v488, %v505
    %v507 = vadd.f32 %v506, 0.4994258
    %v508 = vmul.f32 %v488, %v507
    %v509 = vadd.f32 %v508, 1.0
    %v510 = vrcp.pop %v509
    %v511 = vmul.f32 %v509, %v510
    %v512 = vsub.f32 1.0, %v511
    %v513 = vmul.f32 %v510, %v512
    %v514 = vadd.f32 %v510, %v513
    %vm515 = vweird.f32 %v509
    %vm516 = vweird.f32 %v510
    %vm517 = vmor %vm515, %vm516
    %v518 = vsel %vm517, %v510, %v514
    %v519 = vand.u32 2147483647, %v509
    %vm520 = vcmp.eq.f32.partialorder %v519, 8.507059e+37
    %v521 = vand.u32 %v509, 2147483648
    %v522 = vor.u32 1.1754944e-38, %v521
    %v523 = vsel %vm520, %v522, %v518
    %v524 = vmul.f32 %v499, %v523
    %v525 = vmin.f32 %v524, 1.0
    %v526 = vmax.f32 %v525, -1.0
    %v527 = vmul.f32 %v363, %v363
    %v528 = vmin.f32 16.0, %v527
    %v529 = vmul.f32 %v528, 2.1237322e-06
    %v530 = vadd.f32 %v529, 0.00028619796
    %v531 = vmul.f32 %v528, %v530
    %v532 = vadd.f32 %v531, 0.0036580483
    %v533 = vmul.f32 %v528, %v532
    %v534 = vadd.f32 %v533, 0.05243302
    %v535 = vmul.f32 %v528, %v534
    %v536 = vadd.f32 %v535, 0.18741608
    %v537 = vmul.f32 %v528, %v536
    %v538 = vadd.f32 %v537, 1.1283791
    %v539 = vmul.f32 %v363, %v538
    %v540 = vmul.f32 %v528, 3.8918573e-05
    %v541 = vadd.f32 %v540, 0.001143296
    %v542 = vmul.f32 %v528, %v541
    %v543 = vadd.f32 %v542, 0.014752088
    %v544 = vmul.f32 %v528, %v543
    %v545 = vadd.f32 %v544, 0.112945676
    %v546 = vmul.f32 %v528, %v545
    %v547 = vadd.f32 %v546, 0.4994258
    %v548 = vmul.f32 %v528, %v547
    %v549 = vadd.f32 %v548, 1.0
    %v550 = vrcp.pop %v549
    %v551 = vmul.f32 %v549, %v550
    %v552 = vsub.f32 1.0, %v551
    %v553 = vmul.f32 %v550, %v552
    %v554 = vadd.f32 %v550, %v553
    %vm555 = vweird.f32 %v549
    %vm556 = vweird.f32 %v550
    %vm557 = vmor %vm555, %vm556
    %v558 = vsel %vm557, %v550, %v554
    %v559 = vand.u32 2147483647, %v549
    %vm560 = vcmp.eq.f32.partialorder %v559, 8.507059e+37
    %v561 = vand.u32 %v549, 2147483648
    %v562 = vor.u32 1.1754944e-38, %v561
    %v563 = vsel %vm560, %v562, %v558
    %v564 = vmul.f32 %v539, %v563
    %v565 = vmin.f32 %v564, 1.0
    %v566 = vmax.f32 %v565, -1.0
    %v567 = vmul.f32 %v364, %v364
    %v568 = vmin.f32 16.0, %v567
    %v569 = vmul.f32 %v568, 2.1237322e-06
    %v570 = vadd.f32 %v569, 0.00028619796
    %v571 = vmul.f32 %v568, %v570
    %v572 = vadd.f32 %v571, 0.0036580483
    %v573 = vmul.f32 %v568, %v572
    %v574 = vadd.f32 %v573, 0.05243302
    %v575 = vmul.f32 %v568, %v574
    %v576 = vadd.f32 %v575, 0.18741608
    %v577 = vmul.f32 %v568, %v576
    %v578 = vadd.f32 %v577, 1.1283791
    %v579 = vmul.f32 %v364, %v578
    %v580 = vmul.f32 %v568, 3.8918573e-05
    %v581 = vadd.f32 %v580, 0.001143296
    %v582 = vmul.f32 %v568, %v581
    %v583 = vadd.f32 %v582, 0.014752088
    %v584 = vmul.f32 %v568, %v583
    %v585 = vadd.f32 %v584, 0.112945676
    %v586 = vmul.f32 %v568, %v585
    %v587 = vadd.f32 %v586, 0.4994258
    %v588 = vmul.f32 %v568, %v587
    %v589 = vadd.f32 %v588, 1.0
    %v590 = vrcp.pop %v589
    %v591 = vmul.f32 %v589, %v590
    %v592 = vsub.f32 1.0, %v591
    %v593 = vmul.f32 %v590, %v592
    %v594 = vadd.f32 %v590, %v593
    %vm595 = vweird.f32 %v589
    %vm596 = vweird.f32 %v590
    %vm597 = vmor %vm595, %vm596
    %v598 = vsel %vm597, %v590, %v594
    %v599 = vand.u32 2147483647, %v589
    %vm600 = vcmp.eq.f32.partialorder %v599, 8.507059e+37
    %v601 = vand.u32 %v589, 2147483648
    %v602 = vor.u32 1.1754944e-38, %v601
    %v603 = vsel %vm600, %v602, %v598
    %v604 = vmul.f32 %v579, %v603
    %v605 = vmin.f32 %v604, 1.0
    %v606 = vmax.f32 %v605, -1.0
    %v607 = vmul.f32 %v365, %v365
    %v608 = vmin.f32 16.0, %v607
    %v609 = vmul.f32 %v608, 2.1237322e-06
    %v610 = vadd.f32 %v609, 0.00028619796
    %v611 = vmul.f32 %v608, %v610
    %v612 = vadd.f32 %v611, 0.0036580483
    %v613 = vmul.f32 %v608, %v612
    %v614 = vadd.f32 %v613, 0.05243302
    %v615 = vmul.f32 %v608, %v614
    %v616 = vadd.f32 %v615, 0.18741608
    %v617 = vmul.f32 %v608, %v616
    %v618 = vadd.f32 %v617, 1.1283791
    %v619 = vmul.f32 %v365, %v618
    %v620 = vmul.f32 %v608, 3.8918573e-05
    %v621 = vadd.f32 %v620, 0.001143296
    %v622 = vmul.f32 %v608, %v621
    %v623 = vadd.f32 %v622, 0.014752088
    %v624 = vmul.f32 %v608, %v623
    %v625 = vadd.f32 %v624, 0.112945676
    %v626 = vmul.f32 %v608, %v625
    %v627 = vadd.f32 %v626, 0.4994258
    %v628 = vmul.f32 %v608, %v627
    %v629 = vadd.f32 %v628, 1.0
    %v630 = vrcp.pop %v629
    %v631 = vmul.f32 %v629, %v630
    %v632 = vsub.f32 1.0, %v631
    %v633 = vmul.f32 %v630, %v632
    %v634 = vadd.f32 %v630, %v633
    %vm635 = vweird.f32 %v629
    %vm636 = vweird.f32 %v630
    %vm637 = vmor %vm635, %vm636
    %v638 = vsel %vm637, %v630, %v634
    %v639 = vand.u32 2147483647, %v629
    %vm640 = vcmp.eq.f32.partialorder %v639, 8.507059e+37
    %v641 = vand.u32 %v629, 2147483648
    %v642 = vor.u32 1.1754944e-38, %v641
    %v643 = vsel %vm640, %v642, %v638
    %v644 = vmul.f32 %v619, %v643
    %v645 = vmin.f32 %v644, 1.0
    %v646 = vmax.f32 %v645, -1.0
    %v647 = vmul.f32 %v366, %v366
    %v648 = vmin.f32 16.0, %v647
    %v649 = vmul.f32 %v648, 2.1237322e-06
    %v650 = vadd.f32 %v649, 0.00028619796
    %v651 = vmul.f32 %v648, %v650
    %v652 = vadd.f32 %v651, 0.0036580483
    %v653 = vmul.f32 %v648, %v652
    %v654 = vadd.f32 %v653, 0.05243302
    %v655 = vmul.f32 %v648, %v654
    %v656 = vadd.f32 %v655, 0.18741608
    %v657 = vmul.f32 %v648, %v656
    %v658 = vadd.f32 %v657, 1.1283791
    %v659 = vmul.f32 %v366, %v658
    %v660 = vmul.f32 %v648, 3.8918573e-05
    %v661 = vadd.f32 %v660, 0.001143296
    %v662 = vmul.f32 %v648, %v661
    %v663 = vadd.f32 %v662, 0.014752088
    %v664 = vmul.f32 %v648, %v663
    %v665 = vadd.f32 %v664, 0.112945676
    %v666 = vmul.f32 %v648, %v665
    %v667 = vadd.f32 %v666, 0.4994258
    %v668 = vmul.f32 %v648, %v667
    %v669 = vadd.f32 %v668, 1.0
    %v670 = vrcp.pop %v669
    %v671 = vmul.f32 %v669, %v670
    %v672 = vsub.f32 1.0, %v671
    %v673 = vmul.f32 %v670, %v672
    %v674 = vadd.f32 %v670, %v673
    %vm675 = vweird.f32 %v669
    %vm676 = vweird.f32 %v670
    %vm677 = vmor %vm675, %vm676
    %v678 = vsel %vm677, %v670, %v674
    %v679 = vand.u32 2147483647, %v669
    %vm680 = vcmp.eq.f32.partialorder %v679, 8.507059e+37
    %v681 = vand.u32 %v669, 2147483648
    %v682 = vor.u32 1.1754944e-38, %v681
    %v683 = vsel %vm680, %v682, %v678
    %v684 = vmul.f32 %v659, %v683
    %v685 = vmin.f32 %v684, 1.0
    %v686 = vmax.f32 %v685, -1.0
    %v687 = vadd.f32 %v406, 1.0
    %v688 = vadd.f32 %v446, 1.0
    %v689 = vadd.f32 %v486, 1.0
    %v690 = vadd.f32 %v526, 1.0
    %v691 = vadd.f32 %v566, 1.0
    %v692 = vadd.f32 %v606, 1.0
    %v693 = vadd.f32 %v646, 1.0
    %v694 = vadd.f32 %v686, 1.0
    %v695 = vmul.f32 %v351, %v687
    %v696 = vmul.f32 %v352, %v688
    %v697 = vmul.f32 %v353, %v689
    %v698 = vmul.f32 %v354, %v690
    %v699 = vmul.f32 %v355, %v691
    %v700 = vmul.f32 %v356, %v692
    %v701 = vmul.f32 %v357, %v693
    %v702 = vmul.f32 %v358, %v694
    %703 = vset.pattern.permute.xlu0 11
    %704 = vperm.xlu0 %703, %v27
    %v705 = vpop.permute.xlu0 %704
    %707 = vset.pattern.permute.xlu0 11
    %708 = vperm.xlu0 %707, %v28
    %v709 = vpop.permute.xlu0 %708
    %vm711 = vcmask 523264
    %v713 = vsel %vm711, %v135, 0
    %v716 = vsel %vm711, %v136, 0
    %718 = vmatpush.msra.mxu0 0.0
    %719 = vmatpush.msra.mxu0 0.0
    %720 = vmatpush.msra.mxu0 0.0
    %721 = vmatpush.msra.mxu0 0.0
    %722 = vmatpush.msra.mxu0 0.0
    %723 = vmatpush.msra.mxu0 0.0
    %724 = vmatpush.msra.mxu0 0.0
    %725 = vmatpush.msra.mxu0 0.0
    %726 = vmatpush.msra.mxu0 %v702
    %727 = vmatpush.msra.mxu0 %v701
    %728 = vmatpush.msra.mxu0 %v700
    %729 = vmatpush.msra.mxu0 %v699
    %730 = vmatpush.msra.mxu0 %v698
    %731 = vmatpush.msra.mxu0 %v697
    %732 = vmatpush.msra.mxu0 %v696
    %733 = vmatpush.msra.mxu0 %v695
    %734 = vmatmul.f32.gmra.mxu0 %v713
    %v735 = vpop.f32.mrf.mxu0
    %v736 = vadd.f32 %v705, %v735
    %737 = vmatmul.f32.gmra.mxu0 %v716
    %v738 = vpop.f32.mrf.mxu0
    %v739 = vadd.f32 %v709, %v738
    %740 = vdwg.mxu0
    %v741 = vadd.f32 %v736, %v202
    %v742 = vadd.f32 %v739, %v203
    %s743 = scalar_lea.vmem %s2, 64
    %v744 = vld [vmem:[%s743] sm:$0xff]
    %v745 = vld [vmem:[%s743 + $0x8] sm:$0xff]
    %v746 = vld [vmem:[%s743 + $0x10] sm:$0xff]
    %v747 = vld [vmem:[%s743 + $0x18] sm:$0xff]
    %v748 = vld [vmem:[%s743 + $0x20] sm:$0xff]
    %v749 = vld [vmem:[%s743 + $0x28] sm:$0xff]
    %v750 = vld [vmem:[%s743 + $0x30] sm:$0xff]
    %v751 = vld [vmem:[%s743 + $0x38] sm:$0xff]
    %s752 = scalar_lea.vmem %s3, 16
    %v753 = vld [vmem:[%s752] sm:$0xff]
    %v754 = vld [vmem:[%s752 + $0x8] sm:$0xff]
    %v755 = vsel %vm137, %v741, 0.0
    %v756 = vsel %vm137, %v742, 0.0
    %v757 = vadd.f32 %v755, %v756
    %v758 = vrot.slane %v757, 4
    %v759 = vadd.f32 %v757, %v758
    %v760 = vrot.slane %v759, 2
    %v761 = vadd.f32 %v759, %v760
    %v762 = vrot.slane %v761, 1
    %v763 = vadd.f32 %v761, %v762
    %v764 = vmul.f32 %v763, %v153
    %v765 = vsub.f32 %v741, %v764
    %v766 = vsub.f32 %v742, %v764
    %v767 = vmul.f32 %v765, %v765
    %v768 = vmul.f32 %v766, %v766
    %v769 = vsel %vm137, %v767, 0.0
    %v770 = vsel %vm137, %v768, 0.0
    %v771 = vadd.f32 %v769, %v770
    %v772 = vrot.slane %v771, 4
    %v773 = vadd.f32 %v771, %v772
    %v774 = vrot.slane %v773, 2
    %v775 = vadd.f32 %v773, %v774
    %v776 = vrot.slane %v775, 1
    %v777 = vadd.f32 %v775, %v776
    %v778 = vmul.f32 %v777, %v153
    %v779 = vadd.f32 %v778, 1e-05
    %v780 = vrsqrt.pop %v779
    %v781 = vmul.f32 %v780, %v779
    %v782 = vmul.f32 %v781, %v780
    %v783 = vmul.f32 0.5, %v782
    %v784 = vsub.f32 1.5, %v783
    %v785 = vmul.f32 %v780, %v784
    %vm786 = vweird.f32 %v779
    %vm787 = vweird.f32 %v780
    %vm788 = vmor %vm786, %vm787
    %v789 = vsel %vm788, %v780, %v785
    %v790 = vmul.f32 %v765, %v789
    %v791 = vmul.f32 %v766, %v789
    %792 = vset.pattern.permute.xlu0 2
    %793 = vperm.xlu0 %792, %v27
    %v794 = vpop.permute.xlu0 %793
    %796 = vset.pattern.permute.xlu0 2
    %797 = vperm.xlu0 %796, %v28
    %v798 = vpop.permute.xlu0 %797
    %v800 = vmul.f32 %v790, %v794
    %v801 = vmul.f32 %v791, %v798
    %802 = vset.pattern.permute.xlu0 7
    %803 = vperm.xlu0 %802, %v27
    %v804 = vpop.permute.xlu0 %803
    %806 = vset.pattern.permute.xlu0 7
    %807 = vperm.xlu0 %806, %v28
    %v808 = vpop.permute.xlu0 %807
    %v810 = vadd.f32 %v800, %v804
    %v811 = vadd.f32 %v801, %v808
    %v812 = vadd.f32 %v810, %v741
    %v813 = vadd.f32 %v811, %v742
    %v814 = vsel %vm137, %v812, 0.0
    %v815 = vsel %vm137, %v813, 0.0
    %v816 = vadd.f32 %v814, %v815
    %v817 = vrot.slane %v816, 4
    %v818 = vadd.f32 %v816, %v817
    %v819 = vrot.slane %v818, 2
    %v820 = vadd.f32 %v818, %v819
    %v821 = vrot.slane %v820, 1
    %v822 = vadd.f32 %v820, %v821
    %v823 = vmul.f32 %v822, %v153
    %v824 = vsub.f32 %v812, %v823
    %v825 = vsub.f32 %v813, %v823
    %v826 = vmul.f32 %v824, %v824
    %v827 = vmul.f32 %v825, %v825
    %v828 = vsel %vm137, %v826, 0.0
    %v829 = vsel %vm137, %v827, 0.0
    %v830 = vadd.f32 %v828, %v829
    %v831 = vrot.slane %v830, 4
    %v832 = vadd.f32 %v830, %v831
    %v833 = vrot.slane %v832, 2
    %v834 = vadd.f32 %v832, %v833
    %v835 = vrot.slane %v834, 1
    %v836 = vadd.f32 %v834, %v835
    %v837 = vmul.f32 %v836, %v153
    %v838 = vadd.f32 %v837, 1e-05
    %v839 = vrsqrt.pop %v838
    %v840 = vmul.f32 %v839, %v838
    %v841 = vmul.f32 %v840, %v839
    %v842 = vmul.f32 0.5, %v841
    %v843 = vsub.f32 1.5, %v842
    %v844 = vmul.f32 %v839, %v843
    %vm845 = vweird.f32 %v838
    %vm846 = vweird.f32 %v839
    %vm847 = vmor %vm845, %vm846
    %v848 = vsel %vm847, %v839, %v844
    %v849 = vmul.f32 %v824, %v848
    %v850 = vmul.f32 %v825, %v848
    %v851 = vmul.f32 %v849, %v794
    %v852 = vmul.f32 %v850, %v798
    %v853 = vadd.f32 %v851, %v804
    %v854 = vadd.f32 %v852, %v808
    %855 = vset.pattern.permute.xlu0 17
    %856 = vperm.xlu0 %855, %v119
    %v857 = vpop.permute.xlu0 %856
    %859 = vset.pattern.permute.xlu0 17
    %860 = vperm.xlu0 %859, %v120
    %v861 = vpop.permute.xlu0 %860
    %863 = vset.pattern.permute.xlu0 17
    %864 = vperm.xlu0 %863, %v121
    %v865 = vpop.permute.xlu0 %864
    %867 = vset.pattern.permute.xlu0 17
    %868 = vperm.xlu0 %867, %v122
    %v869 = vpop.permute.xlu0 %868
    %871 = vset.pattern.permute.xlu0 17
    %872 = vperm.xlu0 %871, %v123
    %v873 = vpop.permute.xlu0 %872
    %875 = vset.pattern.permute.xlu0 17
    %876 = vperm.xlu0 %875, %v124
    %v877 = vpop.permute.xlu0 %876
    %879 = vset.pattern.permute.xlu0 17
    %880 = vperm.xlu0 %879, %v125
    %v881 = vpop.permute.xlu0 %880
    %883 = vset.pattern.permute.xlu0 17
    %884 = vperm.xlu0 %883, %v126
    %v885 = vpop.permute.xlu0 %884
    %v888 = vsel %vm285, %v744, 0
    %v891 = vsel %vm285, %v745, 0
    %v894 = vsel %vm285, %v746, 0
    %v897 = vsel %vm285, %v747, 0
    %v900 = vsel %vm285, %v748, 0
    %v903 = vsel %vm285, %v749, 0
    %v906 = vsel %vm285, %v750, 0
    %v909 = vsel %vm285, %v751, 0
    %911 = vmatpush.msra.mxu0 0.0
    %912 = vmatpush.msra.mxu0 0.0
    %913 = vmatpush.msra.mxu0 0.0
    %914 = vmatpush.msra.mxu0 0.0
    %915 = vmatpush.msra.mxu0 0.0
    %916 = vmatpush.msra.mxu0 0.0
    %917 = vmatpush.msra.mxu0 0.0
    %918 = vmatpush.msra.mxu0 0.0
    %919 = vmatpush.msra.mxu0 0.0
    %920 = vmatpush.msra.mxu0 0.0
    %921 = vmatpush.msra.mxu0 0.0
    %922 = vmatpush.msra.mxu0 0.0
    %923 = vmatpush.msra.mxu0 0.0
    %924 = vmatpush.msra.mxu0 0.0
    %925 = vmatpush.msra.mxu0 %v854
    %926 = vmatpush.msra.mxu0 %v853
    %927 = vmatmul.f32.gmra.mxu0 %v888
    %v928 = vpop.f32.mrf.mxu0
    %v929 = vadd.f32 %v857, %v928
    %930 = vmatmul.f32.gmra.mxu0 %v891
    %v931 = vpop.f32.mrf.mxu0
    %v932 = vadd.f32 %v861, %v931
    %933 = vmatmul.f32.gmra.mxu0 %v894
    %v934 = vpop.f32.mrf.mxu0
    %v935 = vadd.f32 %v865, %v934
    %936 = vmatmul.f32.gmra.mxu0 %v897
    %v937 = vpop.f32.mrf.mxu0
    %v938 = vadd.f32 %v869, %v937
    %939 = vmatmul.f32.gmra.mxu0 %v900
    %v940 = vpop.f32.mrf.mxu0
    %v941 = vadd.f32 %v873, %v940
    %942 = vmatmul.f32.gmra.mxu0 %v903
    %v943 = vpop.f32.mrf.mxu0
    %v944 = vadd.f32 %v877, %v943
    %945 = vmatmul.f32.gmra.mxu0 %v906
    %v946 = vpop.f32.mrf.mxu0
    %v947 = vadd.f32 %v881, %v946
    %948 = vmatmul.f32.gmra.mxu0 %v909
    %v949 = vpop.f32.mrf.mxu0
    %v950 = vadd.f32 %v885, %v949
    %951 = vdwg.mxu0
    %v952 = vmul.f32 %v929, 0.5
    %v953 = vmul.f32 %v932, 0.5
    %v954 = vmul.f32 %v935, 0.5
    %v955 = vmul.f32 %v938, 0.5
    %v956 = vmul.f32 %v941, 0.5
    %v957 = vmul.f32 %v944, 0.5
    %v958 = vmul.f32 %v947, 0.5
    %v959 = vmul.f32 %v950, 0.5
    %v960 = vmul.f32 %v929, 0.70710677
    %v961 = vmul.f32 %v932, 0.70710677
    %v962 = vmul.f32 %v935, 0.70710677
    %v963 = vmul.f32 %v938, 0.70710677
    %v964 = vmul.f32 %v941, 0.70710677
    %v965 = vmul.f32 %v944, 0.70710677
    %v966 = vmul.f32 %v947, 0.70710677
    %v967 = vmul.f32 %v950, 0.70710677
    %v968 = vmul.f32 %v960, %v960
    %v969 = vmin.f32 16.0, %v968
    %v970 = vmul.f32 %v969, 2.1237322e-06
    %v971 = vadd.f32 %v970, 0.00028619796
    %v972 = vmul.f32 %v969, %v971
    %v973 = vadd.f32 %v972, 0.0036580483
    %v974 = vmul.f32 %v969, %v973
    %v975 = vadd.f32 %v974, 0.05243302
    %v976 = vmul.f32 %v969, %v975
    %v977 = vadd.f32 %v976, 0.18741608
    %v978 = vmul.f32 %v969, %v977
    %v979 = vadd.f32 %v978, 1.1283791
    %v980 = vmul.f32 %v960, %v979
    %v981 = vmul.f32 %v969, 3.8918573e-05
    %v982 = vadd.f32 %v981, 0.001143296
    %v983 = vmul.f32 %v969, %v982
    %v984 = vadd.f32 %v983, 0.014752088
    %v985 = vmul.f32 %v969, %v984
    %v986 = vadd.f32 %v985, 0.112945676
    %v987 = vmul.f32 %v969, %v986
    %v988 = vadd.f32 %v987, 0.4994258
    %v989 = vmul.f32 %v969, %v988
    %v990 = vadd.f32 %v989, 1.0
    %v991 = vrcp.pop %v990
    %v992 = vmul.f32 %v990, %v991
    %v993 = vsub.f32 1.0, %v992
    %v994 = vmul.f32 %v991, %v993
    %v995 = vadd.f32 %v991, %v994
    %vm996 = vweird.f32 %v990
    %vm997 = vweird.f32 %v991
    %vm998 = vmor %vm996, %vm997
    %v999 = vsel %vm998, %v991, %v995
    %v1000 = vand.u32 2147483647, %v990
    %vm1001 = vcmp.eq.f32.partialorder %v1000, 8.507059e+37
    %v1002 = vand.u32 %v990, 2147483648
    %v1003 = vor.u32 1.1754944e-38, %v1002
    %v1004 = vsel %vm1001, %v1003, %v999
    %v1005 = vmul.f32 %v980, %v1004
    %v1006 = vmin.f32 %v1005, 1.0
    %v1007 = vmax.f32 %v1006, -1.0
    %v1008 = vmul.f32 %v961, %v961
    %v1009 = vmin.f32 16.0, %v1008
    %v1010 = vmul.f32 %v1009, 2.1237322e-06
    %v1011 = vadd.f32 %v1010, 0.00028619796
    %v1012 = vmul.f32 %v1009, %v1011
    %v1013 = vadd.f32 %v1012, 0.0036580483
    %v1014 = vmul.f32 %v1009, %v1013
    %v1015 = vadd.f32 %v1014, 0.05243302
    %v1016 = vmul.f32 %v1009, %v1015
    %v1017 = vadd.f32 %v1016, 0.18741608
    %v1018 = vmul.f32 %v1009, %v1017
    %v1019 = vadd.f32 %v1018, 1.1283791
    %v1020 = vmul.f32 %v961, %v1019
    %v1021 = vmul.f32 %v1009, 3.8918573e-05
    %v1022 = vadd.f32 %v1021, 0.001143296
    %v1023 = vmul.f32 %v1009, %v1022
    %v1024 = vadd.f32 %v1023, 0.014752088
    %v1025 = vmul.f32 %v1009, %v1024
    %v1026 = vadd.f32 %v1025, 0.112945676
    %v1027 = vmul.f32 %v1009, %v1026
    %v1028 = vadd.f32 %v1027, 0.4994258
    %v1029 = vmul.f32 %v1009, %v1028
    %v1030 = vadd.f32 %v1029, 1.0
    %v1031 = vrcp.pop %v1030
    %v1032 = vmul.f32 %v1030, %v1031
    %v1033 = vsub.f32 1.0, %v1032
    %v1034 = vmul.f32 %v1031, %v1033
    %v1035 = vadd.f32 %v1031, %v1034
    %vm1036 = vweird.f32 %v1030
    %vm1037 = vweird.f32 %v1031
    %vm1038 = vmor %vm1036, %vm1037
    %v1039 = vsel %vm1038, %v1031, %v1035
    %v1040 = vand.u32 2147483647, %v1030
    %vm1041 = vcmp.eq.f32.partialorder %v1040, 8.507059e+37
    %v1042 = vand.u32 %v1030, 2147483648
    %v1043 = vor.u32 1.1754944e-38, %v1042
    %v1044 = vsel %vm1041, %v1043, %v1039
    %v1045 = vmul.f32 %v1020, %v1044
    %v1046 = vmin.f32 %v1045, 1.0
    %v1047 = vmax.f32 %v1046, -1.0
    %v1048 = vmul.f32 %v962, %v962
    %v1049 = vmin.f32 16.0, %v1048
    %v1050 = vmul.f32 %v1049, 2.1237322e-06
    %v1051 = vadd.f32 %v1050, 0.00028619796
    %v1052 = vmul.f32 %v1049, %v1051
    %v1053 = vadd.f32 %v1052, 0.0036580483
    %v1054 = vmul.f32 %v1049, %v1053
    %v1055 = vadd.f32 %v1054, 0.05243302
    %v1056 = vmul.f32 %v1049, %v1055
    %v1057 = vadd.f32 %v1056, 0.18741608
    %v1058 = vmul.f32 %v1049, %v1057
    %v1059 = vadd.f32 %v1058, 1.1283791
    %v1060 = vmul.f32 %v962, %v1059
    %v1061 = vmul.f32 %v1049, 3.8918573e-05
    %v1062 = vadd.f32 %v1061, 0.001143296
    %v1063 = vmul.f32 %v1049, %v1062
    %v1064 = vadd.f32 %v1063, 0.014752088
    %v1065 = vmul.f32 %v1049, %v1064
    %v1066 = vadd.f32 %v1065, 0.112945676
    %v1067 = vmul.f32 %v1049, %v1066
    %v1068 = vadd.f32 %v1067, 0.4994258
    %v1069 = vmul.f32 %v1049, %v1068
    %v1070 = vadd.f32 %v1069, 1.0
    %v1071 = vrcp.pop %v1070
    %v1072 = vmul.f32 %v1070, %v1071
    %v1073 = vsub.f32 1.0, %v1072
    %v1074 = vmul.f32 %v1071, %v1073
    %v1075 = vadd.f32 %v1071, %v1074
    %vm1076 = vweird.f32 %v1070
    %vm1077 = vweird.f32 %v1071
    %vm1078 = vmor %vm1076, %vm1077
    %v1079 = vsel %vm1078, %v1071, %v1075
    %v1080 = vand.u32 2147483647, %v1070
    %vm1081 = vcmp.eq.f32.partialorder %v1080, 8.507059e+37
    %v1082 = vand.u32 %v1070, 2147483648
    %v1083 = vor.u32 1.1754944e-38, %v1082
    %v1084 = vsel %vm1081, %v1083, %v1079
    %v1085 = vmul.f32 %v1060, %v1084
    %v1086 = vmin.f32 %v1085, 1.0
    %v1087 = vmax.f32 %v1086, -1.0
    %v1088 = vmul.f32 %v963, %v963
    %v1089 = vmin.f32 16.0, %v1088
    %v1090 = vmul.f32 %v1089, 2.1237322e-06
    %v1091 = vadd.f32 %v1090, 0.00028619796
    %v1092 = vmul.f32 %v1089, %v1091
    %v1093 = vadd.f32 %v1092, 0.0036580483
    %v1094 = vmul.f32 %v1089, %v1093
    %v1095 = vadd.f32 %v1094, 0.05243302
    %v1096 = vmul.f32 %v1089, %v1095
    %v1097 = vadd.f32 %v1096, 0.18741608
    %v1098 = vmul.f32 %v1089, %v1097
    %v1099 = vadd.f32 %v1098, 1.1283791
    %v1100 = vmul.f32 %v963, %v1099
    %v1101 = vmul.f32 %v1089, 3.8918573e-05
    %v1102 = vadd.f32 %v1101, 0.001143296
    %v1103 = vmul.f32 %v1089, %v1102
    %v1104 = vadd.f32 %v1103, 0.014752088
    %v1105 = vmul.f32 %v1089, %v1104
    %v1106 = vadd.f32 %v1105, 0.112945676
    %v1107 = vmul.f32 %v1089, %v1106
    %v1108 = vadd.f32 %v1107, 0.4994258
    %v1109 = vmul.f32 %v1089, %v1108
    %v1110 = vadd.f32 %v1109, 1.0
    %v1111 = vrcp.pop %v1110
    %v1112 = vmul.f32 %v1110, %v1111
    %v1113 = vsub.f32 1.0, %v1112
    %v1114 = vmul.f32 %v1111, %v1113
    %v1115 = vadd.f32 %v1111, %v1114
    %vm1116 = vweird.f32 %v1110
    %vm1117 = vweird.f32 %v1111
    %vm1118 = vmor %vm1116, %vm1117
    %v1119 = vsel %vm1118, %v1111, %v1115
    %v1120 = vand.u32 2147483647, %v1110
    %vm1121 = vcmp.eq.f32.partialorder %v1120, 8.507059e+37
    %v1122 = vand.u32 %v1110, 2147483648
    %v1123 = vor.u32 1.1754944e-38, %v1122
    %v1124 = vsel %vm1121, %v1123, %v1119
    %v1125 = vmul.f32 %v1100, %v1124
    %v1126 = vmin.f32 %v1125, 1.0
    %v1127 = vmax.f32 %v1126, -1.0
    %v1128 = vmul.f32 %v964, %v964
    %v1129 = vmin.f32 16.0, %v1128
    %v1130 = vmul.f32 %v1129, 2.1237322e-06
    %v1131 = vadd.f32 %v1130, 0.00028619796
    %v1132 = vmul.f32 %v1129, %v1131
    %v1133 = vadd.f32 %v1132, 0.0036580483
    %v1134 = vmul.f32 %v1129, %v1133
    %v1135 = vadd.f32 %v1134, 0.05243302
    %v1136 = vmul.f32 %v1129, %v1135
    %v1137 = vadd.f32 %v1136, 0.18741608
    %v1138 = vmul.f32 %v1129, %v1137
    %v1139 = vadd.f32 %v1138, 1.1283791
    %v1140 = vmul.f32 %v964, %v1139
    %v1141 = vmul.f32 %v1129, 3.8918573e-05
    %v1142 = vadd.f32 %v1141, 0.001143296
    %v1143 = vmul.f32 %v1129, %v1142
    %v1144 = vadd.f32 %v1143, 0.014752088
    %v1145 = vmul.f32 %v1129, %v1144
    %v1146 = vadd.f32 %v1145, 0.112945676
    %v1147 = vmul.f32 %v1129, %v1146
    %v1148 = vadd.f32 %v1147, 0.4994258
    %v1149 = vmul.f32 %v1129, %v1148
    %v1150 = vadd.f32 %v1149, 1.0
    %v1151 = vrcp.pop %v1150
    %v1152 = vmul.f32 %v1150, %v1151
    %v1153 = vsub.f32 1.0, %v1152
    %v1154 = vmul.f32 %v1151, %v1153
    %v1155 = vadd.f32 %v1151, %v1154
    %vm1156 = vweird.f32 %v1150
    %vm1157 = vweird.f32 %v1151
    %vm1158 = vmor %vm1156, %vm1157
    %v1159 = vsel %vm1158, %v1151, %v1155
    %v1160 = vand.u32 2147483647, %v1150
    %vm1161 = vcmp.eq.f32.partialorder %v1160, 8.507059e+37
    %v1162 = vand.u32 %v1150, 2147483648
    %v1163 = vor.u32 1.1754944e-38, %v1162
    %v1164 = vsel %vm1161, %v1163, %v1159
    %v1165 = vmul.f32 %v1140, %v1164
    %v1166 = vmin.f32 %v1165, 1.0
    %v1167 = vmax.f32 %v1166, -1.0
    %v1168 = vmul.f32 %v965, %v965
    %v1169 = vmin.f32 16.0, %v1168
    %v1170 = vmul.f32 %v1169, 2.1237322e-06
    %v1171 = vadd.f32 %v1170, 0.00028619796
    %v1172 = vmul.f32 %v1169, %v1171
    %v1173 = vadd.f32 %v1172, 0.0036580483
    %v1174 = vmul.f32 %v1169, %v1173
    %v1175 = vadd.f32 %v1174, 0.05243302
    %v1176 = vmul.f32 %v1169, %v1175
    %v1177 = vadd.f32 %v1176, 0.18741608
    %v1178 = vmul.f32 %v1169, %v1177
    %v1179 = vadd.f32 %v1178, 1.1283791
    %v1180 = vmul.f32 %v965, %v1179
    %v1181 = vmul.f32 %v1169, 3.8918573e-05
    %v1182 = vadd.f32 %v1181, 0.001143296
    %v1183 = vmul.f32 %v1169, %v1182
    %v1184 = vadd.f32 %v1183, 0.014752088
    %v1185 = vmul.f32 %v1169, %v1184
    %v1186 = vadd.f32 %v1185, 0.112945676
    %v1187 = vmul.f32 %v1169, %v1186
    %v1188 = vadd.f32 %v1187, 0.4994258
    %v1189 = vmul.f32 %v1169, %v1188
    %v1190 = vadd.f32 %v1189, 1.0
    %v1191 = vrcp.pop %v1190
    %v1192 = vmul.f32 %v1190, %v1191
    %v1193 = vsub.f32 1.0, %v1192
    %v1194 = vmul.f32 %v1191, %v1193
    %v1195 = vadd.f32 %v1191, %v1194
    %vm1196 = vweird.f32 %v1190
    %vm1197 = vweird.f32 %v1191
    %vm1198 = vmor %vm1196, %vm1197
    %v1199 = vsel %vm1198, %v1191, %v1195
    %v1200 = vand.u32 2147483647, %v1190
    %vm1201 = vcmp.eq.f32.partialorder %v1200, 8.507059e+37
    %v1202 = vand.u32 %v1190, 2147483648
    %v1203 = vor.u32 1.1754944e-38, %v1202
    %v1204 = vsel %vm1201, %v1203, %v1199
    %v1205 = vmul.f32 %v1180, %v1204
    %v1206 = vmin.f32 %v1205, 1.0
    %v1207 = vmax.f32 %v1206, -1.0
    %v1208 = vmul.f32 %v966, %v966
    %v1209 = vmin.f32 16.0, %v1208
    %v1210 = vmul.f32 %v1209, 2.1237322e-06
    %v1211 = vadd.f32 %v1210, 0.00028619796
    %v1212 = vmul.f32 %v1209, %v1211
    %v1213 = vadd.f32 %v1212, 0.0036580483
    %v1214 = vmul.f32 %v1209, %v1213
    %v1215 = vadd.f32 %v1214, 0.05243302
    %v1216 = vmul.f32 %v1209, %v1215
    %v1217 = vadd.f32 %v1216, 0.18741608
    %v1218 = vmul.f32 %v1209, %v1217
    %v1219 = vadd.f32 %v1218, 1.1283791
    %v1220 = vmul.f32 %v966, %v1219
    %v1221 = vmul.f32 %v1209, 3.8918573e-05
    %v1222 = vadd.f32 %v1221, 0.001143296
    %v1223 = vmul.f32 %v1209, %v1222
    %v1224 = vadd.f32 %v1223, 0.014752088
    %v1225 = vmul.f32 %v1209, %v1224
    %v1226 = vadd.f32 %v1225, 0.112945676
    %v1227 = vmul.f32 %v1209, %v1226
    %v1228 = vadd.f32 %v1227, 0.4994258
    %v1229 = vmul.f32 %v1209, %v1228
    %v1230 = vadd.f32 %v1229, 1.0
    %v1231 = vrcp.pop %v1230
    %v1232 = vmul.f32 %v1230, %v1231
    %v1233 = vsub.f32 1.0, %v1232
    %v1234 = vmul.f32 %v1231, %v1233
    %v1235 = vadd.f32 %v1231, %v1234
    %vm1236 = vweird.f32 %v1230
    %vm1237 = vweird.f32 %v1231
    %vm1238 = vmor %vm1236, %vm1237
    %v1239 = vsel %vm1238, %v1231, %v1235
    %v1240 = vand.u32 2147483647, %v1230
    %vm1241 = vcmp.eq.f32.partialorder %v1240, 8.507059e+37
    %v1242 = vand.u32 %v1230, 2147483648
    %v1243 = vor.u32 1.1754944e-38, %v1242
    %v1244 = vsel %vm1241, %v1243, %v1239
    %v1245 = vmul.f32 %v1220, %v1244
    %v1246 = vmin.f32 %v1245, 1.0
    %v1247 = vmax.f32 %v1246, -1.0
    %v1248 = vmul.f32 %v967, %v967
    %v1249 = vmin.f32 16.0, %v1248
    %v1250 = vmul.f32 %v1249, 2.1237322e-06
    %v1251 = vadd.f32 %v1250, 0.00028619796
    %v1252 = vmul.f32 %v1249, %v1251
    %v1253 = vadd.f32 %v1252, 0.0036580483
    %v1254 = vmul.f32 %v1249, %v1253
    %v1255 = vadd.f32 %v1254, 0.05243302
    %v1256 = vmul.f32 %v1249, %v1255
    %v1257 = vadd.f32 %v1256, 0.18741608
    %v1258 = vmul.f32 %v1249, %v1257
    %v1259 = vadd.f32 %v1258, 1.1283791
    %v1260 = vmul.f32 %v967, %v1259
    %v1261 = vmul.f32 %v1249, 3.8918573e-05
    %v1262 = vadd.f32 %v1261, 0.001143296
    %v1263 = vmul.f32 %v1249, %v1262
    %v1264 = vadd.f32 %v1263, 0.014752088
    %v1265 = vmul.f32 %v1249, %v1264
    %v1266 = vadd.f32 %v1265, 0.112945676
    %v1267 = vmul.f32 %v1249, %v1266
    %v1268 = vadd.f32 %v1267, 0.4994258
    %v1269 = vmul.f32 %v1249, %v1268
    %v1270 = vadd.f32 %v1269, 1.0
    %v1271 = vrcp.pop %v1270
    %v1272 = vmul.f32 %v1270, %v1271
    %v1273 = vsub.f32 1.0, %v1272
    %v1274 = vmul.f32 %v1271, %v1273
    %v1275 = vadd.f32 %v1271, %v1274
    %vm1276 = vweird.f32 %v1270
    %vm1277 = vweird.f32 %v1271
    %vm1278 = vmor %vm1276, %vm1277
    %v1279 = vsel %vm1278, %v1271, %v1275
    %v1280 = vand.u32 2147483647, %v1270
    %vm1281 = vcmp.eq.f32.partialorder %v1280, 8.507059e+37
    %v1282 = vand.u32 %v1270, 2147483648
    %v1283 = vor.u32 1.1754944e-38, %v1282
    %v1284 = vsel %vm1281, %v1283, %v1279
    %v1285 = vmul.f32 %v1260, %v1284
    %v1286 = vmin.f32 %v1285, 1.0
    %v1287 = vmax.f32 %v1286, -1.0
    %v1288 = vadd.f32 %v1007, 1.0
    %v1289 = vadd.f32 %v1047, 1.0
    %v1290 = vadd.f32 %v1087, 1.0
    %v1291 = vadd.f32 %v1127, 1.0
    %v1292 = vadd.f32 %v1167, 1.0
    %v1293 = vadd.f32 %v1207, 1.0
    %v1294 = vadd.f32 %v1247, 1.0
    %v1295 = vadd.f32 %v1287, 1.0
    %v1296 = vmul.f32 %v952, %v1288
    %v1297 = vmul.f32 %v953, %v1289
    %v1298 = vmul.f32 %v954, %v1290
    %v1299 = vmul.f32 %v955, %v1291
    %v1300 = vmul.f32 %v956, %v1292
    %v1301 = vmul.f32 %v957, %v1293
    %v1302 = vmul.f32 %v958, %v1294
    %v1303 = vmul.f32 %v959, %v1295
    %1304 = vset.pattern.permute.xlu0 12
    %1305 = vperm.xlu0 %1304, %v27
    %v1306 = vpop.permute.xlu0 %1305
    %1308 = vset.pattern.permute.xlu0 12
    %1309 = vperm.xlu0 %1308, %v28
    %v1310 = vpop.permute.xlu0 %1309
    %v1313 = vsel %vm711, %v753, 0
    %v1316 = vsel %vm711, %v754, 0
    %1318 = vmatpush.msra.mxu0 0.0
    %1319 = vmatpush.msra.mxu0 0.0
    %1320 = vmatpush.msra.mxu0 0.0
    %1321 = vmatpush.msra.mxu0 0.0
    %1322 = vmatpush.msra.mxu0 0.0
    %1323 = vmatpush.msra.mxu0 0.0
    %1324 = vmatpush.msra.mxu0 0.0
    %1325 = vmatpush.msra.mxu0 0.0
    %1326 = vmatpush.msra.mxu0 %v1303
    %1327 = vmatpush.msra.mxu0 %v1302
    %1328 = vmatpush.msra.mxu0 %v1301
    %1329 = vmatpush.msra.mxu0 %v1300
    %1330 = vmatpush.msra.mxu0 %v1299
    %1331 = vmatpush.msra.mxu0 %v1298
    %1332 = vmatpush.msra.mxu0 %v1297
    %1333 = vmatpush.msra.mxu0 %v1296
    %1334 = vmatmul.f32.gmra.mxu0 %v1313
    %v1335 = vpop.f32.mrf.mxu0
    %v1336 = vadd.f32 %v1306, %v1335
    %1337 = vmatmul.f32.gmra.mxu0 %v1316
    %v1338 = vpop.f32.mrf.mxu0
    %v1339 = vadd.f32 %v1310, %v1338
    %1340 = vdwg.mxu0
    %v1341 = vadd.f32 %v1336, %v812
    %v1342 = vadd.f32 %v1339, %v813
    %s1343 = scalar_lea.vmem %s2, 128
    %v1344 = vld [vmem:[%s1343] sm:$0xff]
    %v1345 = vld [vmem:[%s1343 + $0x8] sm:$0xff]
    %v1346 = vld [vmem:[%s1343 + $0x10] sm:$0xff]
    %v1347 = vld [vmem:[%s1343 + $0x18] sm:$0xff]
    %v1348 = vld [vmem:[%s1343 + $0x20] sm:$0xff]
    %v1349 = vld [vmem:[%s1343 + $0x28] sm:$0xff]
    %v1350 = vld [vmem:[%s1343 + $0x30] sm:$0xff]
    %v1351 = vld [vmem:[%s1343 + $0x38] sm:$0xff]
    %s1352 = scalar_lea.vmem %s3, 32
    %v1353 = vld [vmem:[%s1352] sm:$0xff]
    %v1354 = vld [vmem:[%s1352 + $0x8] sm:$0xff]
    %v1355 = vsel %vm137, %v1341, 0.0
    %v1356 = vsel %vm137, %v1342, 0.0
    %v1357 = vadd.f32 %v1355, %v1356
    %v1358 = vrot.slane %v1357, 4
    %v1359 = vadd.f32 %v1357, %v1358
    %v1360 = vrot.slane %v1359, 2
    %v1361 = vadd.f32 %v1359, %v1360
    %v1362 = vrot.slane %v1361, 1
    %v1363 = vadd.f32 %v1361, %v1362
    %v1364 = vmul.f32 %v1363, %v153
    %v1365 = vsub.f32 %v1341, %v1364
    %v1366 = vsub.f32 %v1342, %v1364
    %v1367 = vmul.f32 %v1365, %v1365
    %v1368 = vmul.f32 %v1366, %v1366
    %v1369 = vsel %vm137, %v1367, 0.0
    %v1370 = vsel %vm137, %v1368, 0.0
    %v1371 = vadd.f32 %v1369, %v1370
    %v1372 = vrot.slane %v1371, 4
    %v1373 = vadd.f32 %v1371, %v1372
    %v1374 = vrot.slane %v1373, 2
    %v1375 = vadd.f32 %v1373, %v1374
    %v1376 = vrot.slane %v1375, 1
    %v1377 = vadd.f32 %v1375, %v1376
    %v1378 = vmul.f32 %v1377, %v153
    %v1379 = vadd.f32 %v1378, 1e-05
    %v1380 = vrsqrt.pop %v1379
    %v1381 = vmul.f32 %v1380, %v1379
    %v1382 = vmul.f32 %v1381, %v1380
    %v1383 = vmul.f32 0.5, %v1382
    %v1384 = vsub.f32 1.5, %v1383
    %v1385 = vmul.f32 %v1380, %v1384
    %vm1386 = vweird.f32 %v1379
    %vm1387 = vweird.f32 %v1380
    %vm1388 = vmor %vm1386, %vm1387
    %v1389 = vsel %vm1388, %v1380, %v1385
    %v1390 = vmul.f32 %v1365, %v1389
    %v1391 = vmul.f32 %v1366, %v1389
    %1392 = vset.pattern.permute.xlu0 3
    %1393 = vperm.xlu0 %1392, %v27
    %v1394 = vpop.permute.xlu0 %1393
    %1396 = vset.pattern.permute.xlu0 3
    %1397 = vperm.xlu0 %1396, %v28
    %v1398 = vpop.permute.xlu0 %1397
    %v1400 = vmul.f32 %v1390, %v1394
    %v1401 = vmul.f32 %v1391, %v1398
    %1402 = vset.pattern.permute.xlu0 8
    %1403 = vperm.xlu0 %1402, %v27
    %v1404 = vpop.permute.xlu0 %1403
    %1406 = vset.pattern.permute.xlu0 8
    %1407 = vperm.xlu0 %1406, %v28
    %v1408 = vpop.permute.xlu0 %1407
    %v1410 = vadd.f32 %v1400, %v1404
    %v1411 = vadd.f32 %v1401, %v1408
    %v1412 = vadd.f32 %v1410, %v1341
    %v1413 = vadd.f32 %v1411, %v1342
    %v1414 = vsel %vm137, %v1412, 0.0
    %v1415 = vsel %vm137, %v1413, 0.0
    %v1416 = vadd.f32 %v1414, %v1415
    %v1417 = vrot.slane %v1416, 4
    %v1418 = vadd.f32 %v1416, %v1417
    %v1419 = vrot.slane %v1418, 2
    %v1420 = vadd.f32 %v1418, %v1419
    %v1421 = vrot.slane %v1420, 1
    %v1422 = vadd.f32 %v1420, %v1421
    %v1423 = vmul.f32 %v1422, %v153
    %v1424 = vsub.f32 %v1412, %v1423
    %v1425 = vsub.f32 %v1413, %v1423
    %v1426 = vmul.f32 %v1424, %v1424
    %v1427 = vmul.f32 %v1425, %v1425
    %v1428 = vsel %vm137, %v1426, 0.0
    %v1429 = vsel %vm137, %v1427, 0.0
    %v1430 = vadd.f32 %v1428, %v1429
    %v1431 = vrot.slane %v1430, 4
    %v1432 = vadd.f32 %v1430, %v1431
    %v1433 = vrot.slane %v1432, 2
    %v1434 = vadd.f32 %v1432, %v1433
    %v1435 = vrot.slane %v1434, 1
    %v1436 = vadd.f32 %v1434, %v1435
    %v1437 = vmul.f32 %v1436, %v153
    %v1438 = vadd.f32 %v1437, 1e-05
    %v1439 = vrsqrt.pop %v1438
    %v1440 = vmul.f32 %v1439, %v1438
    %v1441 = vmul.f32 %v1440, %v1439
    %v1442 = vmul.f32 0.5, %v1441
    %v1443 = vsub.f32 1.5, %v1442
    %v1444 = vmul.f32 %v1439, %v1443
    %vm1445 = vweird.f32 %v1438
    %vm1446 = vweird.f32 %v1439
    %vm1447 = vmor %vm1445, %vm1446
    %v1448 = vsel %vm1447, %v1439, %v1444
    %v1449 = vmul.f32 %v1424, %v1448
    %v1450 = vmul.f32 %v1425, %v1448
    %v1451 = vmul.f32 %v1449, %v1394
    %v1452 = vmul.f32 %v1450, %v1398
    %v1453 = vadd.f32 %v1451, %v1404
    %v1454 = vadd.f32 %v1452, %v1408
    %1455 = vset.pattern.permute.xlu0 18
    %1456 = vperm.xlu0 %1455, %v119
    %v1457 = vpop.permute.xlu0 %1456
    %1459 = vset.pattern.permute.xlu0 18
    %1460 = vperm.xlu0 %1459, %v120
    %v1461 = vpop.permute.xlu0 %1460
    %1463 = vset.pattern.permute.xlu0 18
    %1464 = vperm.xlu0 %1463, %v121
    %v1465 = vpop.permute.xlu0 %1464
    %1467 = vset.pattern.permute.xlu0 18
    %1468 = vperm.xlu0 %1467, %v122
    %v1469 = vpop.permute.xlu0 %1468
    %1471 = vset.pattern.permute.xlu0 18
    %1472 = vperm.xlu0 %1471, %v123
    %v1473 = vpop.permute.xlu0 %1472
    %1475 = vset.pattern.permute.xlu0 18
    %1476 = vperm.xlu0 %1475, %v124
    %v1477 = vpop.permute.xlu0 %1476
    %1479 = vset.pattern.permute.xlu0 18
    %1480 = vperm.xlu0 %1479, %v125
    %v1481 = vpop.permute.xlu0 %1480
    %1483 = vset.pattern.permute.xlu0 18
    %1484 = vperm.xlu0 %1483, %v126
    %v1485 = vpop.permute.xlu0 %1484
    %v1488 = vsel %vm285, %v1344, 0
    %v1491 = vsel %vm285, %v1345, 0
    %v1494 = vsel %vm285, %v1346, 0
    %v1497 = vsel %vm285, %v1347, 0
    %v1500 = vsel %vm285, %v1348, 0
    %v1503 = vsel %vm285, %v1349, 0
    %v1506 = vsel %vm285, %v1350, 0
    %v1509 = vsel %vm285, %v1351, 0
    %1511 = vmatpush.msra.mxu0 0.0
    %1512 = vmatpush.msra.mxu0 0.0
    %1513 = vmatpush.msra.mxu0 0.0
    %1514 = vmatpush.msra.mxu0 0.0
    %1515 = vmatpush.msra.mxu0 0.0
    %1516 = vmatpush.msra.mxu0 0.0
    %1517 = vmatpush.msra.mxu0 0.0
    %1518 = vmatpush.msra.mxu0 0.0
    %1519 = vmatpush.msra.mxu0 0.0
    %1520 = vmatpush.msra.mxu0 0.0
    %1521 = vmatpush.msra.mxu0 0.0
    %1522 = vmatpush.msra.mxu0 0.0
    %1523 = vmatpush.msra.mxu0 0.0
    %1524 = vmatpush.msra.mxu0 0.0
    %1525 = vmatpush.msra.mxu0 %v1454
    %1526 = vmatpush.msra.mxu0 %v1453
    %1527 = vmatmul.f32.gmra.mxu0 %v1488
    %v1528 = vpop.f32.mrf.mxu0
    %v1529 = vadd.f32 %v1457, %v1528
    %1530 = vmatmul.f32.gmra.mxu0 %v1491
    %v1531 = vpop.f32.mrf.mxu0
    %v1532 = vadd.f32 %v1461, %v1531
    %1533 = vmatmul.f32.gmra.mxu0 %v1494
    %v1534 = vpop.f32.mrf.mxu0
    %v1535 = vadd.f32 %v1465, %v1534
    %1536 = vmatmul.f32.gmra.mxu0 %v1497
    %v1537 = vpop.f32.mrf.mxu0
    %v1538 = vadd.f32 %v1469, %v1537
    %1539 = vmatmul.f32.gmra.mxu0 %v1500
    %v1540 = vpop.f32.mrf.mxu0
    %v1541 = vadd.f32 %v1473, %v1540
    %1542 = vmatmul.f32.gmra.mxu0 %v1503
    %v1543 = vpop.f32.mrf.mxu0
    %v1544 = vadd.f32 %v1477, %v1543
    %1545 = vmatmul.f32.gmra.mxu0 %v1506
    %v1546 = vpop.f32.mrf.mxu0
    %v1547 = vadd.f32 %v1481, %v1546
    %1548 = vmatmul.f32.gmra.mxu0 %v1509
    %v1549 = vpop.f32.mrf.mxu0
    %v1550 = vadd.f32 %v1485, %v1549
    %1551 = vdwg.mxu0
    %v1552 = vmul.f32 %v1529, 0.5
    %v1553 = vmul.f32 %v1532, 0.5
    %v1554 = vmul.f32 %v1535, 0.5
    %v1555 = vmul.f32 %v1538, 0.5
    %v1556 = vmul.f32 %v1541, 0.5
    %v1557 = vmul.f32 %v1544, 0.5
    %v1558 = vmul.f32 %v1547, 0.5
    %v1559 = vmul.f32 %v1550, 0.5
    %v1560 = vmul.f32 %v1529, 0.70710677
    %v1561 = vmul.f32 %v1532, 0.70710677
    %v1562 = vmul.f32 %v1535, 0.70710677
    %v1563 = vmul.f32 %v1538, 0.70710677
    %v1564 = vmul.f32 %v1541, 0.70710677
    %v1565 = vmul.f32 %v1544, 0.70710677
    %v1566 = vmul.f32 %v1547, 0.70710677
    %v1567 = vmul.f32 %v1550, 0.70710677
    %v1568 = vmul.f32 %v1560, %v1560
    %v1569 = vmin.f32 16.0, %v1568
    %v1570 = vmul.f32 %v1569, 2.1237322e-06
    %v1571 = vadd.f32 %v1570, 0.00028619796
    %v1572 = vmul.f32 %v1569, %v1571
    %v1573 = vadd.f32 %v1572, 0.0036580483
    %v1574 = vmul.f32 %v1569, %v1573
    %v1575 = vadd.f32 %v1574, 0.05243302
    %v1576 = vmul.f32 %v1569, %v1575
    %v1577 = vadd.f32 %v1576, 0.18741608
    %v1578 = vmul.f32 %v1569, %v1577
    %v1579 = vadd.f32 %v1578, 1.1283791
    %v1580 = vmul.f32 %v1560, %v1579
    %v1581 = vmul.f32 %v1569, 3.8918573e-05
    %v1582 = vadd.f32 %v1581, 0.001143296
    %v1583 = vmul.f32 %v1569, %v1582
    %v1584 = vadd.f32 %v1583, 0.014752088
    %v1585 = vmul.f32 %v1569, %v1584
    %v1586 = vadd.f32 %v1585, 0.112945676
    %v1587 = vmul.f32 %v1569, %v1586
    %v1588 = vadd.f32 %v1587, 0.4994258
    %v1589 = vmul.f32 %v1569, %v1588
    %v1590 = vadd.f32 %v1589, 1.0
    %v1591 = vrcp.pop %v1590
    %v1592 = vmul.f32 %v1590, %v1591
    %v1593 = vsub.f32 1.0, %v1592
    %v1594 = vmul.f32 %v1591, %v1593
    %v1595 = vadd.f32 %v1591, %v1594
    %vm1596 = vweird.f32 %v1590
    %vm1597 = vweird.f32 %v1591
    %vm1598 = vmor %vm1596, %vm1597
    %v1599 = vsel %vm1598, %v1591, %v1595
    %v1600 = vand.u32 2147483647, %v1590
    %vm1601 = vcmp.eq.f32.partialorder %v1600, 8.507059e+37
    %v1602 = vand.u32 %v1590, 2147483648
    %v1603 = vor.u32 1.1754944e-38, %v1602
    %v1604 = vsel %vm1601, %v1603, %v1599
    %v1605 = vmul.f32 %v1580, %v1604
    %v1606 = vmin.f32 %v1605, 1.0
    %v1607 = vmax.f32 %v1606, -1.0
    %v1608 = vmul.f32 %v1561, %v1561
    %v1609 = vmin.f32 16.0, %v1608
    %v1610 = vmul.f32 %v1609, 2.1237322e-06
    %v1611 = vadd.f32 %v1610, 0.00028619796
    %v1612 = vmul.f32 %v1609, %v1611
    %v1613 = vadd.f32 %v1612, 0.0036580483
    %v1614 = vmul.f32 %v1609, %v1613
    %v1615 = vadd.f32 %v1614, 0.05243302
    %v1616 = vmul.f32 %v1609, %v1615
    %v1617 = vadd.f32 %v1616, 0.18741608
    %v1618 = vmul.f32 %v1609, %v1617
    %v1619 = vadd.f32 %v1618, 1.1283791
    %v1620 = vmul.f32 %v1561, %v1619
    %v1621 = vmul.f32 %v1609, 3.8918573e-05
    %v1622 = vadd.f32 %v1621, 0.001143296
    %v1623 = vmul.f32 %v1609, %v1622
    %v1624 = vadd.f32 %v1623, 0.014752088
    %v1625 = vmul.f32 %v1609, %v1624
    %v1626 = vadd.f32 %v1625, 0.112945676
    %v1627 = vmul.f32 %v1609, %v1626
    %v1628 = vadd.f32 %v1627, 0.4994258
    %v1629 = vmul.f32 %v1609, %v1628
    %v1630 = vadd.f32 %v1629, 1.0
    %v1631 = vrcp.pop %v1630
    %v1632 = vmul.f32 %v1630, %v1631
    %v1633 = vsub.f32 1.0, %v1632
    %v1634 = vmul.f32 %v1631, %v1633
    %v1635 = vadd.f32 %v1631, %v1634
    %vm1636 = vweird.f32 %v1630
    %vm1637 = vweird.f32 %v1631
    %vm1638 = vmor %vm1636, %vm1637
    %v1639 = vsel %vm1638, %v1631, %v1635
    %v1640 = vand.u32 2147483647, %v1630
    %vm1641 = vcmp.eq.f32.partialorder %v1640, 8.507059e+37
    %v1642 = vand.u32 %v1630, 2147483648
    %v1643 = vor.u32 1.1754944e-38, %v1642
    %v1644 = vsel %vm1641, %v1643, %v1639
    %v1645 = vmul.f32 %v1620, %v1644
    %v1646 = vmin.f32 %v1645, 1.0
    %v1647 = vmax.f32 %v1646, -1.0
    %v1648 = vmul.f32 %v1562, %v1562
    %v1649 = vmin.f32 16.0, %v1648
    %v1650 = vmul.f32 %v1649, 2.1237322e-06
    %v1651 = vadd.f32 %v1650, 0.00028619796
    %v1652 = vmul.f32 %v1649, %v1651
    %v1653 = vadd.f32 %v1652, 0.0036580483
    %v1654 = vmul.f32 %v1649, %v1653
    %v1655 = vadd.f32 %v1654, 0.05243302
    %v1656 = vmul.f32 %v1649, %v1655
    %v1657 = vadd.f32 %v1656, 0.18741608
    %v1658 = vmul.f32 %v1649, %v1657
    %v1659 = vadd.f32 %v1658, 1.1283791
    %v1660 = vmul.f32 %v1562, %v1659
    %v1661 = vmul.f32 %v1649, 3.8918573e-05
    %v1662 = vadd.f32 %v1661, 0.001143296
    %v1663 = vmul.f32 %v1649, %v1662
    %v1664 = vadd.f32 %v1663, 0.014752088
    %v1665 = vmul.f32 %v1649, %v1664
    %v1666 = vadd.f32 %v1665, 0.112945676
    %v1667 = vmul.f32 %v1649, %v1666
    %v1668 = vadd.f32 %v1667, 0.4994258
    %v1669 = vmul.f32 %v1649, %v1668
    %v1670 = vadd.f32 %v1669, 1.0
    %v1671 = vrcp.pop %v1670
    %v1672 = vmul.f32 %v1670, %v1671
    %v1673 = vsub.f32 1.0, %v1672
    %v1674 = vmul.f32 %v1671, %v1673
    %v1675 = vadd.f32 %v1671, %v1674
    %vm1676 = vweird.f32 %v1670
    %vm1677 = vweird.f32 %v1671
    %vm1678 = vmor %vm1676, %vm1677
    %v1679 = vsel %vm1678, %v1671, %v1675
    %v1680 = vand.u32 2147483647, %v1670
    %vm1681 = vcmp.eq.f32.partialorder %v1680, 8.507059e+37
    %v1682 = vand.u32 %v1670, 2147483648
    %v1683 = vor.u32 1.1754944e-38, %v1682
    %v1684 = vsel %vm1681, %v1683, %v1679
    %v1685 = vmul.f32 %v1660, %v1684
    %v1686 = vmin.f32 %v1685, 1.0
    %v1687 = vmax.f32 %v1686, -1.0
    %v1688 = vmul.f32 %v1563, %v1563
    %v1689 = vmin.f32 16.0, %v1688
    %v1690 = vmul.f32 %v1689, 2.1237322e-06
    %v1691 = vadd.f32 %v1690, 0.00028619796
    %v1692 = vmul.f32 %v1689, %v1691
    %v1693 = vadd.f32 %v1692, 0.0036580483
    %v1694 = vmul.f32 %v1689, %v1693
    %v1695 = vadd.f32 %v1694, 0.05243302
    %v1696 = vmul.f32 %v1689, %v1695
    %v1697 = vadd.f32 %v1696, 0.18741608
    %v1698 = vmul.f32 %v1689, %v1697
    %v1699 = vadd.f32 %v1698, 1.1283791
    %v1700 = vmul.f32 %v1563, %v1699
    %v1701 = vmul.f32 %v1689, 3.8918573e-05
    %v1702 = vadd.f32 %v1701, 0.001143296
    %v1703 = vmul.f32 %v1689, %v1702
    %v1704 = vadd.f32 %v1703, 0.014752088
    %v1705 = vmul.f32 %v1689, %v1704
    %v1706 = vadd.f32 %v1705, 0.112945676
    %v1707 = vmul.f32 %v1689, %v1706
    %v1708 = vadd.f32 %v1707, 0.4994258
    %v1709 = vmul.f32 %v1689, %v1708
    %v1710 = vadd.f32 %v1709, 1.0
    %v1711 = vrcp.pop %v1710
    %v1712 = vmul.f32 %v1710, %v1711
    %v1713 = vsub.f32 1.0, %v1712
    %v1714 = vmul.f32 %v1711, %v1713
    %v1715 = vadd.f32 %v1711, %v1714
    %vm1716 = vweird.f32 %v1710
    %vm1717 = vweird.f32 %v1711
    %vm1718 = vmor %vm1716, %vm1717
    %v1719 = vsel %vm1718, %v1711, %v1715
    %v1720 = vand.u32 2147483647, %v1710
    %vm1721 = vcmp.eq.f32.partialorder %v1720, 8.507059e+37
    %v1722 = vand.u32 %v1710, 2147483648
    %v1723 = vor.u32 1.1754944e-38, %v1722
    %v1724 = vsel %vm1721, %v1723, %v1719
    %v1725 = vmul.f32 %v1700, %v1724
    %v1726 = vmin.f32 %v1725, 1.0
    %v1727 = vmax.f32 %v1726, -1.0
    %v1728 = vmul.f32 %v1564, %v1564
    %v1729 = vmin.f32 16.0, %v1728
    %v1730 = vmul.f32 %v1729, 2.1237322e-06
    %v1731 = vadd.f32 %v1730, 0.00028619796
    %v1732 = vmul.f32 %v1729, %v1731
    %v1733 = vadd.f32 %v1732, 0.0036580483
    %v1734 = vmul.f32 %v1729, %v1733
    %v1735 = vadd.f32 %v1734, 0.05243302
    %v1736 = vmul.f32 %v1729, %v1735
    %v1737 = vadd.f32 %v1736, 0.18741608
    %v1738 = vmul.f32 %v1729, %v1737
    %v1739 = vadd.f32 %v1738, 1.1283791
    %v1740 = vmul.f32 %v1564, %v1739
    %v1741 = vmul.f32 %v1729, 3.8918573e-05
    %v1742 = vadd.f32 %v1741, 0.001143296
    %v1743 = vmul.f32 %v1729, %v1742
    %v1744 = vadd.f32 %v1743, 0.014752088
    %v1745 = vmul.f32 %v1729, %v1744
    %v1746 = vadd.f32 %v1745, 0.112945676
    %v1747 = vmul.f32 %v1729, %v1746
    %v1748 = vadd.f32 %v1747, 0.4994258
    %v1749 = vmul.f32 %v1729, %v1748
    %v1750 = vadd.f32 %v1749, 1.0
    %v1751 = vrcp.pop %v1750
    %v1752 = vmul.f32 %v1750, %v1751
    %v1753 = vsub.f32 1.0, %v1752
    %v1754 = vmul.f32 %v1751, %v1753
    %v1755 = vadd.f32 %v1751, %v1754
    %vm1756 = vweird.f32 %v1750
    %vm1757 = vweird.f32 %v1751
    %vm1758 = vmor %vm1756, %vm1757
    %v1759 = vsel %vm1758, %v1751, %v1755
    %v1760 = vand.u32 2147483647, %v1750
    %vm1761 = vcmp.eq.f32.partialorder %v1760, 8.507059e+37
    %v1762 = vand.u32 %v1750, 2147483648
    %v1763 = vor.u32 1.1754944e-38, %v1762
    %v1764 = vsel %vm1761, %v1763, %v1759
    %v1765 = vmul.f32 %v1740, %v1764
    %v1766 = vmin.f32 %v1765, 1.0
    %v1767 = vmax.f32 %v1766, -1.0
    %v1768 = vmul.f32 %v1565, %v1565
    %v1769 = vmin.f32 16.0, %v1768
    %v1770 = vmul.f32 %v1769, 2.1237322e-06
    %v1771 = vadd.f32 %v1770, 0.00028619796
    %v1772 = vmul.f32 %v1769, %v1771
    %v1773 = vadd.f32 %v1772, 0.0036580483
    %v1774 = vmul.f32 %v1769, %v1773
    %v1775 = vadd.f32 %v1774, 0.05243302
    %v1776 = vmul.f32 %v1769, %v1775
    %v1777 = vadd.f32 %v1776, 0.18741608
    %v1778 = vmul.f32 %v1769, %v1777
    %v1779 = vadd.f32 %v1778, 1.1283791
    %v1780 = vmul.f32 %v1565, %v1779
    %v1781 = vmul.f32 %v1769, 3.8918573e-05
    %v1782 = vadd.f32 %v1781, 0.001143296
    %v1783 = vmul.f32 %v1769, %v1782
    %v1784 = vadd.f32 %v1783, 0.014752088
    %v1785 = vmul.f32 %v1769, %v1784
    %v1786 = vadd.f32 %v1785, 0.112945676
    %v1787 = vmul.f32 %v1769, %v1786
    %v1788 = vadd.f32 %v1787, 0.4994258
    %v1789 = vmul.f32 %v1769, %v1788
    %v1790 = vadd.f32 %v1789, 1.0
    %v1791 = vrcp.pop %v1790
    %v1792 = vmul.f32 %v1790, %v1791
    %v1793 = vsub.f32 1.0, %v1792
    %v1794 = vmul.f32 %v1791, %v1793
    %v1795 = vadd.f32 %v1791, %v1794
    %vm1796 = vweird.f32 %v1790
    %vm1797 = vweird.f32 %v1791
    %vm1798 = vmor %vm1796, %vm1797
    %v1799 = vsel %vm1798, %v1791, %v1795
    %v1800 = vand.u32 2147483647, %v1790
    %vm1801 = vcmp.eq.f32.partialorder %v1800, 8.507059e+37
    %v1802 = vand.u32 %v1790, 2147483648
    %v1803 = vor.u32 1.1754944e-38, %v1802
    %v1804 = vsel %vm1801, %v1803, %v1799
    %v1805 = vmul.f32 %v1780, %v1804
    %v1806 = vmin.f32 %v1805, 1.0
    %v1807 = vmax.f32 %v1806, -1.0
    %v1808 = vmul.f32 %v1566, %v1566
    %v1809 = vmin.f32 16.0, %v1808
    %v1810 = vmul.f32 %v1809, 2.1237322e-06
    %v1811 = vadd.f32 %v1810, 0.00028619796
    %v1812 = vmul.f32 %v1809, %v1811
    %v1813 = vadd.f32 %v1812, 0.0036580483
    %v1814 = vmul.f32 %v1809, %v1813
    %v1815 = vadd.f32 %v1814, 0.05243302
    %v1816 = vmul.f32 %v1809, %v1815
    %v1817 = vadd.f32 %v1816, 0.18741608
    %v1818 = vmul.f32 %v1809, %v1817
    %v1819 = vadd.f32 %v1818, 1.1283791
    %v1820 = vmul.f32 %v1566, %v1819
    %v1821 = vmul.f32 %v1809, 3.8918573e-05
    %v1822 = vadd.f32 %v1821, 0.001143296
    %v1823 = vmul.f32 %v1809, %v1822
    %v1824 = vadd.f32 %v1823, 0.014752088
    %v1825 = vmul.f32 %v1809, %v1824
    %v1826 = vadd.f32 %v1825, 0.112945676
    %v1827 = vmul.f32 %v1809, %v1826
    %v1828 = vadd.f32 %v1827, 0.4994258
    %v1829 = vmul.f32 %v1809, %v1828
    %v1830 = vadd.f32 %v1829, 1.0
    %v1831 = vrcp.pop %v1830
    %v1832 = vmul.f32 %v1830, %v1831
    %v1833 = vsub.f32 1.0, %v1832
    %v1834 = vmul.f32 %v1831, %v1833
    %v1835 = vadd.f32 %v1831, %v1834
    %vm1836 = vweird.f32 %v1830
    %vm1837 = vweird.f32 %v1831
    %vm1838 = vmor %vm1836, %vm1837
    %v1839 = vsel %vm1838, %v1831, %v1835
    %v1840 = vand.u32 2147483647, %v1830
    %vm1841 = vcmp.eq.f32.partialorder %v1840, 8.507059e+37
    %v1842 = vand.u32 %v1830, 2147483648
    %v1843 = vor.u32 1.1754944e-38, %v1842
    %v1844 = vsel %vm1841, %v1843, %v1839
    %v1845 = vmul.f32 %v1820, %v1844
    %v1846 = vmin.f32 %v1845, 1.0
    %v1847 = vmax.f32 %v1846, -1.0
    %v1848 = vmul.f32 %v1567, %v1567
    %v1849 = vmin.f32 16.0, %v1848
    %v1850 = vmul.f32 %v1849, 2.1237322e-06
    %v1851 = vadd.f32 %v1850, 0.00028619796
    %v1852 = vmul.f32 %v1849, %v1851
    %v1853 = vadd.f32 %v1852, 0.0036580483
    %v1854 = vmul.f32 %v1849, %v1853
    %v1855 = vadd.f32 %v1854, 0.05243302
    %v1856 = vmul.f32 %v1849, %v1855
    %v1857 = vadd.f32 %v1856, 0.18741608
    %v1858 = vmul.f32 %v1849, %v1857
    %v1859 = vadd.f32 %v1858, 1.1283791
    %v1860 = vmul.f32 %v1567, %v1859
    %v1861 = vmul.f32 %v1849, 3.8918573e-05
    %v1862 = vadd.f32 %v1861, 0.001143296
    %v1863 = vmul.f32 %v1849, %v1862
    %v1864 = vadd.f32 %v1863, 0.014752088
    %v1865 = vmul.f32 %v1849, %v1864
    %v1866 = vadd.f32 %v1865, 0.112945676
    %v1867 = vmul.f32 %v1849, %v1866
    %v1868 = vadd.f32 %v1867, 0.4994258
    %v1869 = vmul.f32 %v1849, %v1868
    %v1870 = vadd.f32 %v1869, 1.0
    %v1871 = vrcp.pop %v1870
    %v1872 = vmul.f32 %v1870, %v1871
    %v1873 = vsub.f32 1.0, %v1872
    %v1874 = vmul.f32 %v1871, %v1873
    %v1875 = vadd.f32 %v1871, %v1874
    %vm1876 = vweird.f32 %v1870
    %vm1877 = vweird.f32 %v1871
    %vm1878 = vmor %vm1876, %vm1877
    %v1879 = vsel %vm1878, %v1871, %v1875
    %v1880 = vand.u32 2147483647, %v1870
    %vm1881 = vcmp.eq.f32.partialorder %v1880, 8.507059e+37
    %v1882 = vand.u32 %v1870, 2147483648
    %v1883 = vor.u32 1.1754944e-38, %v1882
    %v1884 = vsel %vm1881, %v1883, %v1879
    %v1885 = vmul.f32 %v1860, %v1884
    %v1886 = vmin.f32 %v1885, 1.0
    %v1887 = vmax.f32 %v1886, -1.0
    %v1888 = vadd.f32 %v1607, 1.0
    %v1889 = vadd.f32 %v1647, 1.0
    %v1890 = vadd.f32 %v1687, 1.0
    %v1891 = vadd.f32 %v1727, 1.0
    %v1892 = vadd.f32 %v1767, 1.0
    %v1893 = vadd.f32 %v1807, 1.0
    %v1894 = vadd.f32 %v1847, 1.0
    %v1895 = vadd.f32 %v1887, 1.0
    %v1896 = vmul.f32 %v1552, %v1888
    %v1897 = vmul.f32 %v1553, %v1889
    %v1898 = vmul.f32 %v1554, %v1890
    %v1899 = vmul.f32 %v1555, %v1891
    %v1900 = vmul.f32 %v1556, %v1892
    %v1901 = vmul.f32 %v1557, %v1893
    %v1902 = vmul.f32 %v1558, %v1894
    %v1903 = vmul.f32 %v1559, %v1895
    %1904 = vset.pattern.permute.xlu0 13
    %1905 = vperm.xlu0 %1904, %v27
    %v1906 = vpop.permute.xlu0 %1905
    %1908 = vset.pattern.permute.xlu0 13
    %1909 = vperm.xlu0 %1908, %v28
    %v1910 = vpop.permute.xlu0 %1909
    %v1913 = vsel %vm711, %v1353, 0
    %v1916 = vsel %vm711, %v1354, 0
    %1918 = vmatpush.msra.mxu0 0.0
    %1919 = vmatpush.msra.mxu0 0.0
    %1920 = vmatpush.msra.mxu0 0.0
    %1921 = vmatpush.msra.mxu0 0.0
    %1922 = vmatpush.msra.mxu0 0.0
    %1923 = vmatpush.msra.mxu0 0.0
    %1924 = vmatpush.msra.mxu0 0.0
    %1925 = vmatpush.msra.mxu0 0.0
    %1926 = vmatpush.msra.mxu0 %v1903
    %1927 = vmatpush.msra.mxu0 %v1902
    %1928 = vmatpush.msra.mxu0 %v1901
    %1929 = vmatpush.msra.mxu0 %v1900
    %1930 = vmatpush.msra.mxu0 %v1899
    %1931 = vmatpush.msra.mxu0 %v1898
    %1932 = vmatpush.msra.mxu0 %v1897
    %1933 = vmatpush.msra.mxu0 %v1896
    %1934 = vmatmul.f32.gmra.mxu0 %v1913
    %v1935 = vpop.f32.mrf.mxu0
    %v1936 = vadd.f32 %v1906, %v1935
    %1937 = vmatmul.f32.gmra.mxu0 %v1916
    %v1938 = vpop.f32.mrf.mxu0
    %v1939 = vadd.f32 %v1910, %v1938
    %1940 = vdwg.mxu0
    %v1941 = vadd.f32 %v1936, %v1412
    %v1942 = vadd.f32 %v1939, %v1413
    %s1943 = scalar_lea.vmem %s2, 192
    %v1944 = vld [vmem:[%s1943] sm:$0xff]
    %v1945 = vld [vmem:[%s1943 + $0x8] sm:$0xff]
    %v1946 = vld [vmem:[%s1943 + $0x10] sm:$0xff]
    %v1947 = vld [vmem:[%s1943 + $0x18] sm:$0xff]
    %v1948 = vld [vmem:[%s1943 + $0x20] sm:$0xff]
    %v1949 = vld [vmem:[%s1943 + $0x28] sm:$0xff]
    %v1950 = vld [vmem:[%s1943 + $0x30] sm:$0xff]
    %v1951 = vld [vmem:[%s1943 + $0x38] sm:$0xff]
    %s1952 = scalar_lea.vmem %s3, 48
    %v1953 = vld [vmem:[%s1952] sm:$0xff]
    %v1954 = vld [vmem:[%s1952 + $0x8] sm:$0xff]
    %v1955 = vsel %vm137, %v1941, 0.0
    %v1956 = vsel %vm137, %v1942, 0.0
    %v1957 = vadd.f32 %v1955, %v1956
    %v1958 = vrot.slane %v1957, 4
    %v1959 = vadd.f32 %v1957, %v1958
    %v1960 = vrot.slane %v1959, 2
    %v1961 = vadd.f32 %v1959, %v1960
    %v1962 = vrot.slane %v1961, 1
    %v1963 = vadd.f32 %v1961, %v1962
    %v1964 = vmul.f32 %v1963, %v153
    %v1965 = vsub.f32 %v1941, %v1964
    %v1966 = vsub.f32 %v1942, %v1964
    %v1967 = vmul.f32 %v1965, %v1965
    %v1968 = vmul.f32 %v1966, %v1966
    %v1969 = vsel %vm137, %v1967, 0.0
    %v1970 = vsel %vm137, %v1968, 0.0
    %v1971 = vadd.f32 %v1969, %v1970
    %v1972 = vrot.slane %v1971, 4
    %v1973 = vadd.f32 %v1971, %v1972
    %v1974 = vrot.slane %v1973, 2
    %v1975 = vadd.f32 %v1973, %v1974
    %v1976 = vrot.slane %v1975, 1
    %v1977 = vadd.f32 %v1975, %v1976
    %v1978 = vmul.f32 %v1977, %v153
    %v1979 = vadd.f32 %v1978, 1e-05
    %v1980 = vrsqrt.pop %v1979
    %v1981 = vmul.f32 %v1980, %v1979
    %v1982 = vmul.f32 %v1981, %v1980
    %v1983 = vmul.f32 0.5, %v1982
    %v1984 = vsub.f32 1.5, %v1983
    %v1985 = vmul.f32 %v1980, %v1984
    %vm1986 = vweird.f32 %v1979
    %vm1987 = vweird.f32 %v1980
    %vm1988 = vmor %vm1986, %vm1987
    %v1989 = vsel %vm1988, %v1980, %v1985
    %v1990 = vmul.f32 %v1965, %v1989
    %v1991 = vmul.f32 %v1966, %v1989
    %1992 = vset.pattern.permute.xlu0 4
    %1993 = vperm.xlu0 %1992, %v27
    %v1994 = vpop.permute.xlu0 %1993
    %1996 = vset.pattern.permute.xlu0 4
    %1997 = vperm.xlu0 %1996, %v28
    %v1998 = vpop.permute.xlu0 %1997
    %v2000 = vmul.f32 %v1990, %v1994
    %v2001 = vmul.f32 %v1991, %v1998
    %2002 = vset.pattern.permute.xlu0 9
    %2003 = vperm.xlu0 %2002, %v27
    %v2004 = vpop.permute.xlu0 %2003
    %2006 = vset.pattern.permute.xlu0 9
    %2007 = vperm.xlu0 %2006, %v28
    %v2008 = vpop.permute.xlu0 %2007
    %v2010 = vadd.f32 %v2000, %v2004
    %v2011 = vadd.f32 %v2001, %v2008
    %v2012 = vadd.f32 %v2010, %v1941
    %v2013 = vadd.f32 %v2011, %v1942
    %v2014 = vsel %vm137, %v2012, 0.0
    %v2015 = vsel %vm137, %v2013, 0.0
    %v2016 = vadd.f32 %v2014, %v2015
    %v2017 = vrot.slane %v2016, 4
    %v2018 = vadd.f32 %v2016, %v2017
    %v2019 = vrot.slane %v2018, 2
    %v2020 = vadd.f32 %v2018, %v2019
    %v2021 = vrot.slane %v2020, 1
    %v2022 = vadd.f32 %v2020, %v2021
    %v2023 = vmul.f32 %v2022, %v153
    %v2024 = vsub.f32 %v2012, %v2023
    %v2025 = vsub.f32 %v2013, %v2023
    %v2026 = vmul.f32 %v2024, %v2024
    %v2027 = vmul.f32 %v2025, %v2025
    %v2028 = vsel %vm137, %v2026, 0.0
    %v2029 = vsel %vm137, %v2027, 0.0
    %v2030 = vadd.f32 %v2028, %v2029
    %v2031 = vrot.slane %v2030, 4
    %v2032 = vadd.f32 %v2030, %v2031
    %v2033 = vrot.slane %v2032, 2
    %v2034 = vadd.f32 %v2032, %v2033
    %v2035 = vrot.slane %v2034, 1
    %v2036 = vadd.f32 %v2034, %v2035
    %v2037 = vmul.f32 %v2036, %v153
    %v2038 = vadd.f32 %v2037, 1e-05
    %v2039 = vrsqrt.pop %v2038
    %v2040 = vmul.f32 %v2039, %v2038
    %v2041 = vmul.f32 %v2040, %v2039
    %v2042 = vmul.f32 0.5, %v2041
    %v2043 = vsub.f32 1.5, %v2042
    %v2044 = vmul.f32 %v2039, %v2043
    %vm2045 = vweird.f32 %v2038
    %vm2046 = vweird.f32 %v2039
    %vm2047 = vmor %vm2045, %vm2046
    %v2048 = vsel %vm2047, %v2039, %v2044
    %v2049 = vmul.f32 %v2024, %v2048
    %v2050 = vmul.f32 %v2025, %v2048
    %v2051 = vmul.f32 %v2049, %v1994
    %v2052 = vmul.f32 %v2050, %v1998
    %v2053 = vadd.f32 %v2051, %v2004
    %v2054 = vadd.f32 %v2052, %v2008
    %2055 = vset.pattern.permute.xlu0 19
    %2056 = vperm.xlu0 %2055, %v119
    %v2057 = vpop.permute.xlu0 %2056
    %2059 = vset.pattern.permute.xlu0 19
    %2060 = vperm.xlu0 %2059, %v120
    %v2061 = vpop.permute.xlu0 %2060
    %2063 = vset.pattern.permute.xlu0 19
    %2064 = vperm.xlu0 %2063, %v121
    %v2065 = vpop.permute.xlu0 %2064
    %2067 = vset.pattern.permute.xlu0 19
    %2068 = vperm.xlu0 %2067, %v122
    %v2069 = vpop.permute.xlu0 %2068
    %2071 = vset.pattern.permute.xlu0 19
    %2072 = vperm.xlu0 %2071, %v123
    %v2073 = vpop.permute.xlu0 %2072
    %2075 = vset.pattern.permute.xlu0 19
    %2076 = vperm.xlu0 %2075, %v124
    %v2077 = vpop.permute.xlu0 %2076
    %2079 = vset.pattern.permute.xlu0 19
    %2080 = vperm.xlu0 %2079, %v125
    %v2081 = vpop.permute.xlu0 %2080
    %2083 = vset.pattern.permute.xlu0 19
    %2084 = vperm.xlu0 %2083, %v126
    %v2085 = vpop.permute.xlu0 %2084
    %v2088 = vsel %vm285, %v1944, 0
    %v2091 = vsel %vm285, %v1945, 0
    %v2094 = vsel %vm285, %v1946, 0
    %v2097 = vsel %vm285, %v1947, 0
    %v2100 = vsel %vm285, %v1948, 0
    %v2103 = vsel %vm285, %v1949, 0
    %v2106 = vsel %vm285, %v1950, 0
    %v2109 = vsel %vm285, %v1951, 0
    %2111 = vmatpush.msra.mxu0 0.0
    %2112 = vmatpush.msra.mxu0 0.0
    %2113 = vmatpush.msra.mxu0 0.0
    %2114 = vmatpush.msra.mxu0 0.0
    %2115 = vmatpush.msra.mxu0 0.0
    %2116 = vmatpush.msra.mxu0 0.0
    %2117 = vmatpush.msra.mxu0 0.0
    %2118 = vmatpush.msra.mxu0 0.0
    %2119 = vmatpush.msra.mxu0 0.0
    %2120 = vmatpush.msra.mxu0 0.0
    %2121 = vmatpush.msra.mxu0 0.0
    %2122 = vmatpush.msra.mxu0 0.0
    %2123 = vmatpush.msra.mxu0 0.0
    %2124 = vmatpush.msra.mxu0 0.0
    %2125 = vmatpush.msra.mxu0 %v2054
    %2126 = vmatpush.msra.mxu0 %v2053
    %2127 = vmatmul.f32.gmra.mxu0 %v2088
    %v2128 = vpop.f32.mrf.mxu0
    %v2129 = vadd.f32 %v2057, %v2128
    %2130 = vmatmul.f32.gmra.mxu0 %v2091
    %v2131 = vpop.f32.mrf.mxu0
    %v2132 = vadd.f32 %v2061, %v2131
    %2133 = vmatmul.f32.gmra.mxu0 %v2094
    %v2134 = vpop.f32.mrf.mxu0
    %v2135 = vadd.f32 %v2065, %v2134
    %2136 = vmatmul.f32.gmra.mxu0 %v2097
    %v2137 = vpop.f32.mrf.mxu0
    %v2138 = vadd.f32 %v2069, %v2137
    %2139 = vmatmul.f32.gmra.mxu0 %v2100
    %v2140 = vpop.f32.mrf.mxu0
    %v2141 = vadd.f32 %v2073, %v2140
    %2142 = vmatmul.f32.gmra.mxu0 %v2103
    %v2143 = vpop.f32.mrf.mxu0
    %v2144 = vadd.f32 %v2077, %v2143
    %2145 = vmatmul.f32.gmra.mxu0 %v2106
    %v2146 = vpop.f32.mrf.mxu0
    %v2147 = vadd.f32 %v2081, %v2146
    %2148 = vmatmul.f32.gmra.mxu0 %v2109
    %v2149 = vpop.f32.mrf.mxu0
    %v2150 = vadd.f32 %v2085, %v2149
    %2151 = vdwg.mxu0
    %v2152 = vmul.f32 %v2129, 0.5
    %v2153 = vmul.f32 %v2132, 0.5
    %v2154 = vmul.f32 %v2135, 0.5
    %v2155 = vmul.f32 %v2138, 0.5
    %v2156 = vmul.f32 %v2141, 0.5
    %v2157 = vmul.f32 %v2144, 0.5
    %v2158 = vmul.f32 %v2147, 0.5
    %v2159 = vmul.f32 %v2150, 0.5
    %v2160 = vmul.f32 %v2129, 0.70710677
    %v2161 = vmul.f32 %v2132, 0.70710677
    %v2162 = vmul.f32 %v2135, 0.70710677
    %v2163 = vmul.f32 %v2138, 0.70710677
    %v2164 = vmul.f32 %v2141, 0.70710677
    %v2165 = vmul.f32 %v2144, 0.70710677
    %v2166 = vmul.f32 %v2147, 0.70710677
    %v2167 = vmul.f32 %v2150, 0.70710677
    %v2168 = vmul.f32 %v2160, %v2160
    %v2169 = vmin.f32 16.0, %v2168
    %v2170 = vmul.f32 %v2169, 2.1237322e-06
    %v2171 = vadd.f32 %v2170, 0.00028619796
    %v2172 = vmul.f32 %v2169, %v2171
    %v2173 = vadd.f32 %v2172, 0.0036580483
    %v2174 = vmul.f32 %v2169, %v2173
    %v2175 = vadd.f32 %v2174, 0.05243302
    %v2176 = vmul.f32 %v2169, %v2175
    %v2177 = vadd.f32 %v2176, 0.18741608
    %v2178 = vmul.f32 %v2169, %v2177
    %v2179 = vadd.f32 %v2178, 1.1283791
    %v2180 = vmul.f32 %v2160, %v2179
    %v2181 = vmul.f32 %v2169, 3.8918573e-05
    %v2182 = vadd.f32 %v2181, 0.001143296
    %v2183 = vmul.f32 %v2169, %v2182
    %v2184 = vadd.f32 %v2183, 0.014752088
    %v2185 = vmul.f32 %v2169, %v2184
    %v2186 = vadd.f32 %v2185, 0.112945676
    %v2187 = vmul.f32 %v2169, %v2186
    %v2188 = vadd.f32 %v2187, 0.4994258
    %v2189 = vmul.f32 %v2169, %v2188
    %v2190 = vadd.f32 %v2189, 1.0
    %v2191 = vrcp.pop %v2190
    %v2192 = vmul.f32 %v2190, %v2191
    %v2193 = vsub.f32 1.0, %v2192
    %v2194 = vmul.f32 %v2191, %v2193
    %v2195 = vadd.f32 %v2191, %v2194
    %vm2196 = vweird.f32 %v2190
    %vm2197 = vweird.f32 %v2191
    %vm2198 = vmor %vm2196, %vm2197
    %v2199 = vsel %vm2198, %v2191, %v2195
    %v2200 = vand.u32 2147483647, %v2190
    %vm2201 = vcmp.eq.f32.partialorder %v2200, 8.507059e+37
    %v2202 = vand.u32 %v2190, 2147483648
    %v2203 = vor.u32 1.1754944e-38, %v2202
    %v2204 = vsel %vm2201, %v2203, %v2199
    %v2205 = vmul.f32 %v2180, %v2204
    %v2206 = vmin.f32 %v2205, 1.0
    %v2207 = vmax.f32 %v2206, -1.0
    %v2208 = vmul.f32 %v2161, %v2161
    %v2209 = vmin.f32 16.0, %v2208
    %v2210 = vmul.f32 %v2209, 2.1237322e-06
    %v2211 = vadd.f32 %v2210, 0.00028619796
    %v2212 = vmul.f32 %v2209, %v2211
    %v2213 = vadd.f32 %v2212, 0.0036580483
    %v2214 = vmul.f32 %v2209, %v2213
    %v2215 = vadd.f32 %v2214, 0.05243302
    %v2216 = vmul.f32 %v2209, %v2215
    %v2217 = vadd.f32 %v2216, 0.18741608
    %v2218 = vmul.f32 %v2209, %v2217
    %v2219 = vadd.f32 %v2218, 1.1283791
    %v2220 = vmul.f32 %v2161, %v2219
    %v2221 = vmul.f32 %v2209, 3.8918573e-05
    %v2222 = vadd.f32 %v2221, 0.001143296
    %v2223 = vmul.f32 %v2209, %v2222
    %v2224 = vadd.f32 %v2223, 0.014752088
    %v2225 = vmul.f32 %v2209, %v2224
    %v2226 = vadd.f32 %v2225, 0.112945676
    %v2227 = vmul.f32 %v2209, %v2226
    %v2228 = vadd.f32 %v2227, 0.4994258
    %v2229 = vmul.f32 %v2209, %v2228
    %v2230 = vadd.f32 %v2229, 1.0
    %v2231 = vrcp.pop %v2230
    %v2232 = vmul.f32 %v2230, %v2231
    %v2233 = vsub.f32 1.0, %v2232
    %v2234 = vmul.f32 %v2231, %v2233
    %v2235 = vadd.f32 %v2231, %v2234
    %vm2236 = vweird.f32 %v2230
    %vm2237 = vweird.f32 %v2231
    %vm2238 = vmor %vm2236, %vm2237
    %v2239 = vsel %vm2238, %v2231, %v2235
    %v2240 = vand.u32 2147483647, %v2230
    %vm2241 = vcmp.eq.f32.partialorder %v2240, 8.507059e+37
    %v2242 = vand.u32 %v2230, 2147483648
    %v2243 = vor.u32 1.1754944e-38, %v2242
    %v2244 = vsel %vm2241, %v2243, %v2239
    %v2245 = vmul.f32 %v2220, %v2244
    %v2246 = vmin.f32 %v2245, 1.0
    %v2247 = vmax.f32 %v2246, -1.0
    %v2248 = vmul.f32 %v2162, %v2162
    %v2249 = vmin.f32 16.0, %v2248
    %v2250 = vmul.f32 %v2249, 2.1237322e-06
    %v2251 = vadd.f32 %v2250, 0.00028619796
    %v2252 = vmul.f32 %v2249, %v2251
    %v2253 = vadd.f32 %v2252, 0.0036580483
    %v2254 = vmul.f32 %v2249, %v2253
    %v2255 = vadd.f32 %v2254, 0.05243302
    %v2256 = vmul.f32 %v2249, %v2255
    %v2257 = vadd.f32 %v2256, 0.18741608
    %v2258 = vmul.f32 %v2249, %v2257
    %v2259 = vadd.f32 %v2258, 1.1283791
    %v2260 = vmul.f32 %v2162, %v2259
    %v2261 = vmul.f32 %v2249, 3.8918573e-05
    %v2262 = vadd.f32 %v2261, 0.001143296
    %v2263 = vmul.f32 %v2249, %v2262
    %v2264 = vadd.f32 %v2263, 0.014752088
    %v2265 = vmul.f32 %v2249, %v2264
    %v2266 = vadd.f32 %v2265, 0.112945676
    %v2267 = vmul.f32 %v2249, %v2266
    %v2268 = vadd.f32 %v2267, 0.4994258
    %v2269 = vmul.f32 %v2249, %v2268
    %v2270 = vadd.f32 %v2269, 1.0
    %v2271 = vrcp.pop %v2270
    %v2272 = vmul.f32 %v2270, %v2271
    %v2273 = vsub.f32 1.0, %v2272
    %v2274 = vmul.f32 %v2271, %v2273
    %v2275 = vadd.f32 %v2271, %v2274
    %vm2276 = vweird.f32 %v2270
    %vm2277 = vweird.f32 %v2271
    %vm2278 = vmor %vm2276, %vm2277
    %v2279 = vsel %vm2278, %v2271, %v2275
    %v2280 = vand.u32 2147483647, %v2270
    %vm2281 = vcmp.eq.f32.partialorder %v2280, 8.507059e+37
    %v2282 = vand.u32 %v2270, 2147483648
    %v2283 = vor.u32 1.1754944e-38, %v2282
    %v2284 = vsel %vm2281, %v2283, %v2279
    %v2285 = vmul.f32 %v2260, %v2284
    %v2286 = vmin.f32 %v2285, 1.0
    %v2287 = vmax.f32 %v2286, -1.0
    %v2288 = vmul.f32 %v2163, %v2163
    %v2289 = vmin.f32 16.0, %v2288
    %v2290 = vmul.f32 %v2289, 2.1237322e-06
    %v2291 = vadd.f32 %v2290, 0.00028619796
    %v2292 = vmul.f32 %v2289, %v2291
    %v2293 = vadd.f32 %v2292, 0.0036580483
    %v2294 = vmul.f32 %v2289, %v2293
    %v2295 = vadd.f32 %v2294, 0.05243302
    %v2296 = vmul.f32 %v2289, %v2295
    %v2297 = vadd.f32 %v2296, 0.18741608
    %v2298 = vmul.f32 %v2289, %v2297
    %v2299 = vadd.f32 %v2298, 1.1283791
    %v2300 = vmul.f32 %v2163, %v2299
    %v2301 = vmul.f32 %v2289, 3.8918573e-05
    %v2302 = vadd.f32 %v2301, 0.001143296
    %v2303 = vmul.f32 %v2289, %v2302
    %v2304 = vadd.f32 %v2303, 0.014752088
    %v2305 = vmul.f32 %v2289, %v2304
    %v2306 = vadd.f32 %v2305, 0.112945676
    %v2307 = vmul.f32 %v2289, %v2306
    %v2308 = vadd.f32 %v2307, 0.4994258
    %v2309 = vmul.f32 %v2289, %v2308
    %v2310 = vadd.f32 %v2309, 1.0
    %v2311 = vrcp.pop %v2310
    %v2312 = vmul.f32 %v2310, %v2311
    %v2313 = vsub.f32 1.0, %v2312
    %v2314 = vmul.f32 %v2311, %v2313
    %v2315 = vadd.f32 %v2311, %v2314
    %vm2316 = vweird.f32 %v2310
    %vm2317 = vweird.f32 %v2311
    %vm2318 = vmor %vm2316, %vm2317
    %v2319 = vsel %vm2318, %v2311, %v2315
    %v2320 = vand.u32 2147483647, %v2310
    %vm2321 = vcmp.eq.f32.partialorder %v2320, 8.507059e+37
    %v2322 = vand.u32 %v2310, 2147483648
    %v2323 = vor.u32 1.1754944e-38, %v2322
    %v2324 = vsel %vm2321, %v2323, %v2319
    %v2325 = vmul.f32 %v2300, %v2324
    %v2326 = vmin.f32 %v2325, 1.0
    %v2327 = vmax.f32 %v2326, -1.0
    %v2328 = vmul.f32 %v2164, %v2164
    %v2329 = vmin.f32 16.0, %v2328
    %v2330 = vmul.f32 %v2329, 2.1237322e-06
    %v2331 = vadd.f32 %v2330, 0.00028619796
    %v2332 = vmul.f32 %v2329, %v2331
    %v2333 = vadd.f32 %v2332, 0.0036580483
    %v2334 = vmul.f32 %v2329, %v2333
    %v2335 = vadd.f32 %v2334, 0.05243302
    %v2336 = vmul.f32 %v2329, %v2335
    %v2337 = vadd.f32 %v2336, 0.18741608
    %v2338 = vmul.f32 %v2329, %v2337
    %v2339 = vadd.f32 %v2338, 1.1283791
    %v2340 = vmul.f32 %v2164, %v2339
    %v2341 = vmul.f32 %v2329, 3.8918573e-05
    %v2342 = vadd.f32 %v2341, 0.001143296
    %v2343 = vmul.f32 %v2329, %v2342
    %v2344 = vadd.f32 %v2343, 0.014752088
    %v2345 = vmul.f32 %v2329, %v2344
    %v2346 = vadd.f32 %v2345, 0.112945676
    %v2347 = vmul.f32 %v2329, %v2346
    %v2348 = vadd.f32 %v2347, 0.4994258
    %v2349 = vmul.f32 %v2329, %v2348
    %v2350 = vadd.f32 %v2349, 1.0
    %v2351 = vrcp.pop %v2350
    %v2352 = vmul.f32 %v2350, %v2351
    %v2353 = vsub.f32 1.0, %v2352
    %v2354 = vmul.f32 %v2351, %v2353
    %v2355 = vadd.f32 %v2351, %v2354
    %vm2356 = vweird.f32 %v2350
    %vm2357 = vweird.f32 %v2351
    %vm2358 = vmor %vm2356, %vm2357
    %v2359 = vsel %vm2358, %v2351, %v2355
    %v2360 = vand.u32 2147483647, %v2350
    %vm2361 = vcmp.eq.f32.partialorder %v2360, 8.507059e+37
    %v2362 = vand.u32 %v2350, 2147483648
    %v2363 = vor.u32 1.1754944e-38, %v2362
    %v2364 = vsel %vm2361, %v2363, %v2359
    %v2365 = vmul.f32 %v2340, %v2364
    %v2366 = vmin.f32 %v2365, 1.0
    %v2367 = vmax.f32 %v2366, -1.0
    %v2368 = vmul.f32 %v2165, %v2165
    %v2369 = vmin.f32 16.0, %v2368
    %v2370 = vmul.f32 %v2369, 2.1237322e-06
    %v2371 = vadd.f32 %v2370, 0.00028619796
    %v2372 = vmul.f32 %v2369, %v2371
    %v2373 = vadd.f32 %v2372, 0.0036580483
    %v2374 = vmul.f32 %v2369, %v2373
    %v2375 = vadd.f32 %v2374, 0.05243302
    %v2376 = vmul.f32 %v2369, %v2375
    %v2377 = vadd.f32 %v2376, 0.18741608
    %v2378 = vmul.f32 %v2369, %v2377
    %v2379 = vadd.f32 %v2378, 1.1283791
    %v2380 = vmul.f32 %v2165, %v2379
    %v2381 = vmul.f32 %v2369, 3.8918573e-05
    %v2382 = vadd.f32 %v2381, 0.001143296
    %v2383 = vmul.f32 %v2369, %v2382
    %v2384 = vadd.f32 %v2383, 0.014752088
    %v2385 = vmul.f32 %v2369, %v2384
    %v2386 = vadd.f32 %v2385, 0.112945676
    %v2387 = vmul.f32 %v2369, %v2386
    %v2388 = vadd.f32 %v2387, 0.4994258
    %v2389 = vmul.f32 %v2369, %v2388
    %v2390 = vadd.f32 %v2389, 1.0
    %v2391 = vrcp.pop %v2390
    %v2392 = vmul.f32 %v2390, %v2391
    %v2393 = vsub.f32 1.0, %v2392
    %v2394 = vmul.f32 %v2391, %v2393
    %v2395 = vadd.f32 %v2391, %v2394
    %vm2396 = vweird.f32 %v2390
    %vm2397 = vweird.f32 %v2391
    %vm2398 = vmor %vm2396, %vm2397
    %v2399 = vsel %vm2398, %v2391, %v2395
    %v2400 = vand.u32 2147483647, %v2390
    %vm2401 = vcmp.eq.f32.partialorder %v2400, 8.507059e+37
    %v2402 = vand.u32 %v2390, 2147483648
    %v2403 = vor.u32 1.1754944e-38, %v2402
    %v2404 = vsel %vm2401, %v2403, %v2399
    %v2405 = vmul.f32 %v2380, %v2404
    %v2406 = vmin.f32 %v2405, 1.0
    %v2407 = vmax.f32 %v2406, -1.0
    %v2408 = vmul.f32 %v2166, %v2166
    %v2409 = vmin.f32 16.0, %v2408
    %v2410 = vmul.f32 %v2409, 2.1237322e-06
    %v2411 = vadd.f32 %v2410, 0.00028619796
    %v2412 = vmul.f32 %v2409, %v2411
    %v2413 = vadd.f32 %v2412, 0.0036580483
    %v2414 = vmul.f32 %v2409, %v2413
    %v2415 = vadd.f32 %v2414, 0.05243302
    %v2416 = vmul.f32 %v2409, %v2415
    %v2417 = vadd.f32 %v2416, 0.18741608
    %v2418 = vmul.f32 %v2409, %v2417
    %v2419 = vadd.f32 %v2418, 1.1283791
    %v2420 = vmul.f32 %v2166, %v2419
    %v2421 = vmul.f32 %v2409, 3.8918573e-05
    %v2422 = vadd.f32 %v2421, 0.001143296
    %v2423 = vmul.f32 %v2409, %v2422
    %v2424 = vadd.f32 %v2423, 0.014752088
    %v2425 = vmul.f32 %v2409, %v2424
    %v2426 = vadd.f32 %v2425, 0.112945676
    %v2427 = vmul.f32 %v2409, %v2426
    %v2428 = vadd.f32 %v2427, 0.4994258
    %v2429 = vmul.f32 %v2409, %v2428
    %v2430 = vadd.f32 %v2429, 1.0
    %v2431 = vrcp.pop %v2430
    %v2432 = vmul.f32 %v2430, %v2431
    %v2433 = vsub.f32 1.0, %v2432
    %v2434 = vmul.f32 %v2431, %v2433
    %v2435 = vadd.f32 %v2431, %v2434
    %vm2436 = vweird.f32 %v2430
    %vm2437 = vweird.f32 %v2431
    %vm2438 = vmor %vm2436, %vm2437
    %v2439 = vsel %vm2438, %v2431, %v2435
    %v2440 = vand.u32 2147483647, %v2430
    %vm2441 = vcmp.eq.f32.partialorder %v2440, 8.507059e+37
    %v2442 = vand.u32 %v2430, 2147483648
    %v2443 = vor.u32 1.1754944e-38, %v2442
    %v2444 = vsel %vm2441, %v2443, %v2439
    %v2445 = vmul.f32 %v2420, %v2444
    %v2446 = vmin.f32 %v2445, 1.0
    %v2447 = vmax.f32 %v2446, -1.0
    %v2448 = vmul.f32 %v2167, %v2167
    %v2449 = vmin.f32 16.0, %v2448
    %v2450 = vmul.f32 %v2449, 2.1237322e-06
    %v2451 = vadd.f32 %v2450, 0.00028619796
    %v2452 = vmul.f32 %v2449, %v2451
    %v2453 = vadd.f32 %v2452, 0.0036580483
    %v2454 = vmul.f32 %v2449, %v2453
    %v2455 = vadd.f32 %v2454, 0.05243302
    %v2456 = vmul.f32 %v2449, %v2455
    %v2457 = vadd.f32 %v2456, 0.18741608
    %v2458 = vmul.f32 %v2449, %v2457
    %v2459 = vadd.f32 %v2458, 1.1283791
    %v2460 = vmul.f32 %v2167, %v2459
    %v2461 = vmul.f32 %v2449, 3.8918573e-05
    %v2462 = vadd.f32 %v2461, 0.001143296
    %v2463 = vmul.f32 %v2449, %v2462
    %v2464 = vadd.f32 %v2463, 0.014752088
    %v2465 = vmul.f32 %v2449, %v2464
    %v2466 = vadd.f32 %v2465, 0.112945676
    %v2467 = vmul.f32 %v2449, %v2466
    %v2468 = vadd.f32 %v2467, 0.4994258
    %v2469 = vmul.f32 %v2449, %v2468
    %v2470 = vadd.f32 %v2469, 1.0
    %v2471 = vrcp.pop %v2470
    %v2472 = vmul.f32 %v2470, %v2471
    %v2473 = vsub.f32 1.0, %v2472
    %v2474 = vmul.f32 %v2471, %v2473
    %v2475 = vadd.f32 %v2471, %v2474
    %vm2476 = vweird.f32 %v2470
    %vm2477 = vweird.f32 %v2471
    %vm2478 = vmor %vm2476, %vm2477
    %v2479 = vsel %vm2478, %v2471, %v2475
    %v2480 = vand.u32 2147483647, %v2470
    %vm2481 = vcmp.eq.f32.partialorder %v2480, 8.507059e+37
    %v2482 = vand.u32 %v2470, 2147483648
    %v2483 = vor.u32 1.1754944e-38, %v2482
    %v2484 = vsel %vm2481, %v2483, %v2479
    %v2485 = vmul.f32 %v2460, %v2484
    %v2486 = vmin.f32 %v2485, 1.0
    %v2487 = vmax.f32 %v2486, -1.0
    %v2488 = vadd.f32 %v2207, 1.0
    %v2489 = vadd.f32 %v2247, 1.0
    %v2490 = vadd.f32 %v2287, 1.0
    %v2491 = vadd.f32 %v2327, 1.0
    %v2492 = vadd.f32 %v2367, 1.0
    %v2493 = vadd.f32 %v2407, 1.0
    %v2494 = vadd.f32 %v2447, 1.0
    %v2495 = vadd.f32 %v2487, 1.0
    %v2496 = vmul.f32 %v2152, %v2488
    %v2497 = vmul.f32 %v2153, %v2489
    %v2498 = vmul.f32 %v2154, %v2490
    %v2499 = vmul.f32 %v2155, %v2491
    %v2500 = vmul.f32 %v2156, %v2492
    %v2501 = vmul.f32 %v2157, %v2493
    %v2502 = vmul.f32 %v2158, %v2494
    %v2503 = vmul.f32 %v2159, %v2495
    %2504 = vset.pattern.permute.xlu0 14
    %2505 = vperm.xlu0 %2504, %v27
    %v2506 = vpop.permute.xlu0 %2505
    %2508 = vset.pattern.permute.xlu0 14
    %2509 = vperm.xlu0 %2508, %v28
    %v2510 = vpop.permute.xlu0 %2509
    %v2513 = vsel %vm711, %v1953, 0
    %v2516 = vsel %vm711, %v1954, 0
    %2518 = vmatpush.msra.mxu0 0.0
    %2519 = vmatpush.msra.mxu0 0.0
    %2520 = vmatpush.msra.mxu0 0.0
    %2521 = vmatpush.msra.mxu0 0.0
    %2522 = vmatpush.msra.mxu0 0.0
    %2523 = vmatpush.msra.mxu0 0.0
    %2524 = vmatpush.msra.mxu0 0.0
    %2525 = vmatpush.msra.mxu0 0.0
    %2526 = vmatpush.msra.mxu0 %v2503
    %2527 = vmatpush.msra.mxu0 %v2502
    %2528 = vmatpush.msra.mxu0 %v2501
    %2529 = vmatpush.msra.mxu0 %v2500
    %2530 = vmatpush.msra.mxu0 %v2499
    %2531 = vmatpush.msra.mxu0 %v2498
    %2532 = vmatpush.msra.mxu0 %v2497
    %2533 = vmatpush.msra.mxu0 %v2496
    %2534 = vmatmul.f32.gmra.mxu0 %v2513
    %v2535 = vpop.f32.mrf.mxu0
    %v2536 = vadd.f32 %v2506, %v2535
    %2537 = vmatmul.f32.gmra.mxu0 %v2516
    %v2538 = vpop.f32.mrf.mxu0
    %v2539 = vadd.f32 %v2510, %v2538
    %2540 = vdwg.mxu0
    %v2541 = vadd.f32 %v2536, %v2012
    %v2542 = vadd.f32 %v2539, %v2013
    %s2543 = scalar_lea.vmem %s2, 256
    %v2544 = vld [vmem:[%s2543] sm:$0xff]
    %v2545 = vld [vmem:[%s2543 + $0x8] sm:$0xff]
    %v2546 = vld [vmem:[%s2543 + $0x10] sm:$0xff]
    %v2547 = vld [vmem:[%s2543 + $0x18] sm:$0xff]
    %v2548 = vld [vmem:[%s2543 + $0x20] sm:$0xff]
    %v2549 = vld [vmem:[%s2543 + $0x28] sm:$0xff]
    %v2550 = vld [vmem:[%s2543 + $0x30] sm:$0xff]
    %v2551 = vld [vmem:[%s2543 + $0x38] sm:$0xff]
    %s2552 = scalar_lea.vmem %s3, 64
    %v2553 = vld [vmem:[%s2552] sm:$0xff]
    %v2554 = vld [vmem:[%s2552 + $0x8] sm:$0xff]
    %v2555 = vsel %vm137, %v2541, 0.0
    %v2556 = vsel %vm137, %v2542, 0.0
    %v2557 = vadd.f32 %v2555, %v2556
    %v2558 = vrot.slane %v2557, 4
    %v2559 = vadd.f32 %v2557, %v2558
    %v2560 = vrot.slane %v2559, 2
    %v2561 = vadd.f32 %v2559, %v2560
    %v2562 = vrot.slane %v2561, 1
    %v2563 = vadd.f32 %v2561, %v2562
    %v2564 = vmul.f32 %v2563, %v153
    %v2565 = vsub.f32 %v2541, %v2564
    %v2566 = vsub.f32 %v2542, %v2564
    %v2567 = vmul.f32 %v2565, %v2565
    %v2568 = vmul.f32 %v2566, %v2566
    %v2569 = vsel %vm137, %v2567, 0.0
    %v2570 = vsel %vm137, %v2568, 0.0
    %v2571 = vadd.f32 %v2569, %v2570
    %v2572 = vrot.slane %v2571, 4
    %v2573 = vadd.f32 %v2571, %v2572
    %v2574 = vrot.slane %v2573, 2
    %v2575 = vadd.f32 %v2573, %v2574
    %v2576 = vrot.slane %v2575, 1
    %v2577 = vadd.f32 %v2575, %v2576
    %v2578 = vmul.f32 %v2577, %v153
    %v2579 = vadd.f32 %v2578, 1e-05
    %v2580 = vrsqrt.pop %v2579
    %v2581 = vmul.f32 %v2580, %v2579
    %v2582 = vmul.f32 %v2581, %v2580
    %v2583 = vmul.f32 0.5, %v2582
    %v2584 = vsub.f32 1.5, %v2583
    %v2585 = vmul.f32 %v2580, %v2584
    %vm2586 = vweird.f32 %v2579
    %vm2587 = vweird.f32 %v2580
    %vm2588 = vmor %vm2586, %vm2587
    %v2589 = vsel %vm2588, %v2580, %v2585
    %v2590 = vmul.f32 %v2565, %v2589
    %v2591 = vmul.f32 %v2566, %v2589
    %2592 = vset.pattern.permute.xlu0 5
    %2593 = vperm.xlu0 %2592, %v27
    %v2594 = vpop.permute.xlu0 %2593
    %2596 = vset.pattern.permute.xlu0 5
    %2597 = vperm.xlu0 %2596, %v28
    %v2598 = vpop.permute.xlu0 %2597
    %v2600 = vmul.f32 %v2590, %v2594
    %v2601 = vmul.f32 %v2591, %v2598
    %2602 = vset.pattern.permute.xlu0 10
    %2603 = vperm.xlu0 %2602, %v27
    %v2604 = vpop.permute.xlu0 %2603
    %2606 = vset.pattern.permute.xlu0 10
    %2607 = vperm.xlu0 %2606, %v28
    %v2608 = vpop.permute.xlu0 %2607
    %v2610 = vadd.f32 %v2600, %v2604
    %v2611 = vadd.f32 %v2601, %v2608
    %v2612 = vadd.f32 %v2610, %v2541
    %v2613 = vadd.f32 %v2611, %v2542
    %v2614 = vsel %vm137, %v2612, 0.0
    %v2615 = vsel %vm137, %v2613, 0.0
    %v2616 = vadd.f32 %v2614, %v2615
    %v2617 = vrot.slane %v2616, 4
    %v2618 = vadd.f32 %v2616, %v2617
    %v2619 = vrot.slane %v2618, 2
    %v2620 = vadd.f32 %v2618, %v2619
    %v2621 = vrot.slane %v2620, 1
    %v2622 = vadd.f32 %v2620, %v2621
    %v2623 = vmul.f32 %v2622, %v153
    %v2624 = vsub.f32 %v2612, %v2623
    %v2625 = vsub.f32 %v2613, %v2623
    %v2626 = vmul.f32 %v2624, %v2624
    %v2627 = vmul.f32 %v2625, %v2625
    %v2628 = vsel %vm137, %v2626, 0.0
    %v2629 = vsel %vm137, %v2627, 0.0
    %v2630 = vadd.f32 %v2628, %v2629
    %v2631 = vrot.slane %v2630, 4
    %v2632 = vadd.f32 %v2630, %v2631
    %v2633 = vrot.slane %v2632, 2
    %v2634 = vadd.f32 %v2632, %v2633
    %v2635 = vrot.slane %v2634, 1
    %v2636 = vadd.f32 %v2634, %v2635
    %v2637 = vmul.f32 %v2636, %v153
    %v2638 = vadd.f32 %v2637, 1e-05
    %v2639 = vrsqrt.pop %v2638
    %v2640 = vmul.f32 %v2639, %v2638
    %v2641 = vmul.f32 %v2640, %v2639
    %v2642 = vmul.f32 0.5, %v2641
    %v2643 = vsub.f32 1.5, %v2642
    %v2644 = vmul.f32 %v2639, %v2643
    %vm2645 = vweird.f32 %v2638
    %vm2646 = vweird.f32 %v2639
    %vm2647 = vmor %vm2645, %vm2646
    %v2648 = vsel %vm2647, %v2639, %v2644
    %v2649 = vmul.f32 %v2624, %v2648
    %v2650 = vmul.f32 %v2625, %v2648
    %v2651 = vmul.f32 %v2649, %v2594
    %v2652 = vmul.f32 %v2650, %v2598
    %v2653 = vadd.f32 %v2651, %v2604
    %v2654 = vadd.f32 %v2652, %v2608
    %2655 = vset.pattern.permute.xlu0 20
    %2656 = vperm.xlu0 %2655, %v119
    %v2657 = vpop.permute.xlu0 %2656
    %2659 = vset.pattern.permute.xlu0 20
    %2660 = vperm.xlu0 %2659, %v120
    %v2661 = vpop.permute.xlu0 %2660
    %2663 = vset.pattern.permute.xlu0 20
    %2664 = vperm.xlu0 %2663, %v121
    %v2665 = vpop.permute.xlu0 %2664
    %2667 = vset.pattern.permute.xlu0 20
    %2668 = vperm.xlu0 %2667, %v122
    %v2669 = vpop.permute.xlu0 %2668
    %2671 = vset.pattern.permute.xlu0 20
    %2672 = vperm.xlu0 %2671, %v123
    %v2673 = vpop.permute.xlu0 %2672
    %2675 = vset.pattern.permute.xlu0 20
    %2676 = vperm.xlu0 %2675, %v124
    %v2677 = vpop.permute.xlu0 %2676
    %2679 = vset.pattern.permute.xlu0 20
    %2680 = vperm.xlu0 %2679, %v125
    %v2681 = vpop.permute.xlu0 %2680
    %2683 = vset.pattern.permute.xlu0 20
    %2684 = vperm.xlu0 %2683, %v126
    %v2685 = vpop.permute.xlu0 %2684
    %v2688 = vsel %vm285, %v2544, 0
    %v2691 = vsel %vm285, %v2545, 0
    %v2694 = vsel %vm285, %v2546, 0
    %v2697 = vsel %vm285, %v2547, 0
    %v2700 = vsel %vm285, %v2548, 0
    %v2703 = vsel %vm285, %v2549, 0
    %v2706 = vsel %vm285, %v2550, 0
    %v2709 = vsel %vm285, %v2551, 0
    %2711 = vmatpush.msra.mxu0 0.0
    %2712 = vmatpush.msra.mxu0 0.0
    %2713 = vmatpush.msra.mxu0 0.0
    %2714 = vmatpush.msra.mxu0 0.0
    %2715 = vmatpush.msra.mxu0 0.0
    %2716 = vmatpush.msra.mxu0 0.0
    %2717 = vmatpush.msra.mxu0 0.0
    %2718 = vmatpush.msra.mxu0 0.0
    %2719 = vmatpush.msra.mxu0 0.0
    %2720 = vmatpush.msra.mxu0 0.0
    %2721 = vmatpush.msra.mxu0 0.0
    %2722 = vmatpush.msra.mxu0 0.0
    %2723 = vmatpush.msra.mxu0 0.0
    %2724 = vmatpush.msra.mxu0 0.0
    %2725 = vmatpush.msra.mxu0 %v2654
    %2726 = vmatpush.msra.mxu0 %v2653
    %2727 = vmatmul.f32.gmra.mxu0 %v2688
    %v2728 = vpop.f32.mrf.mxu0
    %v2729 = vadd.f32 %v2657, %v2728
    %2730 = vmatmul.f32.gmra.mxu0 %v2691
    %v2731 = vpop.f32.mrf.mxu0
    %v2732 = vadd.f32 %v2661, %v2731
    %2733 = vmatmul.f32.gmra.mxu0 %v2694
    %v2734 = vpop.f32.mrf.mxu0
    %v2735 = vadd.f32 %v2665, %v2734
    %2736 = vmatmul.f32.gmra.mxu0 %v2697
    %v2737 = vpop.f32.mrf.mxu0
    %v2738 = vadd.f32 %v2669, %v2737
    %2739 = vmatmul.f32.gmra.mxu0 %v2700
    %v2740 = vpop.f32.mrf.mxu0
    %v2741 = vadd.f32 %v2673, %v2740
    %2742 = vmatmul.f32.gmra.mxu0 %v2703
    %v2743 = vpop.f32.mrf.mxu0
    %v2744 = vadd.f32 %v2677, %v2743
    %2745 = vmatmul.f32.gmra.mxu0 %v2706
    %v2746 = vpop.f32.mrf.mxu0
    %v2747 = vadd.f32 %v2681, %v2746
    %2748 = vmatmul.f32.gmra.mxu0 %v2709
    %v2749 = vpop.f32.mrf.mxu0
    %v2750 = vadd.f32 %v2685, %v2749
    %2751 = vdwg.mxu0
    %v2752 = vmul.f32 %v2729, 0.5
    %v2753 = vmul.f32 %v2732, 0.5
    %v2754 = vmul.f32 %v2735, 0.5
    %v2755 = vmul.f32 %v2738, 0.5
    %v2756 = vmul.f32 %v2741, 0.5
    %v2757 = vmul.f32 %v2744, 0.5
    %v2758 = vmul.f32 %v2747, 0.5
    %v2759 = vmul.f32 %v2750, 0.5
    %v2760 = vmul.f32 %v2729, 0.70710677
    %v2761 = vmul.f32 %v2732, 0.70710677
    %v2762 = vmul.f32 %v2735, 0.70710677
    %v2763 = vmul.f32 %v2738, 0.70710677
    %v2764 = vmul.f32 %v2741, 0.70710677
    %v2765 = vmul.f32 %v2744, 0.70710677
    %v2766 = vmul.f32 %v2747, 0.70710677
    %v2767 = vmul.f32 %v2750, 0.70710677
    %v2768 = vmul.f32 %v2760, %v2760
    %v2769 = vmin.f32 16.0, %v2768
    %v2770 = vmul.f32 %v2769, 2.1237322e-06
    %v2771 = vadd.f32 %v2770, 0.00028619796
    %v2772 = vmul.f32 %v2769, %v2771
    %v2773 = vadd.f32 %v2772, 0.0036580483
    %v2774 = vmul.f32 %v2769, %v2773
    %v2775 = vadd.f32 %v2774, 0.05243302
    %v2776 = vmul.f32 %v2769, %v2775
    %v2777 = vadd.f32 %v2776, 0.18741608
    %v2778 = vmul.f32 %v2769, %v2777
    %v2779 = vadd.f32 %v2778, 1.1283791
    %v2780 = vmul.f32 %v2760, %v2779
    %v2781 = vmul.f32 %v2769, 3.8918573e-05
    %v2782 = vadd.f32 %v2781, 0.001143296
    %v2783 = vmul.f32 %v2769, %v2782
    %v2784 = vadd.f32 %v2783, 0.014752088
    %v2785 = vmul.f32 %v2769, %v2784
    %v2786 = vadd.f32 %v2785, 0.112945676
    %v2787 = vmul.f32 %v2769, %v2786
    %v2788 = vadd.f32 %v2787, 0.4994258
    %v2789 = vmul.f32 %v2769, %v2788
    %v2790 = vadd.f32 %v2789, 1.0
    %v2791 = vrcp.pop %v2790
    %v2792 = vmul.f32 %v2790, %v2791
    %v2793 = vsub.f32 1.0, %v2792
    %v2794 = vmul.f32 %v2791, %v2793
    %v2795 = vadd.f32 %v2791, %v2794
    %vm2796 = vweird.f32 %v2790
    %vm2797 = vweird.f32 %v2791
    %vm2798 = vmor %vm2796, %vm2797
    %v2799 = vsel %vm2798, %v2791, %v2795
    %v2800 = vand.u32 2147483647, %v2790
    %vm2801 = vcmp.eq.f32.partialorder %v2800, 8.507059e+37
    %v2802 = vand.u32 %v2790, 2147483648
    %v2803 = vor.u32 1.1754944e-38, %v2802
    %v2804 = vsel %vm2801, %v2803, %v2799
    %v2805 = vmul.f32 %v2780, %v2804
    %v2806 = vmin.f32 %v2805, 1.0
    %v2807 = vmax.f32 %v2806, -1.0
    %v2808 = vmul.f32 %v2761, %v2761
    %v2809 = vmin.f32 16.0, %v2808
    %v2810 = vmul.f32 %v2809, 2.1237322e-06
    %v2811 = vadd.f32 %v2810, 0.00028619796
    %v2812 = vmul.f32 %v2809, %v2811
    %v2813 = vadd.f32 %v2812, 0.0036580483
    %v2814 = vmul.f32 %v2809, %v2813
    %v2815 = vadd.f32 %v2814, 0.05243302
    %v2816 = vmul.f32 %v2809, %v2815
    %v2817 = vadd.f32 %v2816, 0.18741608
    %v2818 = vmul.f32 %v2809, %v2817
    %v2819 = vadd.f32 %v2818, 1.1283791
    %v2820 = vmul.f32 %v2761, %v2819
    %v2821 = vmul.f32 %v2809, 3.8918573e-05
    %v2822 = vadd.f32 %v2821, 0.001143296
    %v2823 = vmul.f32 %v2809, %v2822
    %v2824 = vadd.f32 %v2823, 0.014752088
    %v2825 = vmul.f32 %v2809, %v2824
    %v2826 = vadd.f32 %v2825, 0.112945676
    %v2827 = vmul.f32 %v2809, %v2826
    %v2828 = vadd.f32 %v2827, 0.4994258
    %v2829 = vmul.f32 %v2809, %v2828
    %v2830 = vadd.f32 %v2829, 1.0
    %v2831 = vrcp.pop %v2830
    %v2832 = vmul.f32 %v2830, %v2831
    %v2833 = vsub.f32 1.0, %v2832
    %v2834 = vmul.f32 %v2831, %v2833
    %v2835 = vadd.f32 %v2831, %v2834
    %vm2836 = vweird.f32 %v2830
    %vm2837 = vweird.f32 %v2831
    %vm2838 = vmor %vm2836, %vm2837
    %v2839 = vsel %vm2838, %v2831, %v2835
    %v2840 = vand.u32 2147483647, %v2830
    %vm2841 = vcmp.eq.f32.partialorder %v2840, 8.507059e+37
    %v2842 = vand.u32 %v2830, 2147483648
    %v2843 = vor.u32 1.1754944e-38, %v2842
    %v2844 = vsel %vm2841, %v2843, %v2839
    %v2845 = vmul.f32 %v2820, %v2844
    %v2846 = vmin.f32 %v2845, 1.0
    %v2847 = vmax.f32 %v2846, -1.0
    %v2848 = vmul.f32 %v2762, %v2762
    %v2849 = vmin.f32 16.0, %v2848
    %v2850 = vmul.f32 %v2849, 2.1237322e-06
    %v2851 = vadd.f32 %v2850, 0.00028619796
    %v2852 = vmul.f32 %v2849, %v2851
    %v2853 = vadd.f32 %v2852, 0.0036580483
    %v2854 = vmul.f32 %v2849, %v2853
    %v2855 = vadd.f32 %v2854, 0.05243302
    %v2856 = vmul.f32 %v2849, %v2855
    %v2857 = vadd.f32 %v2856, 0.18741608
    %v2858 = vmul.f32 %v2849, %v2857
    %v2859 = vadd.f32 %v2858, 1.1283791
    %v2860 = vmul.f32 %v2762, %v2859
    %v2861 = vmul.f32 %v2849, 3.8918573e-05
    %v2862 = vadd.f32 %v2861, 0.001143296
    %v2863 = vmul.f32 %v2849, %v2862
    %v2864 = vadd.f32 %v2863, 0.014752088
    %v2865 = vmul.f32 %v2849, %v2864
    %v2866 = vadd.f32 %v2865, 0.112945676
    %v2867 = vmul.f32 %v2849, %v2866
    %v2868 = vadd.f32 %v2867, 0.4994258
    %v2869 = vmul.f32 %v2849, %v2868
    %v2870 = vadd.f32 %v2869, 1.0
    %v2871 = vrcp.pop %v2870
    %v2872 = vmul.f32 %v2870, %v2871
    %v2873 = vsub.f32 1.0, %v2872
    %v2874 = vmul.f32 %v2871, %v2873
    %v2875 = vadd.f32 %v2871, %v2874
    %vm2876 = vweird.f32 %v2870
    %vm2877 = vweird.f32 %v2871
    %vm2878 = vmor %vm2876, %vm2877
    %v2879 = vsel %vm2878, %v2871, %v2875
    %v2880 = vand.u32 2147483647, %v2870
    %vm2881 = vcmp.eq.f32.partialorder %v2880, 8.507059e+37
    %v2882 = vand.u32 %v2870, 2147483648
    %v2883 = vor.u32 1.1754944e-38, %v2882
    %v2884 = vsel %vm2881, %v2883, %v2879
    %v2885 = vmul.f32 %v2860, %v2884
    %v2886 = vmin.f32 %v2885, 1.0
    %v2887 = vmax.f32 %v2886, -1.0
    %v2888 = vmul.f32 %v2763, %v2763
    %v2889 = vmin.f32 16.0, %v2888
    %v2890 = vmul.f32 %v2889, 2.1237322e-06
    %v2891 = vadd.f32 %v2890, 0.00028619796
    %v2892 = vmul.f32 %v2889, %v2891
    %v2893 = vadd.f32 %v2892, 0.0036580483
    %v2894 = vmul.f32 %v2889, %v2893
    %v2895 = vadd.f32 %v2894, 0.05243302
    %v2896 = vmul.f32 %v2889, %v2895
    %v2897 = vadd.f32 %v2896, 0.18741608
    %v2898 = vmul.f32 %v2889, %v2897
    %v2899 = vadd.f32 %v2898, 1.1283791
    %v2900 = vmul.f32 %v2763, %v2899
    %v2901 = vmul.f32 %v2889, 3.8918573e-05
    %v2902 = vadd.f32 %v2901, 0.001143296
    %v2903 = vmul.f32 %v2889, %v2902
    %v2904 = vadd.f32 %v2903, 0.014752088
    %v2905 = vmul.f32 %v2889, %v2904
    %v2906 = vadd.f32 %v2905, 0.112945676
    %v2907 = vmul.f32 %v2889, %v2906
    %v2908 = vadd.f32 %v2907, 0.4994258
    %v2909 = vmul.f32 %v2889, %v2908
    %v2910 = vadd.f32 %v2909, 1.0
    %v2911 = vrcp.pop %v2910
    %v2912 = vmul.f32 %v2910, %v2911
    %v2913 = vsub.f32 1.0, %v2912
    %v2914 = vmul.f32 %v2911, %v2913
    %v2915 = vadd.f32 %v2911, %v2914
    %vm2916 = vweird.f32 %v2910
    %vm2917 = vweird.f32 %v2911
    %vm2918 = vmor %vm2916, %vm2917
    %v2919 = vsel %vm2918, %v2911, %v2915
    %v2920 = vand.u32 2147483647, %v2910
    %vm2921 = vcmp.eq.f32.partialorder %v2920, 8.507059e+37
    %v2922 = vand.u32 %v2910, 2147483648
    %v2923 = vor.u32 1.1754944e-38, %v2922
    %v2924 = vsel %vm2921, %v2923, %v2919
    %v2925 = vmul.f32 %v2900, %v2924
    %v2926 = vmin.f32 %v2925, 1.0
    %v2927 = vmax.f32 %v2926, -1.0
    %v2928 = vmul.f32 %v2764, %v2764
    %v2929 = vmin.f32 16.0, %v2928
    %v2930 = vmul.f32 %v2929, 2.1237322e-06
    %v2931 = vadd.f32 %v2930, 0.00028619796
    %v2932 = vmul.f32 %v2929, %v2931
    %v2933 = vadd.f32 %v2932, 0.0036580483
    %v2934 = vmul.f32 %v2929, %v2933
    %v2935 = vadd.f32 %v2934, 0.05243302
    %v2936 = vmul.f32 %v2929, %v2935
    %v2937 = vadd.f32 %v2936, 0.18741608
    %v2938 = vmul.f32 %v2929, %v2937
    %v2939 = vadd.f32 %v2938, 1.1283791
    %v2940 = vmul.f32 %v2764, %v2939
    %v2941 = vmul.f32 %v2929, 3.8918573e-05
    %v2942 = vadd.f32 %v2941, 0.001143296
    %v2943 = vmul.f32 %v2929, %v2942
    %v2944 = vadd.f32 %v2943, 0.014752088
    %v2945 = vmul.f32 %v2929, %v2944
    %v2946 = vadd.f32 %v2945, 0.112945676
    %v2947 = vmul.f32 %v2929, %v2946
    %v2948 = vadd.f32 %v2947, 0.4994258
    %v2949 = vmul.f32 %v2929, %v2948
    %v2950 = vadd.f32 %v2949, 1.0
    %v2951 = vrcp.pop %v2950
    %v2952 = vmul.f32 %v2950, %v2951
    %v2953 = vsub.f32 1.0, %v2952
    %v2954 = vmul.f32 %v2951, %v2953
    %v2955 = vadd.f32 %v2951, %v2954
    %vm2956 = vweird.f32 %v2950
    %vm2957 = vweird.f32 %v2951
    %vm2958 = vmor %vm2956, %vm2957
    %v2959 = vsel %vm2958, %v2951, %v2955
    %v2960 = vand.u32 2147483647, %v2950
    %vm2961 = vcmp.eq.f32.partialorder %v2960, 8.507059e+37
    %v2962 = vand.u32 %v2950, 2147483648
    %v2963 = vor.u32 1.1754944e-38, %v2962
    %v2964 = vsel %vm2961, %v2963, %v2959
    %v2965 = vmul.f32 %v2940, %v2964
    %v2966 = vmin.f32 %v2965, 1.0
    %v2967 = vmax.f32 %v2966, -1.0
    %v2968 = vmul.f32 %v2765, %v2765
    %v2969 = vmin.f32 16.0, %v2968
    %v2970 = vmul.f32 %v2969, 2.1237322e-06
    %v2971 = vadd.f32 %v2970, 0.00028619796
    %v2972 = vmul.f32 %v2969, %v2971
    %v2973 = vadd.f32 %v2972, 0.0036580483
    %v2974 = vmul.f32 %v2969, %v2973
    %v2975 = vadd.f32 %v2974, 0.05243302
    %v2976 = vmul.f32 %v2969, %v2975
    %v2977 = vadd.f32 %v2976, 0.18741608
    %v2978 = vmul.f32 %v2969, %v2977
    %v2979 = vadd.f32 %v2978, 1.1283791
    %v2980 = vmul.f32 %v2765, %v2979
    %v2981 = vmul.f32 %v2969, 3.8918573e-05
    %v2982 = vadd.f32 %v2981, 0.001143296
    %v2983 = vmul.f32 %v2969, %v2982
    %v2984 = vadd.f32 %v2983, 0.014752088
    %v2985 = vmul.f32 %v2969, %v2984
    %v2986 = vadd.f32 %v2985, 0.112945676
    %v2987 = vmul.f32 %v2969, %v2986
    %v2988 = vadd.f32 %v2987, 0.4994258
    %v2989 = vmul.f32 %v2969, %v2988
    %v2990 = vadd.f32 %v2989, 1.0
    %v2991 = vrcp.pop %v2990
    %v2992 = vmul.f32 %v2990, %v2991
    %v2993 = vsub.f32 1.0, %v2992
    %v2994 = vmul.f32 %v2991, %v2993
    %v2995 = vadd.f32 %v2991, %v2994
    %vm2996 = vweird.f32 %v2990
    %vm2997 = vweird.f32 %v2991
    %vm2998 = vmor %vm2996, %vm2997
    %v2999 = vsel %vm2998, %v2991, %v2995
    %v3000 = vand.u32 2147483647, %v2990
    %vm3001 = vcmp.eq.f32.partialorder %v3000, 8.507059e+37
    %v3002 = vand.u32 %v2990, 2147483648
    %v3003 = vor.u32 1.1754944e-38, %v3002
    %v3004 = vsel %vm3001, %v3003, %v2999
    %v3005 = vmul.f32 %v2980, %v3004
    %v3006 = vmin.f32 %v3005, 1.0
    %v3007 = vmax.f32 %v3006, -1.0
    %v3008 = vmul.f32 %v2766, %v2766
    %v3009 = vmin.f32 16.0, %v3008
    %v3010 = vmul.f32 %v3009, 2.1237322e-06
    %v3011 = vadd.f32 %v3010, 0.00028619796
    %v3012 = vmul.f32 %v3009, %v3011
    %v3013 = vadd.f32 %v3012, 0.0036580483
    %v3014 = vmul.f32 %v3009, %v3013
    %v3015 = vadd.f32 %v3014, 0.05243302
    %v3016 = vmul.f32 %v3009, %v3015
    %v3017 = vadd.f32 %v3016, 0.18741608
    %v3018 = vmul.f32 %v3009, %v3017
    %v3019 = vadd.f32 %v3018, 1.1283791
    %v3020 = vmul.f32 %v2766, %v3019
    %v3021 = vmul.f32 %v3009, 3.8918573e-05
    %v3022 = vadd.f32 %v3021, 0.001143296
    %v3023 = vmul.f32 %v3009, %v3022
    %v3024 = vadd.f32 %v3023, 0.014752088
    %v3025 = vmul.f32 %v3009, %v3024
    %v3026 = vadd.f32 %v3025, 0.112945676
    %v3027 = vmul.f32 %v3009, %v3026
    %v3028 = vadd.f32 %v3027, 0.4994258
    %v3029 = vmul.f32 %v3009, %v3028
    %v3030 = vadd.f32 %v3029, 1.0
    %v3031 = vrcp.pop %v3030
    %v3032 = vmul.f32 %v3030, %v3031
    %v3033 = vsub.f32 1.0, %v3032
    %v3034 = vmul.f32 %v3031, %v3033
    %v3035 = vadd.f32 %v3031, %v3034
    %vm3036 = vweird.f32 %v3030
    %vm3037 = vweird.f32 %v3031
    %vm3038 = vmor %vm3036, %vm3037
    %v3039 = vsel %vm3038, %v3031, %v3035
    %v3040 = vand.u32 2147483647, %v3030
    %vm3041 = vcmp.eq.f32.partialorder %v3040, 8.507059e+37
    %v3042 = vand.u32 %v3030, 2147483648
    %v3043 = vor.u32 1.1754944e-38, %v3042
    %v3044 = vsel %vm3041, %v3043, %v3039
    %v3045 = vmul.f32 %v3020, %v3044
    %v3046 = vmin.f32 %v3045, 1.0
    %v3047 = vmax.f32 %v3046, -1.0
    %v3048 = vmul.f32 %v2767, %v2767
    %v3049 = vmin.f32 16.0, %v3048
    %v3050 = vmul.f32 %v3049, 2.1237322e-06
    %v3051 = vadd.f32 %v3050, 0.00028619796
    %v3052 = vmul.f32 %v3049, %v3051
    %v3053 = vadd.f32 %v3052, 0.0036580483
    %v3054 = vmul.f32 %v3049, %v3053
    %v3055 = vadd.f32 %v3054, 0.05243302
    %v3056 = vmul.f32 %v3049, %v3055
    %v3057 = vadd.f32 %v3056, 0.18741608
    %v3058 = vmul.f32 %v3049, %v3057
    %v3059 = vadd.f32 %v3058, 1.1283791
    %v3060 = vmul.f32 %v2767, %v3059
    %v3061 = vmul.f32 %v3049, 3.8918573e-05
    %v3062 = vadd.f32 %v3061, 0.001143296
    %v3063 = vmul.f32 %v3049, %v3062
    %v3064 = vadd.f32 %v3063, 0.014752088
    %v3065 = vmul.f32 %v3049, %v3064
    %v3066 = vadd.f32 %v3065, 0.112945676
    %v3067 = vmul.f32 %v3049, %v3066
    %v3068 = vadd.f32 %v3067, 0.4994258
    %v3069 = vmul.f32 %v3049, %v3068
    %v3070 = vadd.f32 %v3069, 1.0
    %v3071 = vrcp.pop %v3070
    %v3072 = vmul.f32 %v3070, %v3071
    %v3073 = vsub.f32 1.0, %v3072
    %v3074 = vmul.f32 %v3071, %v3073
    %v3075 = vadd.f32 %v3071, %v3074
    %vm3076 = vweird.f32 %v3070
    %vm3077 = vweird.f32 %v3071
    %vm3078 = vmor %vm3076, %vm3077
    %v3079 = vsel %vm3078, %v3071, %v3075
    %v3080 = vand.u32 2147483647, %v3070
    %vm3081 = vcmp.eq.f32.partialorder %v3080, 8.507059e+37
    %v3082 = vand.u32 %v3070, 2147483648
    %v3083 = vor.u32 1.1754944e-38, %v3082
    %v3084 = vsel %vm3081, %v3083, %v3079
    %v3085 = vmul.f32 %v3060, %v3084
    %v3086 = vmin.f32 %v3085, 1.0
    %v3087 = vmax.f32 %v3086, -1.0
    %v3088 = vadd.f32 %v2807, 1.0
    %v3089 = vadd.f32 %v2847, 1.0
    %v3090 = vadd.f32 %v2887, 1.0
    %v3091 = vadd.f32 %v2927, 1.0
    %v3092 = vadd.f32 %v2967, 1.0
    %v3093 = vadd.f32 %v3007, 1.0
    %v3094 = vadd.f32 %v3047, 1.0
    %v3095 = vadd.f32 %v3087, 1.0
    %v3096 = vmul.f32 %v2752, %v3088
    %v3097 = vmul.f32 %v2753, %v3089
    %v3098 = vmul.f32 %v2754, %v3090
    %v3099 = vmul.f32 %v2755, %v3091
    %v3100 = vmul.f32 %v2756, %v3092
    %v3101 = vmul.f32 %v2757, %v3093
    %v3102 = vmul.f32 %v2758, %v3094
    %v3103 = vmul.f32 %v2759, %v3095
    %3104 = vset.pattern.permute.xlu0 15
    %3105 = vperm.xlu0 %3104, %v27
    %v3106 = vpop.permute.xlu0 %3105
    %3108 = vset.pattern.permute.xlu0 15
    %3109 = vperm.xlu0 %3108, %v28
    %v3110 = vpop.permute.xlu0 %3109
    %v3113 = vsel %vm711, %v2553, 0
    %v3116 = vsel %vm711, %v2554, 0
    %3118 = vmatpush.msra.mxu0 0.0
    %3119 = vmatpush.msra.mxu0 0.0
    %3120 = vmatpush.msra.mxu0 0.0
    %3121 = vmatpush.msra.mxu0 0.0
    %3122 = vmatpush.msra.mxu0 0.0
    %3123 = vmatpush.msra.mxu0 0.0
    %3124 = vmatpush.msra.mxu0 0.0
    %3125 = vmatpush.msra.mxu0 0.0
    %3126 = vmatpush.msra.mxu0 %v3103
    %3127 = vmatpush.msra.mxu0 %v3102
    %3128 = vmatpush.msra.mxu0 %v3101
    %3129 = vmatpush.msra.mxu0 %v3100
    %3130 = vmatpush.msra.mxu0 %v3099
    %3131 = vmatpush.msra.mxu0 %v3098
    %3132 = vmatpush.msra.mxu0 %v3097
    %3133 = vmatpush.msra.mxu0 %v3096
    %3134 = vmatmul.f32.gmra.mxu0 %v3113
    %v3135 = vpop.f32.mrf.mxu0
    %v3136 = vadd.f32 %v3106, %v3135
    %3137 = vmatmul.f32.gmra.mxu0 %v3116
    %v3138 = vpop.f32.mrf.mxu0
    %v3139 = vadd.f32 %v3110, %v3138
    %3140 = vdwg.mxu0
    %v3141 = vadd.f32 %v3136, %v2612
    %v3142 = vadd.f32 %v3139, %v2613
    %v3143 = vld [vmem:[%s6] sm:$0xff]
    %v3144 = vld [vmem:[%s6 + $0x8] sm:$0xff]
    %v3145 = vld [vmem:[%s6 + $0x10] sm:$0xff]
    %v3146 = vld [vmem:[%s6 + $0x18] sm:$0xff]
    %v3148 = vsel %vm137, %v3141, 0
    %v3151 = vsel %vm137, %v3142, 0
    %3153 = vmatpush.msra.mxu0 0.0
    %3154 = vmatpush.msra.mxu0 0.0
    %3155 = vmatpush.msra.mxu0 0.0
    %3156 = vmatpush.msra.mxu0 0.0
    %3157 = vmatpush.msra.mxu0 0.0
    %3158 = vmatpush.msra.mxu0 0.0
    %3159 = vmatpush.msra.mxu0 0.0
    %3160 = vmatpush.msra.mxu0 0.0
    %3161 = vmatpush.msra.mxu0 0.0
    %3162 = vmatpush.msra.mxu0 0.0
    %3163 = vmatpush.msra.mxu0 0.0
    %3164 = vmatpush.msra.mxu0 0.0
    %3165 = vmatpush.msra.mxu0 %v3146
    %3166 = vmatpush.msra.mxu0 %v3145
    %3167 = vmatpush.msra.mxu0 %v3144
    %3168 = vmatpush.msra.mxu0 %v3143
    %3169 = vmatmul.f32.gmra.mxu0 %v3148
    %v3170 = vpop.f32.mrf.mxu0
    %v3171 = vadd.f32 0.0, %v3170
    %3172 = vmatmul.f32.gmra.mxu0 %v3151
    %v3173 = vpop.f32.mrf.mxu0
    %v3174 = vadd.f32 0.0, %v3173
    %3175 = vdwg.mxu0
    %v3176 = vld [vmem:[%s5] sm:$0xff]
    %v3177 = vld [vmem:[%s5 + $0x8] sm:$0xff]
    %v3178 = vld [vmem:[%s5 + $0x10] sm:$0x1]
    %v3179 = vperm.slane %v3178, 0
    %3180 = vxpose.xlu0.b32.start [1/16] %v3171, 128
    %3181 = vxpose.xlu0.b32.cont [2/16] %v3174, 128
    %3182 = vxpose.xlu0.b32.cont [3/16] 0.0, 128
    %3183 = vxpose.xlu0.b32.cont [4/16] 0.0, 128
    %3184 = vxpose.xlu0.b32.cont [5/16] 0.0, 128
    %3185 = vxpose.xlu0.b32.cont [6/16] 0.0, 128
    %3186 = vxpose.xlu0.b32.cont [7/16] 0.0, 128
    %3187 = vxpose.xlu0.b32.cont [8/16] 0.0, 128
    %3188 = vxpose.xlu0.b32.cont [9/16] 0.0, 128
    %3189 = vxpose.xlu0.b32.cont [10/16] 0.0, 128
    %3190 = vxpose.xlu0.b32.cont [11/16] 0.0, 128
    %3191 = vxpose.xlu0.b32.cont [12/16] 0.0, 128
    %3192 = vxpose.xlu0.b32.cont [13/16] 0.0, 128
    %3193 = vxpose.xlu0.b32.cont [14/16] 0.0, 128
    %3194 = vxpose.xlu0.b32.cont [15/16] 0.0, 128
    %3195 = vxpose.xlu0.b32.end [16/16] 0.0, 128
    %v3196 = vpop.trf.xlu0
    %v3197 = vpop.trf.xlu0
    %v3198 = vpop.trf.xlu0
    %v3199 = vpop.trf.xlu0
    %v3200 = vpop.trf.xlu0
    %v3201 = vpop.trf.xlu0
    %v3202 = vpop.trf.xlu0
    %v3203 = vpop.trf.xlu0
    %v3204 = vpop.trf.xlu0
    %v3205 = vpop.trf.xlu0
    %v3206 = vpop.trf.xlu0
    %v3207 = vpop.trf.xlu0
    %v3208 = vpop.trf.xlu0
    %v3209 = vpop.trf.xlu0
    %v3210 = vpop.trf.xlu0
    %v3211 = vpop.trf.xlu0
    %v3213 = vsel %vm285, %v3196, 0
    %3215 = vmatpush.msra.mxu0 0.0
    %3216 = vmatpush.msra.mxu0 0.0
    %3217 = vmatpush.msra.mxu0 0.0
    %3218 = vmatpush.msra.mxu0 0.0
    %3219 = vmatpush.msra.mxu0 0.0
    %3220 = vmatpush.msra.mxu0 0.0
    %3221 = vmatpush.msra.mxu0 0.0
    %3222 = vmatpush.msra.mxu0 0.0
    %3223 = vmatpush.msra.mxu0 0.0
    %3224 = vmatpush.msra.mxu0 0.0
    %3225 = vmatpush.msra.mxu0 0.0
    %3226 = vmatpush.msra.mxu0 0.0
    %3227 = vmatpush.msra.mxu0 0.0
    %3228 = vmatpush.msra.mxu0 0.0
    %3229 = vmatpush.msra.mxu0 %v3177
    %3230 = vmatpush.msra.mxu0 %v3176
    %3231 = vmatmul.f32.gmra.mxu0 %v3213
    %v3232 = vpop.f32.mrf.mxu0
    %v3233 = vadd.f32 %v3179, %v3232
    %3234 = vdwg.mxu0
    %vm3235 = vcmask 1041408
    %v3236 = vsel %vm3235, %v3233, -inf
    %3237 = vmax.xlane.f32.xlu0 %v3236
    %v3238 = vpop.xlane.xlu0 %3237
    %v3239 = vsub.f32 %v3233, %v3238
    %v3240 = vmul.f32 %v3239, 1.442695
    %v3241 = vpow.pop %v3240
    %v3242 = vsel %vm3235, %v3241, 0.0
    %3243 = vadd.xlane.f32.xlu0 %v3242
    %v3244 = vpop.xlane.xlu0 %3243
    %v3245 = vrcp.pop %v3244
    %v3246 = vmul.f32 %v3244, %v3245
    %v3247 = vsub.f32 1.0, %v3246
    %v3248 = vmul.f32 %v3245, %v3247
    %v3249 = vadd.f32 %v3245, %v3248
    %vm3250 = vweird.f32 %v3244
    %vm3251 = vweird.f32 %v3245
    %vm3252 = vmor %vm3250, %vm3251
    %v3253 = vsel %vm3252, %v3245, %v3249
    %v3254 = vand.u32 2147483647, %v3244
    %vm3255 = vcmp.eq.f32.partialorder %v3254, 8.507059e+37
    %v3256 = vand.u32 %v3244, 2147483648
    %v3257 = vor.u32 1.1754944e-38, %v3256
    %v3258 = vsel %vm3255, %v3257, %v3253
    %v3259 = vmul.f32 %v3241, %v3258
    %3260 = vst [vmem:[#allocation2] sm:$0x3] %v3259
    // Predicated region
    $region30: #{tpu_custom_call.1} parent=1 // pred_check
      _
    $region31: #{tpu_custom_call.1} parent=1 // pred_check_branch
      %3262 = sbr.rel (0) target = $region33
    $region32: #{tpu_custom_call.1} parent=1 // pred_region
      %3264 = vsyncadd [#allocation3], 0
      %s3266 = sshll.u32 [#allocation2], 4
      %s3267 = int_to_ptr.vmem [resolvable:$true] %s3266
      %s3268 = sshll.u32 %s7, 4
      %s3269 = int_to_ptr.hbm [resolvable:$true] %s3268
      %3271 = dma.vmem_to_hbm [thread:$0]  %s3267, 32, %s3269, [#allocation3]
    $region33: #{tpu_custom_call.1} parent=1 // pred_fallthru
      _
    // Predicated region
    $region34: #{tpu_custom_call.1} parent=1 // pred_check
      _
    $region35: #{tpu_custom_call.1} parent=1 // pred_check_branch
      %3273 = sbr.rel (0) target = $region37
    $region36: #{tpu_custom_call.1} parent=1 // pred_region
      %3275 = dma.done [#allocation3], 32
    $region37: #{tpu_custom_call.1} parent=1 // pred_fallthru
      _
    %3276 = vsyncpa [#allocation3], 1

</llo_original>
